<compile_context>
chip_gen: v5e
topology: v5e:2x2
jax: 0.10.0
libtpu: 0.0.40
codegen_flags: <defaults>
</compile_context>

<pallas_src>
import functools
import math

import jax
import jax.numpy as jnp
from jax import lax
from jax.experimental import pallas as pl
from jax.experimental.pallas import tpu as pltpu


def _round_up(x, m):
    return ((x + m - 1) // m) * m


def _vmem_limit_bytes():
    """Per-chip VMEM budget: ~100 MiB on v5e/v6e (128 MiB physical), ~56 MiB on v7x."""
    try:
        cap = int(pltpu.get_tpu_info().vmem_capacity_bytes)
    except Exception:
        cap = 64 * 1024 * 1024  # conservative (v7x-sized) fallback
    return min(100 * 1024 * 1024, cap - 8 * 1024 * 1024)


_VMEM_LIMIT = _vmem_limit_bytes()
_S1_ROWS = 512        # target (time*batch) rows per Stage-1 matmul chunk
_MAX_BATCH_TILE = 128  # review: Bt=128 when VMEM allows (multiple of 16 for bf16)


def text_encoder_kernel(
    lens_ref,                      # [Bt, 1]   int32  cap_lens (padded rows = 0)
    inp_ref,                       # [T_pad, Bt, W] bf16  time-major word+pos embeddings
    win_ref, bin_ref,              # [W, H] bf16, [1, H] f32     input_emb Linear
    wih_ref, bgi_ref,              # [H, 6H] bf16, [1, 6H] f32   fused fwd|bwd input proj (+folded biases)
    whh_f_ref, bhn_f_ref,          # [H, 3H] bf16, [1, H] f32    recurrent weights fwd, b_hh "n" bias
    whh_b_ref, bhn_b_ref,          # [H, 3H] bf16, [1, H] f32    recurrent weights bwd
    h0_ref,                        # [2, H] f32                  learnable initial hidden
    w1_ref, b1_ref,                # [2H, H] bf16, [1, H] f32
    gamma_ref, beta_ref,           # [1, H] f32 each             LayerNorm affine
    w2_ref, b2_ref,                # [H, O] bf16, [1, O] f32
    out_ref,                       # [Bt, O] f32
    gi_ref,                        # VMEM scratch [T_pad, Bt, 6H] bf16 (hoisted gates)
    *, seq_len, time_chunk, unroll,
):
    T_pad, Bt, W = inp_ref.shape
    H = whh_f_ref.shape[0]
    f32, bf16 = jnp.float32, jnp.bfloat16
    TC = time_chunk

    # ---- Stage 1: hoisted input-emb + GRU input projections, chunked over time ----
    win = win_ref[...]
    wih = wih_ref[...]
    b_in = bin_ref[...]
    b_gi = bgi_ref[...]

    def s1_chunk(c, carry):
        t0 = pl.multiple_of(c * TC, TC)
        # (TC, Bt, W) -> (TC*Bt, W): Bt is sublane-aligned, so this is layout-free.
        x2d = inp_ref[pl.ds(t0, TC)].reshape(TC * Bt, W)
        x = jnp.dot(x2d, win, preferred_element_type=f32) + b_in          # [TC*Bt, H]
        gi = jnp.dot(x.astype(bf16), wih, preferred_element_type=f32) + b_gi
        gi_ref[pl.ds(t0, TC)] = gi.astype(bf16).reshape(TC, Bt, 6 * H)
        return carry

    lax.fori_loop(0, T_pad // TC, s1_chunk, 0)

    # ---- Stage 2: bidirectional recurrence (only h @ W_hh on the MXU per step) ----
    lens = lens_ref[...]                                                   # [Bt, 1]
    h0_f = jnp.broadcast_to(h0_ref[0:1, :], (Bt, H)).astype(f32)
    h0_b = jnp.broadcast_to(h0_ref[1:2, :], (Bt, H)).astype(f32)
    whh_f = whh_f_ref[...]
    whh_b = whh_b_ref[...]
    bhn_f = bhn_f_ref[...]
    bhn_b = bhn_b_ref[...]

    def sigmoid(v):
        # exact sigmoid via a single EUP tanh (no exp+reciprocal chain, no approx error)
        return 0.5 * (jnp.tanh(0.5 * v) + 1.0)

    def gru_gates(gi, gh, h, bhn):
        # gi already carries b_ih (and b_hh for the r/z gates)
        r = sigmoid(gi[:, 0:H] + gh[:, 0:H])
        z = sigmoid(gi[:, H:2 * H] + gh[:, H:2 * H])
        n = jnp.tanh(gi[:, 2 * H:3 * H] + r * (gh[:, 2 * H:3 * H] + bhn))
        return (1.0 - z) * n + z * h

    def step(t, carry):
        h_f, h_b = carry
        # forward direction: t = 0..T-1, hidden updates while t < cap_len
        gi_t = gi_ref[t].astype(f32)                                       # [Bt, 6H]
        gh_f = jnp.dot(h_f.astype(bf16), whh_f, preferred_element_type=f32)
        new_f = gru_gates(gi_t[:, 0:3 * H], gh_f, h_f, bhn_f)
        h_f = jnp.where(t < lens, new_f, h_f)
        # backward direction: tb = T-1..0, hidden updates while tb < cap_len
        tb = seq_len - 1 - t
        gi_tb = gi_ref[tb].astype(f32)
        gh_b = jnp.dot(h_b.astype(bf16), whh_b, preferred_element_type=f32)
        new_b = gru_gates(gi_tb[:, 3 * H:6 * H], gh_b, h_b, bhn_b)
        h_b = jnp.where(tb < lens, new_b, h_b)
        return h_f, h_b

    h_f, h_b = lax.fori_loop(0, seq_len, step, (h0_f, h0_b), unroll=unroll)

    # ---- Stage 3: output_net: Linear -> LayerNorm -> LeakyReLU(0.2) -> Linear ----
    gru_last = jnp.concatenate([h_f, h_b], axis=-1)                        # [Bt, 2H]
    y = jnp.dot(gru_last.astype(bf16), w1_ref[...],
                preferred_element_type=f32) + b1_ref[...]
    mean = jnp.mean(y, axis=-1, keepdims=True)
    var = jnp.mean(jnp.square(y - mean), axis=-1, keepdims=True)
    y = (y - mean) * lax.rsqrt(var + 1e-5)
    y = y * gamma_ref[...] + beta_ref[...]
    y = jnp.where(y > 0, y, 0.2 * y)
    out_ref[...] = jnp.dot(y.astype(bf16), w2_ref[...],
                           preferred_element_type=f32) + b2_ref[...]


def _pick_tiles(B, T, W, H, weight_bytes):
    """Pick (batch_tile, time_chunk, padded_T) under the per-chip VMEM budget."""
    bt = min(_MAX_BATCH_TILE, _round_up(max(B, 1), 16))
    while True:
        tc = max(1, min(T, _S1_ROWS // bt))
        t_pad = _round_up(T, tc)
        gi_bytes = t_pad * bt * 6 * H * 2                    # bf16 gate scratch
        inp_bytes = 2 * t_pad * bt * W * 2                   # double-buffered input block
        chunk_bytes = tc * bt * (2 * W + 4 * H + 4 * 6 * H)  # live Stage-1 chunk temporaries
        step_bytes = 24 * bt * H * 4                         # recurrence temporaries (rough)
        need = gi_bytes + inp_bytes + chunk_bytes + step_bytes + weight_bytes
        if bt <= 16 or need <= int(0.85 * _VMEM_LIMIT):
            return bt, tc, t_pad
        bt //= 2


def init_params(key, word_size, pos_size, hidden_size, output_size):
    """Deterministic init mirroring the module's __init__ shapes (f32 master copy)."""
    ks = list(jax.random.split(key, 16))

    def xavier(k, shape):          # shape = (fan_in, fan_out)
        std = math.sqrt(2.0 / (shape[0] + shape[1]))
        return (std * jax.random.normal(k, shape)).astype(jnp.float32)

    def gru_w(k, shape, H):        # PyTorch GRU default: U(-1/sqrt(H), 1/sqrt(H))
        bound = 1.0 / math.sqrt(H)
        return jax.random.uniform(k, shape, jnp.float32, -bound, bound)

    H, W, P, O = hidden_size, word_size, pos_size, output_size
    return {
        "wpos": xavier(ks[0], (P, W)), "bpos": jnp.zeros((1, W), jnp.float32),
        "win": xavier(ks[1], (W, H)),  "bin": jnp.zeros((1, H), jnp.float32),
        "wih_f": gru_w(ks[2], (H, 3 * H), H), "whh_f": gru_w(ks[3], (H, 3 * H), H),
        "bih_f": gru_w(ks[4], (1, 3 * H), H), "bhh_f": gru_w(ks[5], (1, 3 * H), H),
        "wih_b": gru_w(ks[6], (H, 3 * H), H), "whh_b": gru_w(ks[7], (H, 3 * H), H),
        "bih_b": gru_w(ks[8], (1, 3 * H), H), "bhh_b": gru_w(ks[9], (1, 3 * H), H),
        "h0": jax.random.normal(ks[10], (2, H)).astype(jnp.float32),
        "w1": xavier(ks[11], (2 * H, H)), "b1": jnp.zeros((1, H), jnp.float32),
        "gamma": jnp.ones((1, H), jnp.float32), "beta": jnp.zeros((1, H), jnp.float32),
        "w2": xavier(ks[12], (H, O)), "b2": jnp.zeros((1, O), jnp.float32),
    }


@jax.jit
def text_encoder_forward(word_embs, pos_onehot, cap_lens, params):
    """word_embs: [B, T, word], pos_onehot: [B, T, pos], cap_lens: [B] int32."""
    B, T, W = word_embs.shape
    H = params["win"].shape[1]
    O = params["w2"].shape[1]
    H2 = 2 * H
    f32, bf16 = jnp.float32, jnp.bfloat16

    # pos_emb Linear is a one-hot matmul (row gather); fold it into the inputs in f32
    # here so the kernel neither DMAs the [T,Bt,P] one-hot nor runs the [.,P]@[P,W] matmul.
    pos_emb = pos_onehot.astype(f32) @ params["wpos"] + params["bpos"]
    inputs = word_embs.astype(f32) + pos_emb                              # [B, T, W]

    # fused fwd|bwd GRU input-projection weight [H, 6H] and pre-folded gate biases [1, 6H]
    wih_cat = jnp.concatenate([params["wih_f"], params["wih_b"]], axis=1)
    b_gi = jnp.concatenate([
        params["bih_f"][:, :H2] + params["bhh_f"][:, :H2],   # fwd r, z
        params["bih_f"][:, H2:],                             # fwd n (b_ih only)
        params["bih_b"][:, :H2] + params["bhh_b"][:, :H2],   # bwd r, z
        params["bih_b"][:, H2:],                             # bwd n (b_ih only)
    ], axis=1)
    bhn_f = params["bhh_f"][:, H2:]
    bhn_b = params["bhh_b"][:, H2:]

    bf = lambda a: a.astype(bf16)
    weights = (
        bf(params["win"]), params["bin"],
        bf(wih_cat), b_gi,
        bf(params["whh_f"]), bhn_f,
        bf(params["whh_b"]), bhn_b,
        params["h0"],
        bf(params["w1"]), params["b1"],
        params["gamma"], params["beta"],
        bf(params["w2"]), params["b2"],
    )
    weight_bytes = sum(int(a.size) * a.dtype.itemsize for a in weights)

    bt, tc, t_pad = _pick_tiles(B, T, W, H, weight_bytes)
    b_pad = _round_up(B, bt)

    # pad batch (padded rows get cap_len=0 -> hidden never updates) and time
    lens2d = jnp.pad(cap_lens.astype(jnp.int32), (0, b_pad - B)).reshape(b_pad, 1)
    inp_p = jnp.pad(inputs, ((0, b_pad - B), (0, t_pad - T), (0, 0))).astype(bf16)
    # time-major bf16 so the per-step gi/scratch reads are contiguous leading-axis slices.
    # TODO(synk): move this reorder into VMEM at gi_ref write time (review item) to drop
    # the extra HBM round-trip; kept wrapper-side here for lowering robustness.
    inp_t = jnp.transpose(inp_p, (1, 0, 2))                               # [T_pad, B_pad, W]

    kernel = functools.partial(
        text_encoder_kernel,
        seq_len=T, time_chunk=tc,
        unroll=(True if T <= 32 else 2),
    )

    # constant blocks -> single-buffered (their index_map never changes)
    resident = lambda a: pl.BlockSpec(a.shape, lambda b: (0, 0),
                                      pipeline_mode=pl.Buffered(1))
    in_specs = [
        pl.BlockSpec((bt, 1), lambda b: (b, 0)),                # cap_lens
        pl.BlockSpec((t_pad, bt, W), lambda b: (0, b, 0)),      # inputs (time-major)
    ] + [resident(a) for a in weights]

    out_padded = pl.pallas_call(
        kernel,
        out_shape=jax.ShapeDtypeStruct((b_pad, O), jnp.float32),
        grid=(b_pad // bt,),
        in_specs=in_specs,
        out_specs=pl.BlockSpec((bt, O), lambda b: (b, 0)),
        scratch_shapes=[pltpu.VMEM((t_pad, bt, 6 * H), jnp.bfloat16)],
        compiler_params=pltpu.CompilerParams(
            dimension_semantics=("parallel",),      # megacore / multi-TC over batch tiles
            vmem_limit_bytes=_VMEM_LIMIT,           # ~100 MiB v5e/v6e, ~56 MiB v7x
        ),
    )(lens2d, inp_t, *weights)
    return out_padded[:B]


def reference_forward(word_embs, pos_onehot, cap_lens, params):
    """Pure-JAX f32 reference with identical semantics (for correctness check)."""
    B, T, _ = word_embs.shape
    H = params["win"].shape[1]
    pos_emb = pos_onehot @ params["wpos"] + params["bpos"]
    x = (word_embs + pos_emb) @ params["win"] + params["bin"]             # [B, T, H]

    def cell(x_t, h, wih, bih, whh, bhh):
        gi = x_t @ wih + bih
        gh = h @ whh + bhh
        r = jax.nn.sigmoid(gi[:, :H] + gh[:, :H])
        z = jax.nn.sigmoid(gi[:, H:2 * H] + gh[:, H:2 * H])
        n = jnp.tanh(gi[:, 2 * H:] + r * gh[:, 2 * H:])
        return (1 - z) * n + z * h

    lens = cap_lens.reshape(B, 1)
    h_f = jnp.broadcast_to(params["h0"][0:1], (B, H))
    h_b = jnp.broadcast_to(params["h0"][1:2], (B, H))
    for t in range(T):
        nf = cell(x[:, t], h_f, params["wih_f"], params["bih_f"],
                  params["whh_f"], params["bhh_f"])
        h_f = jnp.where(t < lens, nf, h_f)
        tb = T - 1 - t
        nb = cell(x[:, tb], h_b, params["wih_b"], params["bih_b"],
                  params["whh_b"], params["bhh_b"])
        h_b = jnp.where(tb < lens, nb, h_b)
    g = jnp.concatenate([h_f, h_b], axis=-1)
    y = g @ params["w1"] + params["b1"]
    mu = y.mean(-1, keepdims=True)
    var = ((y - mu) ** 2).mean(-1, keepdims=True)
    y = (y - mu) / jnp.sqrt(var + 1e-5) * params["gamma"] + params["beta"]
    y = jnp.where(y > 0, y, 0.2 * y)
    return y @ params["w2"] + params["b2"]


if __name__ == "__main__":
    # small shapes consistent with the module's forward
    B, T = 2, 8
    word_size, pos_size, hidden_size, output_size = 16, 8, 32, 8

    key = jax.random.PRNGKey(0)
    kw, kp, kparam = jax.random.split(key, 3)
    word_embs = jax.random.normal(kw, (B, T, word_size), jnp.float32)
    pos_ids = jax.random.randint(kp, (B, T), 0, pos_size)
    pos_onehot = jax.nn.one_hot(pos_ids, pos_size, dtype=jnp.float32)
    cap_lens = jnp.array([8, 5], dtype=jnp.int32)  # sorted, as pack_padded expects

    params = init_params(kparam, word_size, pos_size, hidden_size, output_size)

    out = text_encoder_forward(word_embs, pos_onehot, cap_lens, params)
    out = jax.block_until_ready(out)

    ref = reference_forward(word_embs, pos_onehot, cap_lens, params)
    assert out.shape == (B, output_size)
    # bf16 matmul operands (f32 accumulation) vs. the pure-f32 reference.
    max_err = float(jnp.max(jnp.abs(out - ref)))
    assert jnp.allclose(out, ref, atol=6e-2, rtol=6e-2), (max_err, out, ref)

    print("KERNEL_OK")
</pallas_src>

<mosaic_0001>
module attributes {stable_mosaic.version = 11 : i64} {
  func.func @text_encoder_kernel(%arg0: i32, %arg1: memref<16x1xi32, #tpu.memory_space<vmem>>, %arg2: memref<8x16x16xbf16, #tpu.memory_space<vmem>>, %arg3: memref<16x32xbf16, #tpu.memory_space<vmem>>, %arg4: memref<1x32xf32, #tpu.memory_space<vmem>>, %arg5: memref<32x192xbf16, #tpu.memory_space<vmem>>, %arg6: memref<1x192xf32, #tpu.memory_space<vmem>>, %arg7: memref<32x96xbf16, #tpu.memory_space<vmem>>, %arg8: memref<1x32xf32, #tpu.memory_space<vmem>>, %arg9: memref<32x96xbf16, #tpu.memory_space<vmem>>, %arg10: memref<1x32xf32, #tpu.memory_space<vmem>>, %arg11: memref<2x32xf32, #tpu.memory_space<vmem>>, %arg12: memref<64x32xbf16, #tpu.memory_space<vmem>>, %arg13: memref<1x32xf32, #tpu.memory_space<vmem>>, %arg14: memref<1x32xf32, #tpu.memory_space<vmem>>, %arg15: memref<1x32xf32, #tpu.memory_space<vmem>>, %arg16: memref<32x8xbf16, #tpu.memory_space<vmem>>, %arg17: memref<1x8xf32, #tpu.memory_space<vmem>>, %arg18: memref<16x8xf32, #tpu.memory_space<vmem>>, %arg19: memref<8x16x192xbf16, #tpu.memory_space<vmem>>) attributes {dimension_semantics = [#tpu.dimension_semantics<parallel>], iteration_bounds = array<i64: 1>, scalar_prefetch = 0 : i64, scratch_operands = 1 : i64, tpu.core_type = #tpu.core_type<tc>, window_params = [{transform_indices = @transform_0, window_bounds = array<i64: 16, 1>}, {transform_indices = @transform_1, window_bounds = array<i64: 8, 16, 16>}, {pipeline_mode = #tpu.pipeline_mode<synchronous>, transform_indices = @transform_2, window_bounds = array<i64: 16, 32>}, {pipeline_mode = #tpu.pipeline_mode<synchronous>, transform_indices = @transform_3, window_bounds = array<i64: 1, 32>}, {pipeline_mode = #tpu.pipeline_mode<synchronous>, transform_indices = @transform_4, window_bounds = array<i64: 32, 192>}, {pipeline_mode = #tpu.pipeline_mode<synchronous>, transform_indices = @transform_5, window_bounds = array<i64: 1, 192>}, {pipeline_mode = #tpu.pipeline_mode<synchronous>, transform_indices = @transform_6, window_bounds = array<i64: 32, 96>}, {pipeline_mode = #tpu.pipeline_mode<synchronous>, transform_indices = @transform_7, window_bounds = array<i64: 1, 32>}, {pipeline_mode = #tpu.pipeline_mode<synchronous>, transform_indices = @transform_8, window_bounds = array<i64: 32, 96>}, {pipeline_mode = #tpu.pipeline_mode<synchronous>, transform_indices = @transform_9, window_bounds = array<i64: 1, 32>}, {pipeline_mode = #tpu.pipeline_mode<synchronous>, transform_indices = @transform_10, window_bounds = array<i64: 2, 32>}, {pipeline_mode = #tpu.pipeline_mode<synchronous>, transform_indices = @transform_11, window_bounds = array<i64: 64, 32>}, {pipeline_mode = #tpu.pipeline_mode<synchronous>, transform_indices = @transform_12, window_bounds = array<i64: 1, 32>}, {pipeline_mode = #tpu.pipeline_mode<synchronous>, transform_indices = @transform_13, window_bounds = array<i64: 1, 32>}, {pipeline_mode = #tpu.pipeline_mode<synchronous>, transform_indices = @transform_14, window_bounds = array<i64: 1, 32>}, {pipeline_mode = #tpu.pipeline_mode<synchronous>, transform_indices = @transform_15, window_bounds = array<i64: 32, 8>}, {pipeline_mode = #tpu.pipeline_mode<synchronous>, transform_indices = @transform_16, window_bounds = array<i64: 1, 8>}, {transform_indices = @transform_17, window_bounds = array<i64: 16, 8>}]} {
    %c0 = arith.constant 0 : index
    %c0_0 = arith.constant 0 : index
    %0 = vector.load %arg3[%c0, %c0_0] : memref<16x32xbf16, #tpu.memory_space<vmem>>, vector<16x32xbf16>
    %c0_1 = arith.constant 0 : index
    %c0_2 = arith.constant 0 : index
    %1 = vector.load %arg5[%c0_1, %c0_2] : memref<32x192xbf16, #tpu.memory_space<vmem>>, vector<32x192xbf16>
    %c0_3 = arith.constant 0 : index
    %c0_4 = arith.constant 0 : index
    %2 = vector.load %arg4[%c0_3, %c0_4] : memref<1x32xf32, #tpu.memory_space<vmem>>, vector<1x32xf32>
    %c0_5 = arith.constant 0 : index
    %c0_6 = arith.constant 0 : index
    %3 = vector.load %arg6[%c0_5, %c0_6] : memref<1x192xf32, #tpu.memory_space<vmem>>, vector<1x192xf32>
    %c0_i32 = arith.constant 0 : i32
    %c8_i32 = arith.constant 8 : i32
    %4 = arith.muli %c0_i32, %c8_i32 : i32
    %5 = tpu.assume_multiple %4, 8 : i32
    %6 = arith.index_cast %5 : i32 to index
    %c0_7 = arith.constant 0 : index
    %c0_8 = arith.constant 0 : index
    %7 = vector.load %arg2[%6, %c0_7, %c0_8] : memref<8x16x16xbf16, #tpu.memory_space<vmem>>, vector<8x16x16xbf16>
    %8 = vector.shape_cast %7 : vector<8x16x16xbf16> to vector<128x16xbf16>
    %cst = arith.constant dense<0.000000e+00> : vector<128x32xf32>
    %9 = tpu.matmul %8, %0, %cst {dimension_numbers = #tpu.dot_dimension_numbers<[1], [0], [0], [1], [0, 0, 1, 1], [], []>} : vector<128x16xbf16>, vector<16x32xbf16>, vector<128x32xf32> -> vector<128x32xf32>
    %10 = vector.broadcast %2 : vector<1x32xf32> to vector<128x32xf32>
    %11 = arith.addf %9, %10 : vector<128x32xf32>
    %12 = arith.truncf %11 : vector<128x32xf32> to vector<128x32xbf16>
    %cst_9 = arith.constant dense<0.000000e+00> : vector<128x192xf32>
    %13 = tpu.matmul %12, %1, %cst_9 {dimension_numbers = #tpu.dot_dimension_numbers<[1], [0], [0], [1], [0, 0, 1, 1], [], []>} : vector<128x32xbf16>, vector<32x192xbf16>, vector<128x192xf32> -> vector<128x192xf32>
    %14 = vector.broadcast %3 : vector<1x192xf32> to vector<128x192xf32>
    %15 = arith.addf %13, %14 : vector<128x192xf32>
    %16 = arith.truncf %15 : vector<128x192xf32> to vector<128x192xbf16>
    %17 = vector.shape_cast %16 : vector<128x192xbf16> to vector<8x16x192xbf16>
    %18 = arith.index_cast %5 : i32 to index
    %c0_10 = arith.constant 0 : index
    %c0_11 = arith.constant 0 : index
    %19 = vector.load %arg19[%18, %c0_10, %c0_11] : memref<8x16x192xbf16, #tpu.memory_space<vmem>>, vector<8x16x192xbf16>
    tpu.vector_store %arg19[%18, %c0_10, %c0_11], %17 {strides = array<i32>} : memref<8x16x192xbf16, #tpu.memory_space<vmem>>, vector<8x16x192xbf16>,
    %c1_i32 = arith.constant 1 : i32
    %c0_12 = arith.constant 0 : index
    %c0_13 = arith.constant 0 : index
    %20 = vector.load %arg1[%c0_12, %c0_13] : memref<16x1xi32, #tpu.memory_space<vmem>>, vector<16x1xi32>
    %c0_14 = arith.constant 0 : index
    %c0_15 = arith.constant 0 : index
    %21 = vector.load %arg11[%c0_14, %c0_15] : memref<2x32xf32, #tpu.memory_space<vmem>>, vector<1x32xf32>
    %22 = vector.shape_cast %21 : vector<1x32xf32> to vector<1x32xf32>
    %23 = vector.broadcast %22 : vector<1x32xf32> to vector<16x32xf32>
    %c1 = arith.constant 1 : index
    %c0_16 = arith.constant 0 : index
    %24 = vector.load %arg11[%c1, %c0_16] : memref<2x32xf32, #tpu.memory_space<vmem>>, vector<1x32xf32>
    %25 = vector.shape_cast %24 : vector<1x32xf32> to vector<1x32xf32>
    %26 = vector.broadcast %25 : vector<1x32xf32> to vector<16x32xf32>
    %c0_17 = arith.constant 0 : index
    %c0_18 = arith.constant 0 : index
    %27 = vector.load %arg7[%c0_17, %c0_18] : memref<32x96xbf16, #tpu.memory_space<vmem>>, vector<32x96xbf16>
    %c0_19 = arith.constant 0 : index
    %c0_20 = arith.constant 0 : index
    %28 = vector.load %arg9[%c0_19, %c0_20] : memref<32x96xbf16, #tpu.memory_space<vmem>>, vector<32x96xbf16>
    %c0_21 = arith.constant 0 : index
    %c0_22 = arith.constant 0 : index
    %29 = vector.load %arg8[%c0_21, %c0_22] : memref<1x32xf32, #tpu.memory_space<vmem>>, vector<1x32xf32>
    %c0_23 = arith.constant 0 : index
    %c0_24 = arith.constant 0 : index
    %30 = vector.load %arg10[%c0_23, %c0_24] : memref<1x32xf32, #tpu.memory_space<vmem>>, vector<1x32xf32>
    %c0_i32_25 = arith.constant 0 : i32
    %31 = arith.index_cast %c0_i32_25 : i32 to index
    %c0_26 = arith.constant 0 : index
    %c0_27 = arith.constant 0 : index
    %32 = vector.load %arg19[%31, %c0_26, %c0_27] : memref<8x16x192xbf16, #tpu.memory_space<vmem>>, vector<1x16x192xbf16>
    %33 = vector.shape_cast %32 : vector<1x16x192xbf16> to vector<16x192xbf16>
    %34 = arith.extf %33 : vector<16x192xbf16> to vector<16x192xf32>
    %35 = arith.truncf %23 : vector<16x32xf32> to vector<16x32xbf16>
    %cst_28 = arith.constant dense<0.000000e+00> : vector<16x96xf32>
    %36 = tpu.matmul %35, %27, %cst_28 {dimension_numbers = #tpu.dot_dimension_numbers<[1], [0], [0], [1], [0, 0, 1, 1], [], []>} : vector<16x32xbf16>, vector<32x96xbf16>, vector<16x96xf32> -> vector<16x96xf32>
    %37 = vector.extract_strided_slice %34 {offsets = [0, 0], sizes = [16, 96], strides = [1, 1]} : vector<16x192xf32> to vector<16x96xf32>
    %38 = vector.extract_strided_slice %37 {offsets = [0, 0], sizes = [16, 32], strides = [1, 1]} : vector<16x96xf32> to vector<16x32xf32>
    %39 = vector.extract_strided_slice %36 {offsets = [0, 0], sizes = [16, 32], strides = [1, 1]} : vector<16x96xf32> to vector<16x32xf32>
    %40 = arith.addf %38, %39 : vector<16x32xf32>
    %cst_29 = arith.constant 5.000000e-01 : f32
    %41 = vector.broadcast %cst_29 : f32 to vector<16x32xf32>
    %42 = arith.mulf %41, %40 : vector<16x32xf32>
    %43 = math.tanh %42 : vector<16x32xf32>
    %cst_30 = arith.constant 1.000000e+00 : f32
    %44 = vector.broadcast %cst_30 : f32 to vector<16x32xf32>
    %45 = arith.addf %43, %44 : vector<16x32xf32>
    %cst_31 = arith.constant 5.000000e-01 : f32
    %46 = vector.broadcast %cst_31 : f32 to vector<16x32xf32>
    %47 = arith.mulf %46, %45 : vector<16x32xf32>
    %48 = vector.extract_strided_slice %37 {offsets = [0, 32], sizes = [16, 32], strides = [1, 1]} : vector<16x96xf32> to vector<16x32xf32>
    %49 = vector.extract_strided_slice %36 {offsets = [0, 32], sizes = [16, 32], strides = [1, 1]} : vector<16x96xf32> to vector<16x32xf32>
    %50 = arith.addf %48, %49 : vector<16x32xf32>
    %cst_32 = arith.constant 5.000000e-01 : f32
    %51 = vector.broadcast %cst_32 : f32 to vector<16x32xf32>
    %52 = arith.mulf %51, %50 : vector<16x32xf32>
    %53 = math.tanh %52 : vector<16x32xf32>
    %cst_33 = arith.constant 1.000000e+00 : f32
    %54 = vector.broadcast %cst_33 : f32 to vector<16x32xf32>
    %55 = arith.addf %53, %54 : vector<16x32xf32>
    %cst_34 = arith.constant 5.000000e-01 : f32
    %56 = vector.broadcast %cst_34 : f32 to vector<16x32xf32>
    %57 = arith.mulf %56, %55 : vector<16x32xf32>
    %58 = vector.extract_strided_slice %37 {offsets = [0, 64], sizes = [16, 32], strides = [1, 1]} : vector<16x96xf32> to vector<16x32xf32>
    %59 = vector.extract_strided_slice %36 {offsets = [0, 64], sizes = [16, 32], strides = [1, 1]} : vector<16x96xf32> to vector<16x32xf32>
    %60 = vector.broadcast %29 : vector<1x32xf32> to vector<16x32xf32>
    %61 = arith.addf %59, %60 : vector<16x32xf32>
    %62 = arith.mulf %47, %61 : vector<16x32xf32>
    %63 = arith.addf %58, %62 : vector<16x32xf32>
    %64 = math.tanh %63 : vector<16x32xf32>
    %cst_35 = arith.constant 1.000000e+00 : f32
    %65 = vector.broadcast %cst_35 : f32 to vector<16x32xf32>
    %66 = arith.subf %65, %57 : vector<16x32xf32>
    %67 = arith.mulf %66, %64 : vector<16x32xf32>
    %68 = arith.mulf %57, %23 : vector<16x32xf32>
    %69 = arith.addf %67, %68 : vector<16x32xf32>
    %70 = vector.broadcast %c0_i32_25 : i32 to vector<16x1xi32>
    %71 = arith.cmpi slt, %70, %20 : vector<16x1xi32>
    %72 = vector.shape_cast %71 : vector<16x1xi1> to vector<16x1xi1>
    %73 = vector.broadcast %72 : vector<16x1xi1> to vector<16x32xi1>
    %74 = arith.select %73, %69, %23 : vector<16x32xi1>, vector<16x32xf32>
    %c7_i32 = arith.constant 7 : i32
    %75 = arith.subi %c7_i32, %c0_i32_25 : i32
    %76 = arith.index_cast %75 : i32 to index
    %c0_36 = arith.constant 0 : index
    %c0_37 = arith.constant 0 : index
    %77 = vector.load %arg19[%76, %c0_36, %c0_37] : memref<8x16x192xbf16, #tpu.memory_space<vmem>>, vector<1x16x192xbf16>
    %78 = vector.shape_cast %77 : vector<1x16x192xbf16> to vector<16x192xbf16>
    %79 = arith.extf %78 : vector<16x192xbf16> to vector<16x192xf32>
    %80 = arith.truncf %26 : vector<16x32xf32> to vector<16x32xbf16>
    %cst_38 = arith.constant dense<0.000000e+00> : vector<16x96xf32>
    %81 = tpu.matmul %80, %28, %cst_38 {dimension_numbers = #tpu.dot_dimension_numbers<[1], [0], [0], [1], [0, 0, 1, 1], [], []>} : vector<16x32xbf16>, vector<32x96xbf16>, vector<16x96xf32> -> vector<16x96xf32>
    %82 = vector.extract_strided_slice %79 {offsets = [0, 96], sizes = [16, 96], strides = [1, 1]} : vector<16x192xf32> to vector<16x96xf32>
    %83 = vector.extract_strided_slice %82 {offsets = [0, 0], sizes = [16, 32], strides = [1, 1]} : vector<16x96xf32> to vector<16x32xf32>
    %84 = vector.extract_strided_slice %81 {offsets = [0, 0], sizes = [16, 32], strides = [1, 1]} : vector<16x96xf32> to vector<16x32xf32>
    %85 = arith.addf %83, %84 : vector<16x32xf32>
    %cst_39 = arith.constant 5.000000e-01 : f32
    %86 = vector.broadcast %cst_39 : f32 to vector<16x32xf32>
    %87 = arith.mulf %86, %85 : vector<16x32xf32>
    %88 = math.tanh %87 : vector<16x32xf32>
    %cst_40 = arith.constant 1.000000e+00 : f32
    %89 = vector.broadcast %cst_40 : f32 to vector<16x32xf32>
    %90 = arith.addf %88, %89 : vector<16x32xf32>
    %cst_41 = arith.constant 5.000000e-01 : f32
    %91 = vector.broadcast %cst_41 : f32 to vector<16x32xf32>
    %92 = arith.mulf %91, %90 : vector<16x32xf32>
    %93 = vector.extract_strided_slice %82 {offsets = [0, 32], sizes = [16, 32], strides = [1, 1]} : vector<16x96xf32> to vector<16x32xf32>
    %94 = vector.extract_strided_slice %81 {offsets = [0, 32], sizes = [16, 32], strides = [1, 1]} : vector<16x96xf32> to vector<16x32xf32>
    %95 = arith.addf %93, %94 : vector<16x32xf32>
    %cst_42 = arith.constant 5.000000e-01 : f32
    %96 = vector.broadcast %cst_42 : f32 to vector<16x32xf32>
    %97 = arith.mulf %96, %95 : vector<16x32xf32>
    %98 = math.tanh %97 : vector<16x32xf32>
    %cst_43 = arith.constant 1.000000e+00 : f32
    %99 = vector.broadcast %cst_43 : f32 to vector<16x32xf32>
    %100 = arith.addf %98, %99 : vector<16x32xf32>
    %cst_44 = arith.constant 5.000000e-01 : f32
    %101 = vector.broadcast %cst_44 : f32 to vector<16x32xf32>
    %102 = arith.mulf %101, %100 : vector<16x32xf32>
    %103 = vector.extract_strided_slice %82 {offsets = [0, 64], sizes = [16, 32], strides = [1, 1]} : vector<16x96xf32> to vector<16x32xf32>
    %104 = vector.extract_strided_slice %81 {offsets = [0, 64], sizes = [16, 32], strides = [1, 1]} : vector<16x96xf32> to vector<16x32xf32>
    %105 = vector.broadcast %30 : vector<1x32xf32> to vector<16x32xf32>
    %106 = arith.addf %104, %105 : vector<16x32xf32>
    %107 = arith.mulf %92, %106 : vector<16x32xf32>
    %108 = arith.addf %103, %107 : vector<16x32xf32>
    %109 = math.tanh %108 : vector<16x32xf32>
    %cst_45 = arith.constant 1.000000e+00 : f32
    %110 = vector.broadcast %cst_45 : f32 to vector<16x32xf32>
    %111 = arith.subf %110, %102 : vector<16x32xf32>
    %112 = arith.mulf %111, %109 : vector<16x32xf32>
    %113 = arith.mulf %102, %26 : vector<16x32xf32>
    %114 = arith.addf %112, %113 : vector<16x32xf32>
    %115 = vector.broadcast %75 : i32 to vector<16x1xi32>
    %116 = arith.cmpi slt, %115, %20 : vector<16x1xi32>
    %117 = vector.shape_cast %116 : vector<16x1xi1> to vector<16x1xi1>
    %118 = vector.broadcast %117 : vector<16x1xi1> to vector<16x32xi1>
    %119 = arith.select %118, %114, %26 : vector<16x32xi1>, vector<16x32xf32>
    %c1_i32_46 = arith.constant 1 : i32
    %120 = arith.index_cast %c1_i32_46 : i32 to index
    %c0_47 = arith.constant 0 : index
    %c0_48 = arith.constant 0 : index
    %121 = vector.load %arg19[%120, %c0_47, %c0_48] : memref<8x16x192xbf16, #tpu.memory_space<vmem>>, vector<1x16x192xbf16>
    %122 = vector.shape_cast %121 : vector<1x16x192xbf16> to vector<16x192xbf16>
    %123 = arith.extf %122 : vector<16x192xbf16> to vector<16x192xf32>
    %124 = arith.truncf %74 : vector<16x32xf32> to vector<16x32xbf16>
    %cst_49 = arith.constant dense<0.000000e+00> : vector<16x96xf32>
    %125 = tpu.matmul %124, %27, %cst_49 {dimension_numbers = #tpu.dot_dimension_numbers<[1], [0], [0], [1], [0, 0, 1, 1], [], []>} : vector<16x32xbf16>, vector<32x96xbf16>, vector<16x96xf32> -> vector<16x96xf32>
    %126 = vector.extract_strided_slice %123 {offsets = [0, 0], sizes = [16, 96], strides = [1, 1]} : vector<16x192xf32> to vector<16x96xf32>
    %127 = vector.extract_strided_slice %126 {offsets = [0, 0], sizes = [16, 32], strides = [1, 1]} : vector<16x96xf32> to vector<16x32xf32>
    %128 = vector.extract_strided_slice %125 {offsets = [0, 0], sizes = [16, 32], strides = [1, 1]} : vector<16x96xf32> to vector<16x32xf32>
    %129 = arith.addf %127, %128 : vector<16x32xf32>
    %cst_50 = arith.constant 5.000000e-01 : f32
    %130 = vector.broadcast %cst_50 : f32 to vector<16x32xf32>
    %131 = arith.mulf %130, %129 : vector<16x32xf32>
    %132 = math.tanh %131 : vector<16x32xf32>
    %cst_51 = arith.constant 1.000000e+00 : f32
    %133 = vector.broadcast %cst_51 : f32 to vector<16x32xf32>
    %134 = arith.addf %132, %133 : vector<16x32xf32>
    %cst_52 = arith.constant 5.000000e-01 : f32
    %135 = vector.broadcast %cst_52 : f32 to vector<16x32xf32>
    %136 = arith.mulf %135, %134 : vector<16x32xf32>
    %137 = vector.extract_strided_slice %126 {offsets = [0, 32], sizes = [16, 32], strides = [1, 1]} : vector<16x96xf32> to vector<16x32xf32>
    %138 = vector.extract_strided_slice %125 {offsets = [0, 32], sizes = [16, 32], strides = [1, 1]} : vector<16x96xf32> to vector<16x32xf32>
    %139 = arith.addf %137, %138 : vector<16x32xf32>
    %cst_53 = arith.constant 5.000000e-01 : f32
    %140 = vector.broadcast %cst_53 : f32 to vector<16x32xf32>
    %141 = arith.mulf %140, %139 : vector<16x32xf32>
    %142 = math.tanh %141 : vector<16x32xf32>
    %cst_54 = arith.constant 1.000000e+00 : f32
    %143 = vector.broadcast %cst_54 : f32 to vector<16x32xf32>
    %144 = arith.addf %142, %143 : vector<16x32xf32>
    %cst_55 = arith.constant 5.000000e-01 : f32
    %145 = vector.broadcast %cst_55 : f32 to vector<16x32xf32>
    %146 = arith.mulf %145, %144 : vector<16x32xf32>
    %147 = vector.extract_strided_slice %126 {offsets = [0, 64], sizes = [16, 32], strides = [1, 1]} : vector<16x96xf32> to vector<16x32xf32>
    %148 = vector.extract_strided_slice %125 {offsets = [0, 64], sizes = [16, 32], strides = [1, 1]} : vector<16x96xf32> to vector<16x32xf32>
    %149 = vector.broadcast %29 : vector<1x32xf32> to vector<16x32xf32>
    %150 = arith.addf %148, %149 : vector<16x32xf32>
    %151 = arith.mulf %136, %150 : vector<16x32xf32>
    %152 = arith.addf %147, %151 : vector<16x32xf32>
    %153 = math.tanh %152 : vector<16x32xf32>
    %cst_56 = arith.constant 1.000000e+00 : f32
    %154 = vector.broadcast %cst_56 : f32 to vector<16x32xf32>
    %155 = arith.subf %154, %146 : vector<16x32xf32>
    %156 = arith.mulf %155, %153 : vector<16x32xf32>
    %157 = arith.mulf %146, %74 : vector<16x32xf32>
    %158 = arith.addf %156, %157 : vector<16x32xf32>
    %159 = vector.broadcast %c1_i32_46 : i32 to vector<16x1xi32>
    %160 = arith.cmpi slt, %159, %20 : vector<16x1xi32>
    %161 = vector.shape_cast %160 : vector<16x1xi1> to vector<16x1xi1>
    %162 = vector.broadcast %161 : vector<16x1xi1> to vector<16x32xi1>
    %163 = arith.select %162, %158, %74 : vector<16x32xi1>, vector<16x32xf32>
    %c7_i32_57 = arith.constant 7 : i32
    %164 = arith.subi %c7_i32_57, %c1_i32_46 : i32
    %165 = arith.index_cast %164 : i32 to index
    %c0_58 = arith.constant 0 : index
    %c0_59 = arith.constant 0 : index
    %166 = vector.load %arg19[%165, %c0_58, %c0_59] : memref<8x16x192xbf16, #tpu.memory_space<vmem>>, vector<1x16x192xbf16>
    %167 = vector.shape_cast %166 : vector<1x16x192xbf16> to vector<16x192xbf16>
    %168 = arith.extf %167 : vector<16x192xbf16> to vector<16x192xf32>
    %169 = arith.truncf %119 : vector<16x32xf32> to vector<16x32xbf16>
    %cst_60 = arith.constant dense<0.000000e+00> : vector<16x96xf32>
    %170 = tpu.matmul %169, %28, %cst_60 {dimension_numbers = #tpu.dot_dimension_numbers<[1], [0], [0], [1], [0, 0, 1, 1], [], []>} : vector<16x32xbf16>, vector<32x96xbf16>, vector<16x96xf32> -> vector<16x96xf32>
    %171 = vector.extract_strided_slice %168 {offsets = [0, 96], sizes = [16, 96], strides = [1, 1]} : vector<16x192xf32> to vector<16x96xf32>
    %172 = vector.extract_strided_slice %171 {offsets = [0, 0], sizes = [16, 32], strides = [1, 1]} : vector<16x96xf32> to vector<16x32xf32>
    %173 = vector.extract_strided_slice %170 {offsets = [0, 0], sizes = [16, 32], strides = [1, 1]} : vector<16x96xf32> to vector<16x32xf32>
    %174 = arith.addf %172, %173 : vector<16x32xf32>
    %cst_61 = arith.constant 5.000000e-01 : f32
    %175 = vector.broadcast %cst_61 : f32 to vector<16x32xf32>
    %176 = arith.mulf %175, %174 : vector<16x32xf32>
    %177 = math.tanh %176 : vector<16x32xf32>
    %cst_62 = arith.constant 1.000000e+00 : f32
    %178 = vector.broadcast %cst_62 : f32 to vector<16x32xf32>
    %179 = arith.addf %177, %178 : vector<16x32xf32>
    %cst_63 = arith.constant 5.000000e-01 : f32
    %180 = vector.broadcast %cst_63 : f32 to vector<16x32xf32>
    %181 = arith.mulf %180, %179 : vector<16x32xf32>
    %182 = vector.extract_strided_slice %171 {offsets = [0, 32], sizes = [16, 32], strides = [1, 1]} : vector<16x96xf32> to vector<16x32xf32>
    %183 = vector.extract_strided_slice %170 {offsets = [0, 32], sizes = [16, 32], strides = [1, 1]} : vector<16x96xf32> to vector<16x32xf32>
    %184 = arith.addf %182, %183 : vector<16x32xf32>
    %cst_64 = arith.constant 5.000000e-01 : f32
    %185 = vector.broadcast %cst_64 : f32 to vector<16x32xf32>
    %186 = arith.mulf %185, %184 : vector<16x32xf32>
    %187 = math.tanh %186 : vector<16x32xf32>
    %cst_65 = arith.constant 1.000000e+00 : f32
    %188 = vector.broadcast %cst_65 : f32 to vector<16x32xf32>
    %189 = arith.addf %187, %188 : vector<16x32xf32>
    %cst_66 = arith.constant 5.000000e-01 : f32
    %190 = vector.broadcast %cst_66 : f32 to vector<16x32xf32>
    %191 = arith.mulf %190, %189 : vector<16x32xf32>
    %192 = vector.extract_strided_slice %171 {offsets = [0, 64], sizes = [16, 32], strides = [1, 1]} : vector<16x96xf32> to vector<16x32xf32>
    %193 = vector.extract_strided_slice %170 {offsets = [0, 64], sizes = [16, 32], strides = [1, 1]} : vector<16x96xf32> to vector<16x32xf32>
    %194 = vector.broadcast %30 : vector<1x32xf32> to vector<16x32xf32>
    %195 = arith.addf %193, %194 : vector<16x32xf32>
    %196 = arith.mulf %181, %195 : vector<16x32xf32>
    %197 = arith.addf %192, %196 : vector<16x32xf32>
    %198 = math.tanh %197 : vector<16x32xf32>
    %cst_67 = arith.constant 1.000000e+00 : f32
    %199 = vector.broadcast %cst_67 : f32 to vector<16x32xf32>
    %200 = arith.subf %199, %191 : vector<16x32xf32>
    %201 = arith.mulf %200, %198 : vector<16x32xf32>
    %202 = arith.mulf %191, %119 : vector<16x32xf32>
    %203 = arith.addf %201, %202 : vector<16x32xf32>
    %204 = vector.broadcast %164 : i32 to vector<16x1xi32>
    %205 = arith.cmpi slt, %204, %20 : vector<16x1xi32>
    %206 = vector.shape_cast %205 : vector<16x1xi1> to vector<16x1xi1>
    %207 = vector.broadcast %206 : vector<16x1xi1> to vector<16x32xi1>
    %208 = arith.select %207, %203, %119 : vector<16x32xi1>, vector<16x32xf32>
    %c2_i32 = arith.constant 2 : i32
    %209 = arith.index_cast %c2_i32 : i32 to index
    %c0_68 = arith.constant 0 : index
    %c0_69 = arith.constant 0 : index
    %210 = vector.load %arg19[%209, %c0_68, %c0_69] : memref<8x16x192xbf16, #tpu.memory_space<vmem>>, vector<1x16x192xbf16>
    %211 = vector.shape_cast %210 : vector<1x16x192xbf16> to vector<16x192xbf16>
    %212 = arith.extf %211 : vector<16x192xbf16> to vector<16x192xf32>
    %213 = arith.truncf %163 : vector<16x32xf32> to vector<16x32xbf16>
    %cst_70 = arith.constant dense<0.000000e+00> : vector<16x96xf32>
    %214 = tpu.matmul %213, %27, %cst_70 {dimension_numbers = #tpu.dot_dimension_numbers<[1], [0], [0], [1], [0, 0, 1, 1], [], []>} : vector<16x32xbf16>, vector<32x96xbf16>, vector<16x96xf32> -> vector<16x96xf32>
    %215 = vector.extract_strided_slice %212 {offsets = [0, 0], sizes = [16, 96], strides = [1, 1]} : vector<16x192xf32> to vector<16x96xf32>
    %216 = vector.extract_strided_slice %215 {offsets = [0, 0], sizes = [16, 32], strides = [1, 1]} : vector<16x96xf32> to vector<16x32xf32>
    %217 = vector.extract_strided_slice %214 {offsets = [0, 0], sizes = [16, 32], strides = [1, 1]} : vector<16x96xf32> to vector<16x32xf32>
    %218 = arith.addf %216, %217 : vector<16x32xf32>
    %cst_71 = arith.constant 5.000000e-01 : f32
    %219 = vector.broadcast %cst_71 : f32 to vector<16x32xf32>
    %220 = arith.mulf %219, %218 : vector<16x32xf32>
    %221 = math.tanh %220 : vector<16x32xf32>
    %cst_72 = arith.constant 1.000000e+00 : f32
    %222 = vector.broadcast %cst_72 : f32 to vector<16x32xf32>
    %223 = arith.addf %221, %222 : vector<16x32xf32>
    %cst_73 = arith.constant 5.000000e-01 : f32
    %224 = vector.broadcast %cst_73 : f32 to vector<16x32xf32>
    %225 = arith.mulf %224, %223 : vector<16x32xf32>
    %226 = vector.extract_strided_slice %215 {offsets = [0, 32], sizes = [16, 32], strides = [1, 1]} : vector<16x96xf32> to vector<16x32xf32>
    %227 = vector.extract_strided_slice %214 {offsets = [0, 32], sizes = [16, 32], strides = [1, 1]} : vector<16x96xf32> to vector<16x32xf32>
    %228 = arith.addf %226, %227 : vector<16x32xf32>
    %cst_74 = arith.constant 5.000000e-01 : f32
    %229 = vector.broadcast %cst_74 : f32 to vector<16x32xf32>
    %230 = arith.mulf %229, %228 : vector<16x32xf32>
    %231 = math.tanh %230 : vector<16x32xf32>
    %cst_75 = arith.constant 1.000000e+00 : f32
    %232 = vector.broadcast %cst_75 : f32 to vector<16x32xf32>
    %233 = arith.addf %231, %232 : vector<16x32xf32>
    %cst_76 = arith.constant 5.000000e-01 : f32
    %234 = vector.broadcast %cst_76 : f32 to vector<16x32xf32>
    %235 = arith.mulf %234, %233 : vector<16x32xf32>
    %236 = vector.extract_strided_slice %215 {offsets = [0, 64], sizes = [16, 32], strides = [1, 1]} : vector<16x96xf32> to vector<16x32xf32>
    %237 = vector.extract_strided_slice %214 {offsets = [0, 64], sizes = [16, 32], strides = [1, 1]} : vector<16x96xf32> to vector<16x32xf32>
    %238 = vector.broadcast %29 : vector<1x32xf32> to vector<16x32xf32>
    %239 = arith.addf %237, %238 : vector<16x32xf32>
    %240 = arith.mulf %225, %239 : vector<16x32xf32>
    %241 = arith.addf %236, %240 : vector<16x32xf32>
    %242 = math.tanh %241 : vector<16x32xf32>
    %cst_77 = arith.constant 1.000000e+00 : f32
    %243 = vector.broadcast %cst_77 : f32 to vector<16x32xf32>
    %244 = arith.subf %243, %235 : vector<16x32xf32>
    %245 = arith.mulf %244, %242 : vector<16x32xf32>
    %246 = arith.mulf %235, %163 : vector<16x32xf32>
    %247 = arith.addf %245, %246 : vector<16x32xf32>
    %248 = vector.broadcast %c2_i32 : i32 to vector<16x1xi32>
    %249 = arith.cmpi slt, %248, %20 : vector<16x1xi32>
    %250 = vector.shape_cast %249 : vector<16x1xi1> to vector<16x1xi1>
    %251 = vector.broadcast %250 : vector<16x1xi1> to vector<16x32xi1>
    %252 = arith.select %251, %247, %163 : vector<16x32xi1>, vector<16x32xf32>
    %c7_i32_78 = arith.constant 7 : i32
    %253 = arith.subi %c7_i32_78, %c2_i32 : i32
    %254 = arith.index_cast %253 : i32 to index
    %c0_79 = arith.constant 0 : index
    %c0_80 = arith.constant 0 : index
    %255 = vector.load %arg19[%254, %c0_79, %c0_80] : memref<8x16x192xbf16, #tpu.memory_space<vmem>>, vector<1x16x192xbf16>
    %256 = vector.shape_cast %255 : vector<1x16x192xbf16> to vector<16x192xbf16>
    %257 = arith.extf %256 : vector<16x192xbf16> to vector<16x192xf32>
    %258 = arith.truncf %208 : vector<16x32xf32> to vector<16x32xbf16>
    %cst_81 = arith.constant dense<0.000000e+00> : vector<16x96xf32>
    %259 = tpu.matmul %258, %28, %cst_81 {dimension_numbers = #tpu.dot_dimension_numbers<[1], [0], [0], [1], [0, 0, 1, 1], [], []>} : vector<16x32xbf16>, vector<32x96xbf16>, vector<16x96xf32> -> vector<16x96xf32>
    %260 = vector.extract_strided_slice %257 {offsets = [0, 96], sizes = [16, 96], strides = [1, 1]} : vector<16x192xf32> to vector<16x96xf32>
    %261 = vector.extract_strided_slice %260 {offsets = [0, 0], sizes = [16, 32], strides = [1, 1]} : vector<16x96xf32> to vector<16x32xf32>
    %262 = vector.extract_strided_slice %259 {offsets = [0, 0], sizes = [16, 32], strides = [1, 1]} : vector<16x96xf32> to vector<16x32xf32>
    %263 = arith.addf %261, %262 : vector<16x32xf32>
    %cst_82 = arith.constant 5.000000e-01 : f32
    %264 = vector.broadcast %cst_82 : f32 to vector<16x32xf32>
    %265 = arith.mulf %264, %263 : vector<16x32xf32>
    %266 = math.tanh %265 : vector<16x32xf32>
    %cst_83 = arith.constant 1.000000e+00 : f32
    %267 = vector.broadcast %cst_83 : f32 to vector<16x32xf32>
    %268 = arith.addf %266, %267 : vector<16x32xf32>
    %cst_84 = arith.constant 5.000000e-01 : f32
    %269 = vector.broadcast %cst_84 : f32 to vector<16x32xf32>
    %270 = arith.mulf %269, %268 : vector<16x32xf32>
    %271 = vector.extract_strided_slice %260 {offsets = [0, 32], sizes = [16, 32], strides = [1, 1]} : vector<16x96xf32> to vector<16x32xf32>
    %272 = vector.extract_strided_slice %259 {offsets = [0, 32], sizes = [16, 32], strides = [1, 1]} : vector<16x96xf32> to vector<16x32xf32>
    %273 = arith.addf %271, %272 : vector<16x32xf32>
    %cst_85 = arith.constant 5.000000e-01 : f32
    %274 = vector.broadcast %cst_85 : f32 to vector<16x32xf32>
    %275 = arith.mulf %274, %273 : vector<16x32xf32>
    %276 = math.tanh %275 : vector<16x32xf32>
    %cst_86 = arith.constant 1.000000e+00 : f32
    %277 = vector.broadcast %cst_86 : f32 to vector<16x32xf32>
    %278 = arith.addf %276, %277 : vector<16x32xf32>
    %cst_87 = arith.constant 5.000000e-01 : f32
    %279 = vector.broadcast %cst_87 : f32 to vector<16x32xf32>
    %280 = arith.mulf %279, %278 : vector<16x32xf32>
    %281 = vector.extract_strided_slice %260 {offsets = [0, 64], sizes = [16, 32], strides = [1, 1]} : vector<16x96xf32> to vector<16x32xf32>
    %282 = vector.extract_strided_slice %259 {offsets = [0, 64], sizes = [16, 32], strides = [1, 1]} : vector<16x96xf32> to vector<16x32xf32>
    %283 = vector.broadcast %30 : vector<1x32xf32> to vector<16x32xf32>
    %284 = arith.addf %282, %283 : vector<16x32xf32>
    %285 = arith.mulf %270, %284 : vector<16x32xf32>
    %286 = arith.addf %281, %285 : vector<16x32xf32>
    %287 = math.tanh %286 : vector<16x32xf32>
    %cst_88 = arith.constant 1.000000e+00 : f32
    %288 = vector.broadcast %cst_88 : f32 to vector<16x32xf32>
    %289 = arith.subf %288, %280 : vector<16x32xf32>
    %290 = arith.mulf %289, %287 : vector<16x32xf32>
    %291 = arith.mulf %280, %208 : vector<16x32xf32>
    %292 = arith.addf %290, %291 : vector<16x32xf32>
    %293 = vector.broadcast %253 : i32 to vector<16x1xi32>
    %294 = arith.cmpi slt, %293, %20 : vector<16x1xi32>
    %295 = vector.shape_cast %294 : vector<16x1xi1> to vector<16x1xi1>
    %296 = vector.broadcast %295 : vector<16x1xi1> to vector<16x32xi1>
    %297 = arith.select %296, %292, %208 : vector<16x32xi1>, vector<16x32xf32>
    %c3_i32 = arith.constant 3 : i32
    %298 = arith.index_cast %c3_i32 : i32 to index
    %c0_89 = arith.constant 0 : index
    %c0_90 = arith.constant 0 : index
    %299 = vector.load %arg19[%298, %c0_89, %c0_90] : memref<8x16x192xbf16, #tpu.memory_space<vmem>>, vector<1x16x192xbf16>
    %300 = vector.shape_cast %299 : vector<1x16x192xbf16> to vector<16x192xbf16>
    %301 = arith.extf %300 : vector<16x192xbf16> to vector<16x192xf32>
    %302 = arith.truncf %252 : vector<16x32xf32> to vector<16x32xbf16>
    %cst_91 = arith.constant dense<0.000000e+00> : vector<16x96xf32>
    %303 = tpu.matmul %302, %27, %cst_91 {dimension_numbers = #tpu.dot_dimension_numbers<[1], [0], [0], [1], [0, 0, 1, 1], [], []>} : vector<16x32xbf16>, vector<32x96xbf16>, vector<16x96xf32> -> vector<16x96xf32>
    %304 = vector.extract_strided_slice %301 {offsets = [0, 0], sizes = [16, 96], strides = [1, 1]} : vector<16x192xf32> to vector<16x96xf32>
    %305 = vector.extract_strided_slice %304 {offsets = [0, 0], sizes = [16, 32], strides = [1, 1]} : vector<16x96xf32> to vector<16x32xf32>
    %306 = vector.extract_strided_slice %303 {offsets = [0, 0], sizes = [16, 32], strides = [1, 1]} : vector<16x96xf32> to vector<16x32xf32>
    %307 = arith.addf %305, %306 : vector<16x32xf32>
    %cst_92 = arith.constant 5.000000e-01 : f32
    %308 = vector.broadcast %cst_92 : f32 to vector<16x32xf32>
    %309 = arith.mulf %308, %307 : vector<16x32xf32>
    %310 = math.tanh %309 : vector<16x32xf32>
    %cst_93 = arith.constant 1.000000e+00 : f32
    %311 = vector.broadcast %cst_93 : f32 to vector<16x32xf32>
    %312 = arith.addf %310, %311 : vector<16x32xf32>
    %cst_94 = arith.constant 5.000000e-01 : f32
    %313 = vector.broadcast %cst_94 : f32 to vector<16x32xf32>
    %314 = arith.mulf %313, %312 : vector<16x32xf32>
    %315 = vector.extract_strided_slice %304 {offsets = [0, 32], sizes = [16, 32], strides = [1, 1]} : vector<16x96xf32> to vector<16x32xf32>
    %316 = vector.extract_strided_slice %303 {offsets = [0, 32], sizes = [16, 32], strides = [1, 1]} : vector<16x96xf32> to vector<16x32xf32>
    %317 = arith.addf %315, %316 : vector<16x32xf32>
    %cst_95 = arith.constant 5.000000e-01 : f32
    %318 = vector.broadcast %cst_95 : f32 to vector<16x32xf32>
    %319 = arith.mulf %318, %317 : vector<16x32xf32>
    %320 = math.tanh %319 : vector<16x32xf32>
    %cst_96 = arith.constant 1.000000e+00 : f32
    %321 = vector.broadcast %cst_96 : f32 to vector<16x32xf32>
    %322 = arith.addf %320, %321 : vector<16x32xf32>
    %cst_97 = arith.constant 5.000000e-01 : f32
    %323 = vector.broadcast %cst_97 : f32 to vector<16x32xf32>
    %324 = arith.mulf %323, %322 : vector<16x32xf32>
    %325 = vector.extract_strided_slice %304 {offsets = [0, 64], sizes = [16, 32], strides = [1, 1]} : vector<16x96xf32> to vector<16x32xf32>
    %326 = vector.extract_strided_slice %303 {offsets = [0, 64], sizes = [16, 32], strides = [1, 1]} : vector<16x96xf32> to vector<16x32xf32>
    %327 = vector.broadcast %29 : vector<1x32xf32> to vector<16x32xf32>
    %328 = arith.addf %326, %327 : vector<16x32xf32>
    %329 = arith.mulf %314, %328 : vector<16x32xf32>
    %330 = arith.addf %325, %329 : vector<16x32xf32>
    %331 = math.tanh %330 : vector<16x32xf32>
    %cst_98 = arith.constant 1.000000e+00 : f32
    %332 = vector.broadcast %cst_98 : f32 to vector<16x32xf32>
    %333 = arith.subf %332, %324 : vector<16x32xf32>
    %334 = arith.mulf %333, %331 : vector<16x32xf32>
    %335 = arith.mulf %324, %252 : vector<16x32xf32>
    %336 = arith.addf %334, %335 : vector<16x32xf32>
    %337 = vector.broadcast %c3_i32 : i32 to vector<16x1xi32>
    %338 = arith.cmpi slt, %337, %20 : vector<16x1xi32>
    %339 = vector.shape_cast %338 : vector<16x1xi1> to vector<16x1xi1>
    %340 = vector.broadcast %339 : vector<16x1xi1> to vector<16x32xi1>
    %341 = arith.select %340, %336, %252 : vector<16x32xi1>, vector<16x32xf32>
    %c7_i32_99 = arith.constant 7 : i32
    %342 = arith.subi %c7_i32_99, %c3_i32 : i32
    %343 = arith.index_cast %342 : i32 to index
    %c0_100 = arith.constant 0 : index
    %c0_101 = arith.constant 0 : index
    %344 = vector.load %arg19[%343, %c0_100, %c0_101] : memref<8x16x192xbf16, #tpu.memory_space<vmem>>, vector<1x16x192xbf16>
    %345 = vector.shape_cast %344 : vector<1x16x192xbf16> to vector<16x192xbf16>
    %346 = arith.extf %345 : vector<16x192xbf16> to vector<16x192xf32>
    %347 = arith.truncf %297 : vector<16x32xf32> to vector<16x32xbf16>
    %cst_102 = arith.constant dense<0.000000e+00> : vector<16x96xf32>
    %348 = tpu.matmul %347, %28, %cst_102 {dimension_numbers = #tpu.dot_dimension_numbers<[1], [0], [0], [1], [0, 0, 1, 1], [], []>} : vector<16x32xbf16>, vector<32x96xbf16>, vector<16x96xf32> -> vector<16x96xf32>
    %349 = vector.extract_strided_slice %346 {offsets = [0, 96], sizes = [16, 96], strides = [1, 1]} : vector<16x192xf32> to vector<16x96xf32>
    %350 = vector.extract_strided_slice %349 {offsets = [0, 0], sizes = [16, 32], strides = [1, 1]} : vector<16x96xf32> to vector<16x32xf32>
    %351 = vector.extract_strided_slice %348 {offsets = [0, 0], sizes = [16, 32], strides = [1, 1]} : vector<16x96xf32> to vector<16x32xf32>
    %352 = arith.addf %350, %351 : vector<16x32xf32>
    %cst_103 = arith.constant 5.000000e-01 : f32
    %353 = vector.broadcast %cst_103 : f32 to vector<16x32xf32>
    %354 = arith.mulf %353, %352 : vector<16x32xf32>
    %355 = math.tanh %354 : vector<16x32xf32>
    %cst_104 = arith.constant 1.000000e+00 : f32
    %356 = vector.broadcast %cst_104 : f32 to vector<16x32xf32>
    %357 = arith.addf %355, %356 : vector<16x32xf32>
    %cst_105 = arith.constant 5.000000e-01 : f32
    %358 = vector.broadcast %cst_105 : f32 to vector<16x32xf32>
    %359 = arith.mulf %358, %357 : vector<16x32xf32>
    %360 = vector.extract_strided_slice %349 {offsets = [0, 32], sizes = [16, 32], strides = [1, 1]} : vector<16x96xf32> to vector<16x32xf32>
    %361 = vector.extract_strided_slice %348 {offsets = [0, 32], sizes = [16, 32], strides = [1, 1]} : vector<16x96xf32> to vector<16x32xf32>
    %362 = arith.addf %360, %361 : vector<16x32xf32>
    %cst_106 = arith.constant 5.000000e-01 : f32
    %363 = vector.broadcast %cst_106 : f32 to vector<16x32xf32>
    %364 = arith.mulf %363, %362 : vector<16x32xf32>
    %365 = math.tanh %364 : vector<16x32xf32>
    %cst_107 = arith.constant 1.000000e+00 : f32
    %366 = vector.broadcast %cst_107 : f32 to vector<16x32xf32>
    %367 = arith.addf %365, %366 : vector<16x32xf32>
    %cst_108 = arith.constant 5.000000e-01 : f32
    %368 = vector.broadcast %cst_108 : f32 to vector<16x32xf32>
    %369 = arith.mulf %368, %367 : vector<16x32xf32>
    %370 = vector.extract_strided_slice %349 {offsets = [0, 64], sizes = [16, 32], strides = [1, 1]} : vector<16x96xf32> to vector<16x32xf32>
    %371 = vector.extract_strided_slice %348 {offsets = [0, 64], sizes = [16, 32], strides = [1, 1]} : vector<16x96xf32> to vector<16x32xf32>
    %372 = vector.broadcast %30 : vector<1x32xf32> to vector<16x32xf32>
    %373 = arith.addf %371, %372 : vector<16x32xf32>
    %374 = arith.mulf %359, %373 : vector<16x32xf32>
    %375 = arith.addf %370, %374 : vector<16x32xf32>
    %376 = math.tanh %375 : vector<16x32xf32>
    %cst_109 = arith.constant 1.000000e+00 : f32
    %377 = vector.broadcast %cst_109 : f32 to vector<16x32xf32>
    %378 = arith.subf %377, %369 : vector<16x32xf32>
    %379 = arith.mulf %378, %376 : vector<16x32xf32>
    %380 = arith.mulf %369, %297 : vector<16x32xf32>
    %381 = arith.addf %379, %380 : vector<16x32xf32>
    %382 = vector.broadcast %342 : i32 to vector<16x1xi32>
    %383 = arith.cmpi slt, %382, %20 : vector<16x1xi32>
    %384 = vector.shape_cast %383 : vector<16x1xi1> to vector<16x1xi1>
    %385 = vector.broadcast %384 : vector<16x1xi1> to vector<16x32xi1>
    %386 = arith.select %385, %381, %297 : vector<16x32xi1>, vector<16x32xf32>
    %c4_i32 = arith.constant 4 : i32
    %387 = arith.index_cast %c4_i32 : i32 to index
    %c0_110 = arith.constant 0 : index
    %c0_111 = arith.constant 0 : index
    %388 = vector.load %arg19[%387, %c0_110, %c0_111] : memref<8x16x192xbf16, #tpu.memory_space<vmem>>, vector<1x16x192xbf16>
    %389 = vector.shape_cast %388 : vector<1x16x192xbf16> to vector<16x192xbf16>
    %390 = arith.extf %389 : vector<16x192xbf16> to vector<16x192xf32>
    %391 = arith.truncf %341 : vector<16x32xf32> to vector<16x32xbf16>
    %cst_112 = arith.constant dense<0.000000e+00> : vector<16x96xf32>
    %392 = tpu.matmul %391, %27, %cst_112 {dimension_numbers = #tpu.dot_dimension_numbers<[1], [0], [0], [1], [0, 0, 1, 1], [], []>} : vector<16x32xbf16>, vector<32x96xbf16>, vector<16x96xf32> -> vector<16x96xf32>
    %393 = vector.extract_strided_slice %390 {offsets = [0, 0], sizes = [16, 96], strides = [1, 1]} : vector<16x192xf32> to vector<16x96xf32>
    %394 = vector.extract_strided_slice %393 {offsets = [0, 0], sizes = [16, 32], strides = [1, 1]} : vector<16x96xf32> to vector<16x32xf32>
    %395 = vector.extract_strided_slice %392 {offsets = [0, 0], sizes = [16, 32], strides = [1, 1]} : vector<16x96xf32> to vector<16x32xf32>
    %396 = arith.addf %394, %395 : vector<16x32xf32>
    %cst_113 = arith.constant 5.000000e-01 : f32
    %397 = vector.broadcast %cst_113 : f32 to vector<16x32xf32>
    %398 = arith.mulf %397, %396 : vector<16x32xf32>
    %399 = math.tanh %398 : vector<16x32xf32>
    %cst_114 = arith.constant 1.000000e+00 : f32
    %400 = vector.broadcast %cst_114 : f32 to vector<16x32xf32>
    %401 = arith.addf %399, %400 : vector<16x32xf32>
    %cst_115 = arith.constant 5.000000e-01 : f32
    %402 = vector.broadcast %cst_115 : f32 to vector<16x32xf32>
    %403 = arith.mulf %402, %401 : vector<16x32xf32>
    %404 = vector.extract_strided_slice %393 {offsets = [0, 32], sizes = [16, 32], strides = [1, 1]} : vector<16x96xf32> to vector<16x32xf32>
    %405 = vector.extract_strided_slice %392 {offsets = [0, 32], sizes = [16, 32], strides = [1, 1]} : vector<16x96xf32> to vector<16x32xf32>
    %406 = arith.addf %404, %405 : vector<16x32xf32>
    %cst_116 = arith.constant 5.000000e-01 : f32
    %407 = vector.broadcast %cst_116 : f32 to vector<16x32xf32>
    %408 = arith.mulf %407, %406 : vector<16x32xf32>
    %409 = math.tanh %408 : vector<16x32xf32>
    %cst_117 = arith.constant 1.000000e+00 : f32
    %410 = vector.broadcast %cst_117 : f32 to vector<16x32xf32>
    %411 = arith.addf %409, %410 : vector<16x32xf32>
    %cst_118 = arith.constant 5.000000e-01 : f32
    %412 = vector.broadcast %cst_118 : f32 to vector<16x32xf32>
    %413 = arith.mulf %412, %411 : vector<16x32xf32>
    %414 = vector.extract_strided_slice %393 {offsets = [0, 64], sizes = [16, 32], strides = [1, 1]} : vector<16x96xf32> to vector<16x32xf32>
    %415 = vector.extract_strided_slice %392 {offsets = [0, 64], sizes = [16, 32], strides = [1, 1]} : vector<16x96xf32> to vector<16x32xf32>
    %416 = vector.broadcast %29 : vector<1x32xf32> to vector<16x32xf32>
    %417 = arith.addf %415, %416 : vector<16x32xf32>
    %418 = arith.mulf %403, %417 : vector<16x32xf32>
    %419 = arith.addf %414, %418 : vector<16x32xf32>
    %420 = math.tanh %419 : vector<16x32xf32>
    %cst_119 = arith.constant 1.000000e+00 : f32
    %421 = vector.broadcast %cst_119 : f32 to vector<16x32xf32>
    %422 = arith.subf %421, %413 : vector<16x32xf32>
    %423 = arith.mulf %422, %420 : vector<16x32xf32>
    %424 = arith.mulf %413, %341 : vector<16x32xf32>
    %425 = arith.addf %423, %424 : vector<16x32xf32>
    %426 = vector.broadcast %c4_i32 : i32 to vector<16x1xi32>
    %427 = arith.cmpi slt, %426, %20 : vector<16x1xi32>
    %428 = vector.shape_cast %427 : vector<16x1xi1> to vector<16x1xi1>
    %429 = vector.broadcast %428 : vector<16x1xi1> to vector<16x32xi1>
    %430 = arith.select %429, %425, %341 : vector<16x32xi1>, vector<16x32xf32>
    %c7_i32_120 = arith.constant 7 : i32
    %431 = arith.subi %c7_i32_120, %c4_i32 : i32
    %432 = arith.index_cast %431 : i32 to index
    %c0_121 = arith.constant 0 : index
    %c0_122 = arith.constant 0 : index
    %433 = vector.load %arg19[%432, %c0_121, %c0_122] : memref<8x16x192xbf16, #tpu.memory_space<vmem>>, vector<1x16x192xbf16>
    %434 = vector.shape_cast %433 : vector<1x16x192xbf16> to vector<16x192xbf16>
    %435 = arith.extf %434 : vector<16x192xbf16> to vector<16x192xf32>
    %436 = arith.truncf %386 : vector<16x32xf32> to vector<16x32xbf16>
    %cst_123 = arith.constant dense<0.000000e+00> : vector<16x96xf32>
    %437 = tpu.matmul %436, %28, %cst_123 {dimension_numbers = #tpu.dot_dimension_numbers<[1], [0], [0], [1], [0, 0, 1, 1], [], []>} : vector<16x32xbf16>, vector<32x96xbf16>, vector<16x96xf32> -> vector<16x96xf32>
    %438 = vector.extract_strided_slice %435 {offsets = [0, 96], sizes = [16, 96], strides = [1, 1]} : vector<16x192xf32> to vector<16x96xf32>
    %439 = vector.extract_strided_slice %438 {offsets = [0, 0], sizes = [16, 32], strides = [1, 1]} : vector<16x96xf32> to vector<16x32xf32>
    %440 = vector.extract_strided_slice %437 {offsets = [0, 0], sizes = [16, 32], strides = [1, 1]} : vector<16x96xf32> to vector<16x32xf32>
    %441 = arith.addf %439, %440 : vector<16x32xf32>
    %cst_124 = arith.constant 5.000000e-01 : f32
    %442 = vector.broadcast %cst_124 : f32 to vector<16x32xf32>
    %443 = arith.mulf %442, %441 : vector<16x32xf32>
    %444 = math.tanh %443 : vector<16x32xf32>
    %cst_125 = arith.constant 1.000000e+00 : f32
    %445 = vector.broadcast %cst_125 : f32 to vector<16x32xf32>
    %446 = arith.addf %444, %445 : vector<16x32xf32>
    %cst_126 = arith.constant 5.000000e-01 : f32
    %447 = vector.broadcast %cst_126 : f32 to vector<16x32xf32>
    %448 = arith.mulf %447, %446 : vector<16x32xf32>
    %449 = vector.extract_strided_slice %438 {offsets = [0, 32], sizes = [16, 32], strides = [1, 1]} : vector<16x96xf32> to vector<16x32xf32>
    %450 = vector.extract_strided_slice %437 {offsets = [0, 32], sizes = [16, 32], strides = [1, 1]} : vector<16x96xf32> to vector<16x32xf32>
    %451 = arith.addf %449, %450 : vector<16x32xf32>
    %cst_127 = arith.constant 5.000000e-01 : f32
    %452 = vector.broadcast %cst_127 : f32 to vector<16x32xf32>
    %453 = arith.mulf %452, %451 : vector<16x32xf32>
    %454 = math.tanh %453 : vector<16x32xf32>
    %cst_128 = arith.constant 1.000000e+00 : f32
    %455 = vector.broadcast %cst_128 : f32 to vector<16x32xf32>
    %456 = arith.addf %454, %455 : vector<16x32xf32>
    %cst_129 = arith.constant 5.000000e-01 : f32
    %457 = vector.broadcast %cst_129 : f32 to vector<16x32xf32>
    %458 = arith.mulf %457, %456 : vector<16x32xf32>
    %459 = vector.extract_strided_slice %438 {offsets = [0, 64], sizes = [16, 32], strides = [1, 1]} : vector<16x96xf32> to vector<16x32xf32>
    %460 = vector.extract_strided_slice %437 {offsets = [0, 64], sizes = [16, 32], strides = [1, 1]} : vector<16x96xf32> to vector<16x32xf32>
    %461 = vector.broadcast %30 : vector<1x32xf32> to vector<16x32xf32>
    %462 = arith.addf %460, %461 : vector<16x32xf32>
    %463 = arith.mulf %448, %462 : vector<16x32xf32>
    %464 = arith.addf %459, %463 : vector<16x32xf32>
    %465 = math.tanh %464 : vector<16x32xf32>
    %cst_130 = arith.constant 1.000000e+00 : f32
    %466 = vector.broadcast %cst_130 : f32 to vector<16x32xf32>
    %467 = arith.subf %466, %458 : vector<16x32xf32>
    %468 = arith.mulf %467, %465 : vector<16x32xf32>
    %469 = arith.mulf %458, %386 : vector<16x32xf32>
    %470 = arith.addf %468, %469 : vector<16x32xf32>
    %471 = vector.broadcast %431 : i32 to vector<16x1xi32>
    %472 = arith.cmpi slt, %471, %20 : vector<16x1xi32>
    %473 = vector.shape_cast %472 : vector<16x1xi1> to vector<16x1xi1>
    %474 = vector.broadcast %473 : vector<16x1xi1> to vector<16x32xi1>
    %475 = arith.select %474, %470, %386 : vector<16x32xi1>, vector<16x32xf32>
    %c5_i32 = arith.constant 5 : i32
    %476 = arith.index_cast %c5_i32 : i32 to index
    %c0_131 = arith.constant 0 : index
    %c0_132 = arith.constant 0 : index
    %477 = vector.load %arg19[%476, %c0_131, %c0_132] : memref<8x16x192xbf16, #tpu.memory_space<vmem>>, vector<1x16x192xbf16>
    %478 = vector.shape_cast %477 : vector<1x16x192xbf16> to vector<16x192xbf16>
    %479 = arith.extf %478 : vector<16x192xbf16> to vector<16x192xf32>
    %480 = arith.truncf %430 : vector<16x32xf32> to vector<16x32xbf16>
    %cst_133 = arith.constant dense<0.000000e+00> : vector<16x96xf32>
    %481 = tpu.matmul %480, %27, %cst_133 {dimension_numbers = #tpu.dot_dimension_numbers<[1], [0], [0], [1], [0, 0, 1, 1], [], []>} : vector<16x32xbf16>, vector<32x96xbf16>, vector<16x96xf32> -> vector<16x96xf32>
    %482 = vector.extract_strided_slice %479 {offsets = [0, 0], sizes = [16, 96], strides = [1, 1]} : vector<16x192xf32> to vector<16x96xf32>
    %483 = vector.extract_strided_slice %482 {offsets = [0, 0], sizes = [16, 32], strides = [1, 1]} : vector<16x96xf32> to vector<16x32xf32>
    %484 = vector.extract_strided_slice %481 {offsets = [0, 0], sizes = [16, 32], strides = [1, 1]} : vector<16x96xf32> to vector<16x32xf32>
    %485 = arith.addf %483, %484 : vector<16x32xf32>
    %cst_134 = arith.constant 5.000000e-01 : f32
    %486 = vector.broadcast %cst_134 : f32 to vector<16x32xf32>
    %487 = arith.mulf %486, %485 : vector<16x32xf32>
    %488 = math.tanh %487 : vector<16x32xf32>
    %cst_135 = arith.constant 1.000000e+00 : f32
    %489 = vector.broadcast %cst_135 : f32 to vector<16x32xf32>
    %490 = arith.addf %488, %489 : vector<16x32xf32>
    %cst_136 = arith.constant 5.000000e-01 : f32
    %491 = vector.broadcast %cst_136 : f32 to vector<16x32xf32>
    %492 = arith.mulf %491, %490 : vector<16x32xf32>
    %493 = vector.extract_strided_slice %482 {offsets = [0, 32], sizes = [16, 32], strides = [1, 1]} : vector<16x96xf32> to vector<16x32xf32>
    %494 = vector.extract_strided_slice %481 {offsets = [0, 32], sizes = [16, 32], strides = [1, 1]} : vector<16x96xf32> to vector<16x32xf32>
    %495 = arith.addf %493, %494 : vector<16x32xf32>
    %cst_137 = arith.constant 5.000000e-01 : f32
    %496 = vector.broadcast %cst_137 : f32 to vector<16x32xf32>
    %497 = arith.mulf %496, %495 : vector<16x32xf32>
    %498 = math.tanh %497 : vector<16x32xf32>
    %cst_138 = arith.constant 1.000000e+00 : f32
    %499 = vector.broadcast %cst_138 : f32 to vector<16x32xf32>
    %500 = arith.addf %498, %499 : vector<16x32xf32>
    %cst_139 = arith.constant 5.000000e-01 : f32
    %501 = vector.broadcast %cst_139 : f32 to vector<16x32xf32>
    %502 = arith.mulf %501, %500 : vector<16x32xf32>
    %503 = vector.extract_strided_slice %482 {offsets = [0, 64], sizes = [16, 32], strides = [1, 1]} : vector<16x96xf32> to vector<16x32xf32>
    %504 = vector.extract_strided_slice %481 {offsets = [0, 64], sizes = [16, 32], strides = [1, 1]} : vector<16x96xf32> to vector<16x32xf32>
    %505 = vector.broadcast %29 : vector<1x32xf32> to vector<16x32xf32>
    %506 = arith.addf %504, %505 : vector<16x32xf32>
    %507 = arith.mulf %492, %506 : vector<16x32xf32>
    %508 = arith.addf %503, %507 : vector<16x32xf32>
    %509 = math.tanh %508 : vector<16x32xf32>
    %cst_140 = arith.constant 1.000000e+00 : f32
    %510 = vector.broadcast %cst_140 : f32 to vector<16x32xf32>
    %511 = arith.subf %510, %502 : vector<16x32xf32>
    %512 = arith.mulf %511, %509 : vector<16x32xf32>
    %513 = arith.mulf %502, %430 : vector<16x32xf32>
    %514 = arith.addf %512, %513 : vector<16x32xf32>
    %515 = vector.broadcast %c5_i32 : i32 to vector<16x1xi32>
    %516 = arith.cmpi slt, %515, %20 : vector<16x1xi32>
    %517 = vector.shape_cast %516 : vector<16x1xi1> to vector<16x1xi1>
    %518 = vector.broadcast %517 : vector<16x1xi1> to vector<16x32xi1>
    %519 = arith.select %518, %514, %430 : vector<16x32xi1>, vector<16x32xf32>
    %c7_i32_141 = arith.constant 7 : i32
    %520 = arith.subi %c7_i32_141, %c5_i32 : i32
    %521 = arith.index_cast %520 : i32 to index
    %c0_142 = arith.constant 0 : index
    %c0_143 = arith.constant 0 : index
    %522 = vector.load %arg19[%521, %c0_142, %c0_143] : memref<8x16x192xbf16, #tpu.memory_space<vmem>>, vector<1x16x192xbf16>
    %523 = vector.shape_cast %522 : vector<1x16x192xbf16> to vector<16x192xbf16>
    %524 = arith.extf %523 : vector<16x192xbf16> to vector<16x192xf32>
    %525 = arith.truncf %475 : vector<16x32xf32> to vector<16x32xbf16>
    %cst_144 = arith.constant dense<0.000000e+00> : vector<16x96xf32>
    %526 = tpu.matmul %525, %28, %cst_144 {dimension_numbers = #tpu.dot_dimension_numbers<[1], [0], [0], [1], [0, 0, 1, 1], [], []>} : vector<16x32xbf16>, vector<32x96xbf16>, vector<16x96xf32> -> vector<16x96xf32>
    %527 = vector.extract_strided_slice %524 {offsets = [0, 96], sizes = [16, 96], strides = [1, 1]} : vector<16x192xf32> to vector<16x96xf32>
    %528 = vector.extract_strided_slice %527 {offsets = [0, 0], sizes = [16, 32], strides = [1, 1]} : vector<16x96xf32> to vector<16x32xf32>
    %529 = vector.extract_strided_slice %526 {offsets = [0, 0], sizes = [16, 32], strides = [1, 1]} : vector<16x96xf32> to vector<16x32xf32>
    %530 = arith.addf %528, %529 : vector<16x32xf32>
    %cst_145 = arith.constant 5.000000e-01 : f32
    %531 = vector.broadcast %cst_145 : f32 to vector<16x32xf32>
    %532 = arith.mulf %531, %530 : vector<16x32xf32>
    %533 = math.tanh %532 : vector<16x32xf32>
    %cst_146 = arith.constant 1.000000e+00 : f32
    %534 = vector.broadcast %cst_146 : f32 to vector<16x32xf32>
    %535 = arith.addf %533, %534 : vector<16x32xf32>
    %cst_147 = arith.constant 5.000000e-01 : f32
    %536 = vector.broadcast %cst_147 : f32 to vector<16x32xf32>
    %537 = arith.mulf %536, %535 : vector<16x32xf32>
    %538 = vector.extract_strided_slice %527 {offsets = [0, 32], sizes = [16, 32], strides = [1, 1]} : vector<16x96xf32> to vector<16x32xf32>
    %539 = vector.extract_strided_slice %526 {offsets = [0, 32], sizes = [16, 32], strides = [1, 1]} : vector<16x96xf32> to vector<16x32xf32>
    %540 = arith.addf %538, %539 : vector<16x32xf32>
    %cst_148 = arith.constant 5.000000e-01 : f32
    %541 = vector.broadcast %cst_148 : f32 to vector<16x32xf32>
    %542 = arith.mulf %541, %540 : vector<16x32xf32>
    %543 = math.tanh %542 : vector<16x32xf32>
    %cst_149 = arith.constant 1.000000e+00 : f32
    %544 = vector.broadcast %cst_149 : f32 to vector<16x32xf32>
    %545 = arith.addf %543, %544 : vector<16x32xf32>
    %cst_150 = arith.constant 5.000000e-01 : f32
    %546 = vector.broadcast %cst_150 : f32 to vector<16x32xf32>
    %547 = arith.mulf %546, %545 : vector<16x32xf32>
    %548 = vector.extract_strided_slice %527 {offsets = [0, 64], sizes = [16, 32], strides = [1, 1]} : vector<16x96xf32> to vector<16x32xf32>
    %549 = vector.extract_strided_slice %526 {offsets = [0, 64], sizes = [16, 32], strides = [1, 1]} : vector<16x96xf32> to vector<16x32xf32>
    %550 = vector.broadcast %30 : vector<1x32xf32> to vector<16x32xf32>
    %551 = arith.addf %549, %550 : vector<16x32xf32>
    %552 = arith.mulf %537, %551 : vector<16x32xf32>
    %553 = arith.addf %548, %552 : vector<16x32xf32>
    %554 = math.tanh %553 : vector<16x32xf32>
    %cst_151 = arith.constant 1.000000e+00 : f32
    %555 = vector.broadcast %cst_151 : f32 to vector<16x32xf32>
    %556 = arith.subf %555, %547 : vector<16x32xf32>
    %557 = arith.mulf %556, %554 : vector<16x32xf32>
    %558 = arith.mulf %547, %475 : vector<16x32xf32>
    %559 = arith.addf %557, %558 : vector<16x32xf32>
    %560 = vector.broadcast %520 : i32 to vector<16x1xi32>
    %561 = arith.cmpi slt, %560, %20 : vector<16x1xi32>
    %562 = vector.shape_cast %561 : vector<16x1xi1> to vector<16x1xi1>
    %563 = vector.broadcast %562 : vector<16x1xi1> to vector<16x32xi1>
    %564 = arith.select %563, %559, %475 : vector<16x32xi1>, vector<16x32xf32>
    %c6_i32 = arith.constant 6 : i32
    %565 = arith.index_cast %c6_i32 : i32 to index
    %c0_152 = arith.constant 0 : index
    %c0_153 = arith.constant 0 : index
    %566 = vector.load %arg19[%565, %c0_152, %c0_153] : memref<8x16x192xbf16, #tpu.memory_space<vmem>>, vector<1x16x192xbf16>
    %567 = vector.shape_cast %566 : vector<1x16x192xbf16> to vector<16x192xbf16>
    %568 = arith.extf %567 : vector<16x192xbf16> to vector<16x192xf32>
    %569 = arith.truncf %519 : vector<16x32xf32> to vector<16x32xbf16>
    %cst_154 = arith.constant dense<0.000000e+00> : vector<16x96xf32>
    %570 = tpu.matmul %569, %27, %cst_154 {dimension_numbers = #tpu.dot_dimension_numbers<[1], [0], [0], [1], [0, 0, 1, 1], [], []>} : vector<16x32xbf16>, vector<32x96xbf16>, vector<16x96xf32> -> vector<16x96xf32>
    %571 = vector.extract_strided_slice %568 {offsets = [0, 0], sizes = [16, 96], strides = [1, 1]} : vector<16x192xf32> to vector<16x96xf32>
    %572 = vector.extract_strided_slice %571 {offsets = [0, 0], sizes = [16, 32], strides = [1, 1]} : vector<16x96xf32> to vector<16x32xf32>
    %573 = vector.extract_strided_slice %570 {offsets = [0, 0], sizes = [16, 32], strides = [1, 1]} : vector<16x96xf32> to vector<16x32xf32>
    %574 = arith.addf %572, %573 : vector<16x32xf32>
    %cst_155 = arith.constant 5.000000e-01 : f32
    %575 = vector.broadcast %cst_155 : f32 to vector<16x32xf32>
    %576 = arith.mulf %575, %574 : vector<16x32xf32>
    %577 = math.tanh %576 : vector<16x32xf32>
    %cst_156 = arith.constant 1.000000e+00 : f32
    %578 = vector.broadcast %cst_156 : f32 to vector<16x32xf32>
    %579 = arith.addf %577, %578 : vector<16x32xf32>
    %cst_157 = arith.constant 5.000000e-01 : f32
    %580 = vector.broadcast %cst_157 : f32 to vector<16x32xf32>
    %581 = arith.mulf %580, %579 : vector<16x32xf32>
    %582 = vector.extract_strided_slice %571 {offsets = [0, 32], sizes = [16, 32], strides = [1, 1]} : vector<16x96xf32> to vector<16x32xf32>
    %583 = vector.extract_strided_slice %570 {offsets = [0, 32], sizes = [16, 32], strides = [1, 1]} : vector<16x96xf32> to vector<16x32xf32>
    %584 = arith.addf %582, %583 : vector<16x32xf32>
    %cst_158 = arith.constant 5.000000e-01 : f32
    %585 = vector.broadcast %cst_158 : f32 to vector<16x32xf32>
    %586 = arith.mulf %585, %584 : vector<16x32xf32>
    %587 = math.tanh %586 : vector<16x32xf32>
    %cst_159 = arith.constant 1.000000e+00 : f32
    %588 = vector.broadcast %cst_159 : f32 to vector<16x32xf32>
    %589 = arith.addf %587, %588 : vector<16x32xf32>
    %cst_160 = arith.constant 5.000000e-01 : f32
    %590 = vector.broadcast %cst_160 : f32 to vector<16x32xf32>
    %591 = arith.mulf %590, %589 : vector<16x32xf32>
    %592 = vector.extract_strided_slice %571 {offsets = [0, 64], sizes = [16, 32], strides = [1, 1]} : vector<16x96xf32> to vector<16x32xf32>
    %593 = vector.extract_strided_slice %570 {offsets = [0, 64], sizes = [16, 32], strides = [1, 1]} : vector<16x96xf32> to vector<16x32xf32>
    %594 = vector.broadcast %29 : vector<1x32xf32> to vector<16x32xf32>
    %595 = arith.addf %593, %594 : vector<16x32xf32>
    %596 = arith.mulf %581, %595 : vector<16x32xf32>
    %597 = arith.addf %592, %596 : vector<16x32xf32>
    %598 = math.tanh %597 : vector<16x32xf32>
    %cst_161 = arith.constant 1.000000e+00 : f32
    %599 = vector.broadcast %cst_161 : f32 to vector<16x32xf32>
    %600 = arith.subf %599, %591 : vector<16x32xf32>
    %601 = arith.mulf %600, %598 : vector<16x32xf32>
    %602 = arith.mulf %591, %519 : vector<16x32xf32>
    %603 = arith.addf %601, %602 : vector<16x32xf32>
    %604 = vector.broadcast %c6_i32 : i32 to vector<16x1xi32>
    %605 = arith.cmpi slt, %604, %20 : vector<16x1xi32>
    %606 = vector.shape_cast %605 : vector<16x1xi1> to vector<16x1xi1>
    %607 = vector.broadcast %606 : vector<16x1xi1> to vector<16x32xi1>
    %608 = arith.select %607, %603, %519 : vector<16x32xi1>, vector<16x32xf32>
    %c7_i32_162 = arith.constant 7 : i32
    %609 = arith.subi %c7_i32_162, %c6_i32 : i32
    %610 = arith.index_cast %609 : i32 to index
    %c0_163 = arith.constant 0 : index
    %c0_164 = arith.constant 0 : index
    %611 = vector.load %arg19[%610, %c0_163, %c0_164] : memref<8x16x192xbf16, #tpu.memory_space<vmem>>, vector<1x16x192xbf16>
    %612 = vector.shape_cast %611 : vector<1x16x192xbf16> to vector<16x192xbf16>
    %613 = arith.extf %612 : vector<16x192xbf16> to vector<16x192xf32>
    %614 = arith.truncf %564 : vector<16x32xf32> to vector<16x32xbf16>
    %cst_165 = arith.constant dense<0.000000e+00> : vector<16x96xf32>
    %615 = tpu.matmul %614, %28, %cst_165 {dimension_numbers = #tpu.dot_dimension_numbers<[1], [0], [0], [1], [0, 0, 1, 1], [], []>} : vector<16x32xbf16>, vector<32x96xbf16>, vector<16x96xf32> -> vector<16x96xf32>
    %616 = vector.extract_strided_slice %613 {offsets = [0, 96], sizes = [16, 96], strides = [1, 1]} : vector<16x192xf32> to vector<16x96xf32>
    %617 = vector.extract_strided_slice %616 {offsets = [0, 0], sizes = [16, 32], strides = [1, 1]} : vector<16x96xf32> to vector<16x32xf32>
    %618 = vector.extract_strided_slice %615 {offsets = [0, 0], sizes = [16, 32], strides = [1, 1]} : vector<16x96xf32> to vector<16x32xf32>
    %619 = arith.addf %617, %618 : vector<16x32xf32>
    %cst_166 = arith.constant 5.000000e-01 : f32
    %620 = vector.broadcast %cst_166 : f32 to vector<16x32xf32>
    %621 = arith.mulf %620, %619 : vector<16x32xf32>
    %622 = math.tanh %621 : vector<16x32xf32>
    %cst_167 = arith.constant 1.000000e+00 : f32
    %623 = vector.broadcast %cst_167 : f32 to vector<16x32xf32>
    %624 = arith.addf %622, %623 : vector<16x32xf32>
    %cst_168 = arith.constant 5.000000e-01 : f32
    %625 = vector.broadcast %cst_168 : f32 to vector<16x32xf32>
    %626 = arith.mulf %625, %624 : vector<16x32xf32>
    %627 = vector.extract_strided_slice %616 {offsets = [0, 32], sizes = [16, 32], strides = [1, 1]} : vector<16x96xf32> to vector<16x32xf32>
    %628 = vector.extract_strided_slice %615 {offsets = [0, 32], sizes = [16, 32], strides = [1, 1]} : vector<16x96xf32> to vector<16x32xf32>
    %629 = arith.addf %627, %628 : vector<16x32xf32>
    %cst_169 = arith.constant 5.000000e-01 : f32
    %630 = vector.broadcast %cst_169 : f32 to vector<16x32xf32>
    %631 = arith.mulf %630, %629 : vector<16x32xf32>
    %632 = math.tanh %631 : vector<16x32xf32>
    %cst_170 = arith.constant 1.000000e+00 : f32
    %633 = vector.broadcast %cst_170 : f32 to vector<16x32xf32>
    %634 = arith.addf %632, %633 : vector<16x32xf32>
    %cst_171 = arith.constant 5.000000e-01 : f32
    %635 = vector.broadcast %cst_171 : f32 to vector<16x32xf32>
    %636 = arith.mulf %635, %634 : vector<16x32xf32>
    %637 = vector.extract_strided_slice %616 {offsets = [0, 64], sizes = [16, 32], strides = [1, 1]} : vector<16x96xf32> to vector<16x32xf32>
    %638 = vector.extract_strided_slice %615 {offsets = [0, 64], sizes = [16, 32], strides = [1, 1]} : vector<16x96xf32> to vector<16x32xf32>
    %639 = vector.broadcast %30 : vector<1x32xf32> to vector<16x32xf32>
    %640 = arith.addf %638, %639 : vector<16x32xf32>
    %641 = arith.mulf %626, %640 : vector<16x32xf32>
    %642 = arith.addf %637, %641 : vector<16x32xf32>
    %643 = math.tanh %642 : vector<16x32xf32>
    %cst_172 = arith.constant 1.000000e+00 : f32
    %644 = vector.broadcast %cst_172 : f32 to vector<16x32xf32>
    %645 = arith.subf %644, %636 : vector<16x32xf32>
    %646 = arith.mulf %645, %643 : vector<16x32xf32>
    %647 = arith.mulf %636, %564 : vector<16x32xf32>
    %648 = arith.addf %646, %647 : vector<16x32xf32>
    %649 = vector.broadcast %609 : i32 to vector<16x1xi32>
    %650 = arith.cmpi slt, %649, %20 : vector<16x1xi32>
    %651 = vector.shape_cast %650 : vector<16x1xi1> to vector<16x1xi1>
    %652 = vector.broadcast %651 : vector<16x1xi1> to vector<16x32xi1>
    %653 = arith.select %652, %648, %564 : vector<16x32xi1>, vector<16x32xf32>
    %c7_i32_173 = arith.constant 7 : i32
    %654 = arith.index_cast %c7_i32_173 : i32 to index
    %c0_174 = arith.constant 0 : index
    %c0_175 = arith.constant 0 : index
    %655 = vector.load %arg19[%654, %c0_174, %c0_175] : memref<8x16x192xbf16, #tpu.memory_space<vmem>>, vector<1x16x192xbf16>
    %656 = vector.shape_cast %655 : vector<1x16x192xbf16> to vector<16x192xbf16>
    %657 = arith.extf %656 : vector<16x192xbf16> to vector<16x192xf32>
    %658 = arith.truncf %608 : vector<16x32xf32> to vector<16x32xbf16>
    %cst_176 = arith.constant dense<0.000000e+00> : vector<16x96xf32>
    %659 = tpu.matmul %658, %27, %cst_176 {dimension_numbers = #tpu.dot_dimension_numbers<[1], [0], [0], [1], [0, 0, 1, 1], [], []>} : vector<16x32xbf16>, vector<32x96xbf16>, vector<16x96xf32> -> vector<16x96xf32>
    %660 = vector.extract_strided_slice %657 {offsets = [0, 0], sizes = [16, 96], strides = [1, 1]} : vector<16x192xf32> to vector<16x96xf32>
    %661 = vector.extract_strided_slice %660 {offsets = [0, 0], sizes = [16, 32], strides = [1, 1]} : vector<16x96xf32> to vector<16x32xf32>
    %662 = vector.extract_strided_slice %659 {offsets = [0, 0], sizes = [16, 32], strides = [1, 1]} : vector<16x96xf32> to vector<16x32xf32>
    %663 = arith.addf %661, %662 : vector<16x32xf32>
    %cst_177 = arith.constant 5.000000e-01 : f32
    %664 = vector.broadcast %cst_177 : f32 to vector<16x32xf32>
    %665 = arith.mulf %664, %663 : vector<16x32xf32>
    %666 = math.tanh %665 : vector<16x32xf32>
    %cst_178 = arith.constant 1.000000e+00 : f32
    %667 = vector.broadcast %cst_178 : f32 to vector<16x32xf32>
    %668 = arith.addf %666, %667 : vector<16x32xf32>
    %cst_179 = arith.constant 5.000000e-01 : f32
    %669 = vector.broadcast %cst_179 : f32 to vector<16x32xf32>
    %670 = arith.mulf %669, %668 : vector<16x32xf32>
    %671 = vector.extract_strided_slice %660 {offsets = [0, 32], sizes = [16, 32], strides = [1, 1]} : vector<16x96xf32> to vector<16x32xf32>
    %672 = vector.extract_strided_slice %659 {offsets = [0, 32], sizes = [16, 32], strides = [1, 1]} : vector<16x96xf32> to vector<16x32xf32>
    %673 = arith.addf %671, %672 : vector<16x32xf32>
    %cst_180 = arith.constant 5.000000e-01 : f32
    %674 = vector.broadcast %cst_180 : f32 to vector<16x32xf32>
    %675 = arith.mulf %674, %673 : vector<16x32xf32>
    %676 = math.tanh %675 : vector<16x32xf32>
    %cst_181 = arith.constant 1.000000e+00 : f32
    %677 = vector.broadcast %cst_181 : f32 to vector<16x32xf32>
    %678 = arith.addf %676, %677 : vector<16x32xf32>
    %cst_182 = arith.constant 5.000000e-01 : f32
    %679 = vector.broadcast %cst_182 : f32 to vector<16x32xf32>
    %680 = arith.mulf %679, %678 : vector<16x32xf32>
    %681 = vector.extract_strided_slice %660 {offsets = [0, 64], sizes = [16, 32], strides = [1, 1]} : vector<16x96xf32> to vector<16x32xf32>
    %682 = vector.extract_strided_slice %659 {offsets = [0, 64], sizes = [16, 32], strides = [1, 1]} : vector<16x96xf32> to vector<16x32xf32>
    %683 = vector.broadcast %29 : vector<1x32xf32> to vector<16x32xf32>
    %684 = arith.addf %682, %683 : vector<16x32xf32>
    %685 = arith.mulf %670, %684 : vector<16x32xf32>
    %686 = arith.addf %681, %685 : vector<16x32xf32>
    %687 = math.tanh %686 : vector<16x32xf32>
    %cst_183 = arith.constant 1.000000e+00 : f32
    %688 = vector.broadcast %cst_183 : f32 to vector<16x32xf32>
    %689 = arith.subf %688, %680 : vector<16x32xf32>
    %690 = arith.mulf %689, %687 : vector<16x32xf32>
    %691 = arith.mulf %680, %608 : vector<16x32xf32>
    %692 = arith.addf %690, %691 : vector<16x32xf32>
    %693 = vector.broadcast %c7_i32_173 : i32 to vector<16x1xi32>
    %694 = arith.cmpi slt, %693, %20 : vector<16x1xi32>
    %695 = vector.shape_cast %694 : vector<16x1xi1> to vector<16x1xi1>
    %696 = vector.broadcast %695 : vector<16x1xi1> to vector<16x32xi1>
    %697 = arith.select %696, %692, %608 : vector<16x32xi1>, vector<16x32xf32>
    %c7_i32_184 = arith.constant 7 : i32
    %698 = arith.subi %c7_i32_184, %c7_i32_173 : i32
    %699 = arith.index_cast %698 : i32 to index
    %c0_185 = arith.constant 0 : index
    %c0_186 = arith.constant 0 : index
    %700 = vector.load %arg19[%699, %c0_185, %c0_186] : memref<8x16x192xbf16, #tpu.memory_space<vmem>>, vector<1x16x192xbf16>
    %701 = vector.shape_cast %700 : vector<1x16x192xbf16> to vector<16x192xbf16>
    %702 = arith.extf %701 : vector<16x192xbf16> to vector<16x192xf32>
    %703 = arith.truncf %653 : vector<16x32xf32> to vector<16x32xbf16>
    %cst_187 = arith.constant dense<0.000000e+00> : vector<16x96xf32>
    %704 = tpu.matmul %703, %28, %cst_187 {dimension_numbers = #tpu.dot_dimension_numbers<[1], [0], [0], [1], [0, 0, 1, 1], [], []>} : vector<16x32xbf16>, vector<32x96xbf16>, vector<16x96xf32> -> vector<16x96xf32>
    %705 = vector.extract_strided_slice %702 {offsets = [0, 96], sizes = [16, 96], strides = [1, 1]} : vector<16x192xf32> to vector<16x96xf32>
    %706 = vector.extract_strided_slice %705 {offsets = [0, 0], sizes = [16, 32], strides = [1, 1]} : vector<16x96xf32> to vector<16x32xf32>
    %707 = vector.extract_strided_slice %704 {offsets = [0, 0], sizes = [16, 32], strides = [1, 1]} : vector<16x96xf32> to vector<16x32xf32>
    %708 = arith.addf %706, %707 : vector<16x32xf32>
    %cst_188 = arith.constant 5.000000e-01 : f32
    %709 = vector.broadcast %cst_188 : f32 to vector<16x32xf32>
    %710 = arith.mulf %709, %708 : vector<16x32xf32>
    %711 = math.tanh %710 : vector<16x32xf32>
    %cst_189 = arith.constant 1.000000e+00 : f32
    %712 = vector.broadcast %cst_189 : f32 to vector<16x32xf32>
    %713 = arith.addf %711, %712 : vector<16x32xf32>
    %cst_190 = arith.constant 5.000000e-01 : f32
    %714 = vector.broadcast %cst_190 : f32 to vector<16x32xf32>
    %715 = arith.mulf %714, %713 : vector<16x32xf32>
    %716 = vector.extract_strided_slice %705 {offsets = [0, 32], sizes = [16, 32], strides = [1, 1]} : vector<16x96xf32> to vector<16x32xf32>
    %717 = vector.extract_strided_slice %704 {offsets = [0, 32], sizes = [16, 32], strides = [1, 1]} : vector<16x96xf32> to vector<16x32xf32>
    %718 = arith.addf %716, %717 : vector<16x32xf32>
    %cst_191 = arith.constant 5.000000e-01 : f32
    %719 = vector.broadcast %cst_191 : f32 to vector<16x32xf32>
    %720 = arith.mulf %719, %718 : vector<16x32xf32>
    %721 = math.tanh %720 : vector<16x32xf32>
    %cst_192 = arith.constant 1.000000e+00 : f32
    %722 = vector.broadcast %cst_192 : f32 to vector<16x32xf32>
    %723 = arith.addf %721, %722 : vector<16x32xf32>
    %cst_193 = arith.constant 5.000000e-01 : f32
    %724 = vector.broadcast %cst_193 : f32 to vector<16x32xf32>
    %725 = arith.mulf %724, %723 : vector<16x32xf32>
    %726 = vector.extract_strided_slice %705 {offsets = [0, 64], sizes = [16, 32], strides = [1, 1]} : vector<16x96xf32> to vector<16x32xf32>
    %727 = vector.extract_strided_slice %704 {offsets = [0, 64], sizes = [16, 32], strides = [1, 1]} : vector<16x96xf32> to vector<16x32xf32>
    %728 = vector.broadcast %30 : vector<1x32xf32> to vector<16x32xf32>
    %729 = arith.addf %727, %728 : vector<16x32xf32>
    %730 = arith.mulf %715, %729 : vector<16x32xf32>
    %731 = arith.addf %726, %730 : vector<16x32xf32>
    %732 = math.tanh %731 : vector<16x32xf32>
    %cst_194 = arith.constant 1.000000e+00 : f32
    %733 = vector.broadcast %cst_194 : f32 to vector<16x32xf32>
    %734 = arith.subf %733, %725 : vector<16x32xf32>
    %735 = arith.mulf %734, %732 : vector<16x32xf32>
    %736 = arith.mulf %725, %653 : vector<16x32xf32>
    %737 = arith.addf %735, %736 : vector<16x32xf32>
    %738 = vector.broadcast %698 : i32 to vector<16x1xi32>
    %739 = arith.cmpi slt, %738, %20 : vector<16x1xi32>
    %740 = vector.shape_cast %739 : vector<16x1xi1> to vector<16x1xi1>
    %741 = vector.broadcast %740 : vector<16x1xi1> to vector<16x32xi1>
    %742 = arith.select %741, %737, %653 : vector<16x32xi1>, vector<16x32xf32>
    %c8_i32_195 = arith.constant 8 : i32
    %743 = tpu.concatenate %697, %742 in 1 : vector<16x32xf32>, vector<16x32xf32> -> vector<16x64xf32>
    %744 = arith.truncf %743 : vector<16x64xf32> to vector<16x64xbf16>
    %c0_196 = arith.constant 0 : index
    %c0_197 = arith.constant 0 : index
    %745 = vector.load %arg12[%c0_196, %c0_197] : memref<64x32xbf16, #tpu.memory_space<vmem>>, vector<64x32xbf16>
    %cst_198 = arith.constant dense<0.000000e+00> : vector<16x32xf32>
    %746 = tpu.matmul %744, %745, %cst_198 {dimension_numbers = #tpu.dot_dimension_numbers<[1], [0], [0], [1], [0, 0, 1, 1], [], []>} : vector<16x64xbf16>, vector<64x32xbf16>, vector<16x32xf32> -> vector<16x32xf32>
    %c0_199 = arith.constant 0 : index
    %c0_200 = arith.constant 0 : index
    %747 = vector.load %arg13[%c0_199, %c0_200] : memref<1x32xf32, #tpu.memory_space<vmem>>, vector<1x32xf32>
    %748 = vector.broadcast %747 : vector<1x32xf32> to vector<16x32xf32>
    %749 = arith.addf %746, %748 : vector<16x32xf32>
    %cst_201 = arith.constant dense<0.000000e+00> : vector<16xf32>
    %750 = vector.multi_reduction <add>, %749, %cst_201 [1] : vector<16x32xf32> to vector<16xf32>
    %751 = vector.shape_cast %750 : vector<16xf32> to vector<16x1xf32>
    %cst_202 = arith.constant 3.200000e+01 : f32
    %752 = vector.broadcast %cst_202 : f32 to vector<16x1xf32>
    %753 = arith.divf %751, %752 : vector<16x1xf32>
    %754 = vector.broadcast %753 : vector<16x1xf32> to vector<16x32xf32>
    %755 = arith.subf %749, %754 : vector<16x32xf32>
    %756 = arith.mulf %755, %755 : vector<16x32xf32>
    %cst_203 = arith.constant dense<0.000000e+00> : vector<16xf32>
    %757 = vector.multi_reduction <add>, %756, %cst_203 [1] : vector<16x32xf32> to vector<16xf32>
    %758 = vector.shape_cast %757 : vector<16xf32> to vector<16x1xf32>
    %cst_204 = arith.constant 3.200000e+01 : f32
    %759 = vector.broadcast %cst_204 : f32 to vector<16x1xf32>
    %760 = arith.divf %758, %759 : vector<16x1xf32>
    %761 = vector.broadcast %753 : vector<16x1xf32> to vector<16x32xf32>
    %762 = arith.subf %749, %761 : vector<16x32xf32>
    %cst_205 = arith.constant 9.99999974E-6 : f32
    %763 = vector.broadcast %cst_205 : f32 to vector<16x1xf32>
    %764 = arith.addf %760, %763 : vector<16x1xf32>
    %765 = math.rsqrt %764 : vector<16x1xf32>
    %766 = vector.broadcast %765 : vector<16x1xf32> to vector<16x32xf32>
    %767 = arith.mulf %762, %766 : vector<16x32xf32>
    %c0_206 = arith.constant 0 : index
    %c0_207 = arith.constant 0 : index
    %768 = vector.load %arg14[%c0_206, %c0_207] : memref<1x32xf32, #tpu.memory_space<vmem>>, vector<1x32xf32>
    %769 = vector.broadcast %768 : vector<1x32xf32> to vector<16x32xf32>
    %770 = arith.mulf %767, %769 : vector<16x32xf32>
    %c0_208 = arith.constant 0 : index
    %c0_209 = arith.constant 0 : index
    %771 = vector.load %arg15[%c0_208, %c0_209] : memref<1x32xf32, #tpu.memory_space<vmem>>, vector<1x32xf32>
    %772 = vector.broadcast %771 : vector<1x32xf32> to vector<16x32xf32>
    %773 = arith.addf %770, %772 : vector<16x32xf32>
    %cst_210 = arith.constant 0.000000e+00 : f32
    %774 = vector.broadcast %cst_210 : f32 to vector<16x32xf32>
    %775 = arith.cmpf ogt, %773, %774 : vector<16x32xf32>
    %cst_211 = arith.constant 2.000000e-01 : f32
    %776 = vector.broadcast %cst_211 : f32 to vector<16x32xf32>
    %777 = arith.mulf %776, %773 : vector<16x32xf32>
    %778 = arith.select %775, %773, %777 : vector<16x32xi1>, vector<16x32xf32>
    %779 = arith.truncf %778 : vector<16x32xf32> to vector<16x32xbf16>
    %c0_212 = arith.constant 0 : index
    %c0_213 = arith.constant 0 : index
    %780 = vector.load %arg16[%c0_212, %c0_213] : memref<32x8xbf16, #tpu.memory_space<vmem>>, vector<32x8xbf16>
    %cst_214 = arith.constant dense<0.000000e+00> : vector<16x8xf32>
    %781 = tpu.matmul %779, %780, %cst_214 {dimension_numbers = #tpu.dot_dimension_numbers<[1], [0], [0], [1], [0, 0, 1, 1], [], []>} : vector<16x32xbf16>, vector<32x8xbf16>, vector<16x8xf32> -> vector<16x8xf32>
    %c0_215 = arith.constant 0 : index
    %c0_216 = arith.constant 0 : index
    %782 = vector.load %arg17[%c0_215, %c0_216] : memref<1x8xf32, #tpu.memory_space<vmem>>, vector<1x8xf32>
    %783 = vector.broadcast %782 : vector<1x8xf32> to vector<16x8xf32>
    %784 = arith.addf %781, %783 : vector<16x8xf32>
    %c0_217 = arith.constant 0 : index
    %c0_218 = arith.constant 0 : index
    %785 = vector.load %arg18[%c0_217, %c0_218] : memref<16x8xf32, #tpu.memory_space<vmem>>, vector<16x8xf32>
    tpu.vector_store %arg18[%c0_217, %c0_218], %784 {strides = array<i32>} : memref<16x8xf32, #tpu.memory_space<vmem>>, vector<16x8xf32>,
    return
  }
  func.func @transform_0(%arg0: i32) -> (i32, i32) {
    %c0_i32 = arith.constant 0 : i32
    %c0_i32_0 = arith.constant 0 : i32
    return %arg0, %c0_i32 : i32, i32
  }
  func.func @transform_1(%arg0: i32) -> (i32, i32, i32) {
    %c0_i32 = arith.constant 0 : i32
    %c0_i32_0 = arith.constant 0 : i32
    %c0_i32_1 = arith.constant 0 : i32
    return %c0_i32, %arg0, %c0_i32_0 : i32, i32, i32
  }
  func.func @transform_2(%arg0: i32) -> (i32, i32) {
    %c0_i32 = arith.constant 0 : i32
    %c0_i32_0 = arith.constant 0 : i32
    %c0_i32_1 = arith.constant 0 : i32
    return %c0_i32, %c0_i32_0 : i32, i32
  }
  func.func @transform_3(%arg0: i32) -> (i32, i32) {
    %c0_i32 = arith.constant 0 : i32
    %c0_i32_0 = arith.constant 0 : i32
    %c0_i32_1 = arith.constant 0 : i32
    return %c0_i32, %c0_i32_0 : i32, i32
  }
  func.func @transform_4(%arg0: i32) -> (i32, i32) {
    %c0_i32 = arith.constant 0 : i32
    %c0_i32_0 = arith.constant 0 : i32
    %c0_i32_1 = arith.constant 0 : i32
    return %c0_i32, %c0_i32_0 : i32, i32
  }
  func.func @transform_5(%arg0: i32) -> (i32, i32) {
    %c0_i32 = arith.constant 0 : i32
    %c0_i32_0 = arith.constant 0 : i32
    %c0_i32_1 = arith.constant 0 : i32
    return %c0_i32, %c0_i32_0 : i32, i32
  }
  func.func @transform_6(%arg0: i32) -> (i32, i32) {
    %c0_i32 = arith.constant 0 : i32
    %c0_i32_0 = arith.constant 0 : i32
    %c0_i32_1 = arith.constant 0 : i32
    return %c0_i32, %c0_i32_0 : i32, i32
  }
  func.func @transform_7(%arg0: i32) -> (i32, i32) {
    %c0_i32 = arith.constant 0 : i32
    %c0_i32_0 = arith.constant 0 : i32
    %c0_i32_1 = arith.constant 0 : i32
    return %c0_i32, %c0_i32_0 : i32, i32
  }
  func.func @transform_8(%arg0: i32) -> (i32, i32) {
    %c0_i32 = arith.constant 0 : i32
    %c0_i32_0 = arith.constant 0 : i32
    %c0_i32_1 = arith.constant 0 : i32
    return %c0_i32, %c0_i32_0 : i32, i32
  }
  func.func @transform_9(%arg0: i32) -> (i32, i32) {
    %c0_i32 = arith.constant 0 : i32
    %c0_i32_0 = arith.constant 0 : i32
    %c0_i32_1 = arith.constant 0 : i32
    return %c0_i32, %c0_i32_0 : i32, i32
  }
  func.func @transform_10(%arg0: i32) -> (i32, i32) {
    %c0_i32 = arith.constant 0 : i32
    %c0_i32_0 = arith.constant 0 : i32
    %c0_i32_1 = arith.constant 0 : i32
    return %c0_i32, %c0_i32_0 : i32, i32
  }
  func.func @transform_11(%arg0: i32) -> (i32, i32) {
    %c0_i32 = arith.constant 0 : i32
    %c0_i32_0 = arith.constant 0 : i32
    %c0_i32_1 = arith.constant 0 : i32
    return %c0_i32, %c0_i32_0 : i32, i32
  }
  func.func @transform_12(%arg0: i32) -> (i32, i32) {
    %c0_i32 = arith.constant 0 : i32
    %c0_i32_0 = arith.constant 0 : i32
    %c0_i32_1 = arith.constant 0 : i32
    return %c0_i32, %c0_i32_0 : i32, i32
  }
  func.func @transform_13(%arg0: i32) -> (i32, i32) {
    %c0_i32 = arith.constant 0 : i32
    %c0_i32_0 = arith.constant 0 : i32
    %c0_i32_1 = arith.constant 0 : i32
    return %c0_i32, %c0_i32_0 : i32, i32
  }
  func.func @transform_14(%arg0: i32) -> (i32, i32) {
    %c0_i32 = arith.constant 0 : i32
    %c0_i32_0 = arith.constant 0 : i32
    %c0_i32_1 = arith.constant 0 : i32
    return %c0_i32, %c0_i32_0 : i32, i32
  }
  func.func @transform_15(%arg0: i32) -> (i32, i32) {
    %c0_i32 = arith.constant 0 : i32
    %c0_i32_0 = arith.constant 0 : i32
    %c0_i32_1 = arith.constant 0 : i32
    return %c0_i32, %c0_i32_0 : i32, i32
  }
  func.func @transform_16(%arg0: i32) -> (i32, i32) {
    %c0_i32 = arith.constant 0 : i32
    %c0_i32_0 = arith.constant 0 : i32
    %c0_i32_1 = arith.constant 0 : i32
    return %c0_i32, %c0_i32_0 : i32, i32
  }
  func.func @transform_17(%arg0: i32) -> (i32, i32) {
    %c0_i32 = arith.constant 0 : i32
    %c0_i32_0 = arith.constant 0 : i32
    return %arg0, %c0_i32 : i32, i32
  }
}

</mosaic_0001>

<llo_original>
// kernel: text_encoder_forward.1
$region0: #{text_encoder_forward.1}
  #allocation0 [shape = 'u32[]', space=smem, size = 0x4, offset = 0x4, fixed_abs, tag = 'smem constant byte address 0x4 - core index']
  #allocation1 [shape = 'u32[72,128]{1,0:T(1,128)}', space=vmem, size = 0x9000, scoped, tag = 'internal scratch']
  #allocation2 [shape = 'bf16[8,16,192]{2,1,0:T(8,128)(2,1)}', space=vmem, size = 0x10000, scoped, tag = 'scratch operand']
  %s0 = inlined_call_operand.vmem [shape: s32[16,1], index: 0, kind: input, shape index: {}]
  %s1 = inlined_call_operand.vmem [shape: bf16[8,16,16], index: 1, kind: input, shape index: {}]
  %s2 = inlined_call_operand.vmem [shape: bf16[16,32], index: 2, kind: input, shape index: {}]
  %s3 = inlined_call_operand.vmem [shape: f32[1,32], index: 3, kind: input, shape index: {}]
  %s4 = inlined_call_operand.vmem [shape: bf16[32,192], index: 4, kind: input, shape index: {}]
  %s5 = inlined_call_operand.vmem [shape: f32[1,192], index: 5, kind: input, shape index: {}]
  %s6 = inlined_call_operand.vmem [shape: bf16[32,96], index: 6, kind: input, shape index: {}]
  %s7 = inlined_call_operand.vmem [shape: f32[1,32], index: 7, kind: input, shape index: {}]
  %s8 = inlined_call_operand.vmem [shape: bf16[32,96], index: 8, kind: input, shape index: {}]
  %s9 = inlined_call_operand.vmem [shape: f32[1,32], index: 9, kind: input, shape index: {}]
  %s10 = inlined_call_operand.vmem [shape: f32[2,32], index: 10, kind: input, shape index: {}]
  %s11 = inlined_call_operand.vmem [shape: bf16[64,32], index: 11, kind: input, shape index: {}]
  %s12 = inlined_call_operand.vmem [shape: f32[1,32], index: 12, kind: input, shape index: {}]
  %s13 = inlined_call_operand.vmem [shape: f32[1,32], index: 13, kind: input, shape index: {}]
  %s14 = inlined_call_operand.vmem [shape: f32[1,32], index: 14, kind: input, shape index: {}]
  %s15 = inlined_call_operand.vmem [shape: bf16[32,8], index: 15, kind: input, shape index: {}]
  %s16 = inlined_call_operand.vmem [shape: f32[1,8], index: 16, kind: input, shape index: {}]
  %s17 = inlined_call_operand.vmem [shape: f32[16,8], index: 17, kind: output, shape index: {}]
  %s18 = sld [smem:[#allocation0]]
  $region78: #{text_encoder_forward.1} parent=0
    _
  %s20 = ssub.s32 1, %s18
  %s21 = scalar_select 0, %s20, %s18
  // Predicated region
  $region2: #{text_encoder_forward.1} parent=0 // pred_check
    _
  $region3: #{text_encoder_forward.1} parent=0 // pred_check_branch
    %23 = sbr.rel (0) target = $region5
  $region4: #{text_encoder_forward.1} parent=0 // pred_region
    _
  $region5: #{text_encoder_forward.1} parent=0 // pred_fallthru
    _
  // Predicated region
  $region6: #{text_encoder_forward.1} parent=0 // pred_check
    _
  $region7: #{text_encoder_forward.1} parent=0 // pred_check_branch
    %25 = sbr.rel (0) target = $region9
  $region8: #{text_encoder_forward.1} parent=0 // pred_region
    _
  $region9: #{text_encoder_forward.1} parent=0 // pred_fallthru
    _
  // Predicated region
  $region10: #{text_encoder_forward.1} parent=0 // pred_check
    _
  $region11: #{text_encoder_forward.1} parent=0 // pred_check_branch
    %27 = sbr.rel (0) target = $region13
  $region12: #{text_encoder_forward.1} parent=0 // pred_region
    _
  $region13: #{text_encoder_forward.1} parent=0 // pred_fallthru
    _
  // Predicated region
  $region14: #{text_encoder_forward.1} parent=0 // pred_check
    _
  $region15: #{text_encoder_forward.1} parent=0 // pred_check_branch
    %29 = sbr.rel (0) target = $region17
  $region16: #{text_encoder_forward.1} parent=0 // pred_region
    _
  $region17: #{text_encoder_forward.1} parent=0 // pred_fallthru
    _
  // Predicated region
  $region18: #{text_encoder_forward.1} parent=0 // pred_check
    _
  $region19: #{text_encoder_forward.1} parent=0 // pred_check_branch
    %31 = sbr.rel (0) target = $region21
  $region20: #{text_encoder_forward.1} parent=0 // pred_region
    _
  $region21: #{text_encoder_forward.1} parent=0 // pred_fallthru
    _
  // Predicated region
  $region22: #{text_encoder_forward.1} parent=0 // pred_check
    _
  $region23: #{text_encoder_forward.1} parent=0 // pred_check_branch
    %33 = sbr.rel (0) target = $region25
  $region24: #{text_encoder_forward.1} parent=0 // pred_region
    _
  $region25: #{text_encoder_forward.1} parent=0 // pred_fallthru
    _
  // Predicated region
  $region26: #{text_encoder_forward.1} parent=0 // pred_check
    _
  $region27: #{text_encoder_forward.1} parent=0 // pred_check_branch
    %35 = sbr.rel (0) target = $region29
  $region28: #{text_encoder_forward.1} parent=0 // pred_region
    _
  $region29: #{text_encoder_forward.1} parent=0 // pred_fallthru
    _
  // Predicated region
  $region30: #{text_encoder_forward.1} parent=0 // pred_check
    _
  $region31: #{text_encoder_forward.1} parent=0 // pred_check_branch
    %37 = sbr.rel (0) target = $region33
  $region32: #{text_encoder_forward.1} parent=0 // pred_region
    _
  $region33: #{text_encoder_forward.1} parent=0 // pred_fallthru
    _
  // Predicated region
  $region34: #{text_encoder_forward.1} parent=0 // pred_check
    _
  $region35: #{text_encoder_forward.1} parent=0 // pred_check_branch
    %39 = sbr.rel (0) target = $region37
  $region36: #{text_encoder_forward.1} parent=0 // pred_region
    _
  $region37: #{text_encoder_forward.1} parent=0 // pred_fallthru
    _
  // Predicated region
  $region38: #{text_encoder_forward.1} parent=0 // pred_check
    _
  $region39: #{text_encoder_forward.1} parent=0 // pred_check_branch
    %41 = sbr.rel (0) target = $region41
  $region40: #{text_encoder_forward.1} parent=0 // pred_region
    _
  $region41: #{text_encoder_forward.1} parent=0 // pred_fallthru
    _
  // Predicated region
  $region42: #{text_encoder_forward.1} parent=0 // pred_check
    _
  $region43: #{text_encoder_forward.1} parent=0 // pred_check_branch
    %43 = sbr.rel (0) target = $region45
  $region44: #{text_encoder_forward.1} parent=0 // pred_region
    _
  $region45: #{text_encoder_forward.1} parent=0 // pred_fallthru
    _
  // Predicated region
  $region46: #{text_encoder_forward.1} parent=0 // pred_check
    _
  $region47: #{text_encoder_forward.1} parent=0 // pred_check_branch
    %45 = sbr.rel (0) target = $region49
  $region48: #{text_encoder_forward.1} parent=0 // pred_region
    _
  $region49: #{text_encoder_forward.1} parent=0 // pred_fallthru
    _
  // Predicated region
  $region50: #{text_encoder_forward.1} parent=0 // pred_check
    _
  $region51: #{text_encoder_forward.1} parent=0 // pred_check_branch
    %47 = sbr.rel (0) target = $region53
  $region52: #{text_encoder_forward.1} parent=0 // pred_region
    _
  $region53: #{text_encoder_forward.1} parent=0 // pred_fallthru
    _
  // Predicated region
  $region54: #{text_encoder_forward.1} parent=0 // pred_check
    _
  $region55: #{text_encoder_forward.1} parent=0 // pred_check_branch
    %49 = sbr.rel (0) target = $region57
  $region56: #{text_encoder_forward.1} parent=0 // pred_region
    _
  $region57: #{text_encoder_forward.1} parent=0 // pred_fallthru
    _
  // Predicated region
  $region58: #{text_encoder_forward.1} parent=0 // pred_check
    _
  $region59: #{text_encoder_forward.1} parent=0 // pred_check_branch
    %51 = sbr.rel (0) target = $region61
  $region60: #{text_encoder_forward.1} parent=0 // pred_region
    _
  $region61: #{text_encoder_forward.1} parent=0 // pred_fallthru
    _
  // Predicated region
  $region62: #{text_encoder_forward.1} parent=0 // pred_check
    _
  $region63: #{text_encoder_forward.1} parent=0 // pred_check_branch
    %53 = sbr.rel (0) target = $region65
  $region64: #{text_encoder_forward.1} parent=0 // pred_region
    _
  $region65: #{text_encoder_forward.1} parent=0 // pred_fallthru
    _
  // Predicated region
  $region66: #{text_encoder_forward.1} parent=0 // pred_check
    _
  $region67: #{text_encoder_forward.1} parent=0 // pred_check_branch
    %55 = sbr.rel (0) target = $region69
  $region68: #{text_encoder_forward.1} parent=0 // pred_region
    _
  $region69: #{text_encoder_forward.1} parent=0 // pred_fallthru
    _
  %v57 = vld [vmem:[%s2] sm:$0xf]
  %v58 = vld [vmem:[%s2 + $0x4] sm:$0xf]
  %v59 = vld [vmem:[%s4] sm:$0xff]
  %v60 = vld [vmem:[%s4 + $0x8] sm:$0xff]
  %v61 = vld [vmem:[%s4 + $0x10] sm:$0xff]
  %v62 = vld [vmem:[%s4 + $0x18] sm:$0xff]
  %v63 = vld [vmem:[%s3] sm:$0x1]
  %v64 = vld [vmem:[%s5] sm:$0x3]
  %s65 = smul.u32 0, 2
  %s66 = smul.addr %s65, 4
  %s67 = scalar_lea.vmem %s1, %s66
  %v68 = vld [vmem:[%s67] sm:$0xf]
  %v69 = vld [vmem:[%s67 + $0x4] sm:$0xf]
  %v70 = vld [vmem:[%s67 + $0x8] sm:$0xf]
  %v71 = vld [vmem:[%s67 + $0xc] sm:$0xf]
  %v72 = vld [vmem:[%s67 + $0x10] sm:$0xf]
  %v73 = vld [vmem:[%s67 + $0x14] sm:$0xf]
  %v74 = vld [vmem:[%s67 + $0x18] sm:$0xf]
  %v75 = vld [vmem:[%s67 + $0x1c] sm:$0xf]
  %v76 = vld [vmem:[%s67 + $0x20] sm:$0xf]
  %v77 = vld [vmem:[%s67 + $0x24] sm:$0xf]
  %v78 = vld [vmem:[%s67 + $0x28] sm:$0xf]
  %v79 = vld [vmem:[%s67 + $0x2c] sm:$0xf]
  %v80 = vld [vmem:[%s67 + $0x30] sm:$0xf]
  %v81 = vld [vmem:[%s67 + $0x34] sm:$0xf]
  %v82 = vld [vmem:[%s67 + $0x38] sm:$0xf]
  %v83 = vld [vmem:[%s67 + $0x3c] sm:$0xf]
  %v85 = vperm.slane %v63, 0
  %v103 = vunpack.c.l.b16 %v68
  %v104 = vunpack.c.l.b16 %v69
  %v105 = vunpack.c.l.b16 %v70
  %v106 = vunpack.c.l.b16 %v71
  %v107 = vunpack.c.l.b16 %v72
  %v108 = vunpack.c.l.b16 %v73
  %v109 = vunpack.c.l.b16 %v74
  %v110 = vunpack.c.l.b16 %v75
  %v111 = vunpack.c.l.b16 %v76
  %v112 = vunpack.c.l.b16 %v77
  %v113 = vunpack.c.l.b16 %v78
  %v114 = vunpack.c.l.b16 %v79
  %v115 = vunpack.c.l.b16 %v80
  %v116 = vunpack.c.l.b16 %v81
  %v117 = vunpack.c.l.b16 %v82
  %v118 = vunpack.c.l.b16 %v83
  %v119 = vpack.c.b16 %v104, %v103
  %v120 = vpack.c.b16 %v106, %v105
  %v121 = vpack.c.b16 %v108, %v107
  %v122 = vpack.c.b16 %v110, %v109
  %v123 = vpack.c.b16 %v112, %v111
  %v124 = vpack.c.b16 %v114, %v113
  %v125 = vpack.c.b16 %v116, %v115
  %v126 = vpack.c.b16 %v118, %v117
  %v129 = vunpack.c.l.b16 %v57
  %v130 = vunpack.c.l.b16 %v58
  %v131 = vpack.c.b16 %v130, %v129
  %vm133 = vcmask 130048
  %v135 = vsel %vm133, %v119, 0
  %v138 = vsel %vm133, %v120, 0
  %v141 = vsel %vm133, %v121, 0
  %v144 = vsel %vm133, %v122, 0
  %v147 = vsel %vm133, %v123, 0
  %v150 = vsel %vm133, %v124, 0
  %v153 = vsel %vm133, %v125, 0
  %v156 = vsel %vm133, %v126, 0
  %158 = vmatpush.bf16.msra.mxu0 0
  %159 = vmatpush.bf16.msra.mxu0 0
  %160 = vmatpush.bf16.msra.mxu0 0
  %161 = vmatpush.bf16.msra.mxu0 0
  %162 = vmatpush.bf16.msra.mxu0 0
  %163 = vmatpush.bf16.msra.mxu0 0
  %164 = vmatpush.bf16.msra.mxu0 0
  %165 = vmatpush.bf16.msra.mxu0 %v131
  %166 = vmatmul.bf16.gmra.mxu0 %v135
  %v167 = vpop.f32.mrf.mxu0
  %v168 = vadd.f32 %v85, %v167
  %v169 = vpop.f32.mrf.mxu0
  %v170 = vadd.f32 %v85, %v169
  %171 = vmatmul.bf16.gmra.mxu0 %v138
  %v172 = vpop.f32.mrf.mxu0
  %v173 = vadd.f32 %v85, %v172
  %v174 = vpop.f32.mrf.mxu0
  %v175 = vadd.f32 %v85, %v174
  %176 = vmatmul.bf16.gmra.mxu0 %v141
  %v177 = vpop.f32.mrf.mxu0
  %v178 = vadd.f32 %v85, %v177
  %v179 = vpop.f32.mrf.mxu0
  %v180 = vadd.f32 %v85, %v179
  %181 = vmatmul.bf16.gmra.mxu0 %v144
  %v182 = vpop.f32.mrf.mxu0
  %v183 = vadd.f32 %v85, %v182
  %v184 = vpop.f32.mrf.mxu0
  %v185 = vadd.f32 %v85, %v184
  %186 = vmatmul.bf16.gmra.mxu0 %v147
  %v187 = vpop.f32.mrf.mxu0
  %v188 = vadd.f32 %v85, %v187
  %v189 = vpop.f32.mrf.mxu0
  %v190 = vadd.f32 %v85, %v189
  %191 = vmatmul.bf16.gmra.mxu0 %v150
  %v192 = vpop.f32.mrf.mxu0
  %v193 = vadd.f32 %v85, %v192
  %v194 = vpop.f32.mrf.mxu0
  %v195 = vadd.f32 %v85, %v194
  %196 = vmatmul.bf16.gmra.mxu0 %v153
  %v197 = vpop.f32.mrf.mxu0
  %v198 = vadd.f32 %v85, %v197
  %v199 = vpop.f32.mrf.mxu0
  %v200 = vadd.f32 %v85, %v199
  %201 = vmatmul.bf16.gmra.mxu0 %v156
  %v202 = vpop.f32.mrf.mxu0
  %v203 = vadd.f32 %v85, %v202
  %v204 = vpop.f32.mrf.mxu0
  %v205 = vadd.f32 %v85, %v204
  %206 = vdwg.mxu0
  %v207 = vpack.c.bf16 %v170, %v168
  %v208 = vpack.c.bf16 %v175, %v173
  %v209 = vpack.c.bf16 %v180, %v178
  %v210 = vpack.c.bf16 %v185, %v183
  %v211 = vpack.c.bf16 %v190, %v188
  %v212 = vpack.c.bf16 %v195, %v193
  %v213 = vpack.c.bf16 %v200, %v198
  %v214 = vpack.c.bf16 %v205, %v203
  %v216 = vperm.slane %v64, 0
  %v217 = vperm.slane %v64, 1
  %v224 = vunpack.c.l.b16 %v59
  %v225 = vunpack.c.h.b16 %v59
  %v226 = vunpack.c.l.b16 %v60
  %v227 = vunpack.c.h.b16 %v60
  %v228 = vunpack.c.l.b16 %v61
  %v229 = vunpack.c.h.b16 %v61
  %v230 = vunpack.c.l.b16 %v62
  %v231 = vunpack.c.h.b16 %v62
  %v232 = vpack.c.b16 %v226, %v224
  %v233 = vpack.c.b16 %v227, %v225
  %v234 = vpack.c.b16 %v230, %v228
  %v235 = vpack.c.b16 %v231, %v229
  %vm240 = vcmask 261120
  %v242 = vsel %vm240, %v207, 0
  %v245 = vsel %vm240, %v208, 0
  %v248 = vsel %vm240, %v209, 0
  %v251 = vsel %vm240, %v210, 0
  %v254 = vsel %vm240, %v211, 0
  %v257 = vsel %vm240, %v212, 0
  %v260 = vsel %vm240, %v213, 0
  %v263 = vsel %vm240, %v214, 0
  %265 = vmatpush.bf16.msra.mxu0 0
  %266 = vmatpush.bf16.msra.mxu0 0
  %267 = vmatpush.bf16.msra.mxu0 0
  %268 = vmatpush.bf16.msra.mxu0 0
  %269 = vmatpush.bf16.msra.mxu0 0
  %270 = vmatpush.bf16.msra.mxu0 0
  %271 = vmatpush.bf16.msra.mxu0 %v234
  %272 = vmatpush.bf16.msra.mxu0 %v232
  %273 = vmatmul.bf16.gmra.mxu0 %v242
  %v274 = vpop.f32.mrf.mxu0
  %v275 = vadd.f32 %v216, %v274
  %v276 = vpop.f32.mrf.mxu0
  %v277 = vadd.f32 %v216, %v276
  %278 = vmatmul.bf16.gmra.mxu0 %v245
  %v279 = vpop.f32.mrf.mxu0
  %v280 = vadd.f32 %v216, %v279
  %v281 = vpop.f32.mrf.mxu0
  %v282 = vadd.f32 %v216, %v281
  %283 = vmatmul.bf16.gmra.mxu0 %v248
  %v284 = vpop.f32.mrf.mxu0
  %v285 = vadd.f32 %v216, %v284
  %v286 = vpop.f32.mrf.mxu0
  %v287 = vadd.f32 %v216, %v286
  %288 = vmatmul.bf16.gmra.mxu0 %v251
  %v289 = vpop.f32.mrf.mxu0
  %v290 = vadd.f32 %v216, %v289
  %v291 = vpop.f32.mrf.mxu0
  %v292 = vadd.f32 %v216, %v291
  %293 = vmatmul.bf16.gmra.mxu0 %v254
  %v294 = vpop.f32.mrf.mxu0
  %v295 = vadd.f32 %v216, %v294
  %v296 = vpop.f32.mrf.mxu0
  %v297 = vadd.f32 %v216, %v296
  %298 = vmatmul.bf16.gmra.mxu0 %v257
  %v299 = vpop.f32.mrf.mxu0
  %v300 = vadd.f32 %v216, %v299
  %v301 = vpop.f32.mrf.mxu0
  %v302 = vadd.f32 %v216, %v301
  %303 = vmatmul.bf16.gmra.mxu0 %v260
  %v304 = vpop.f32.mrf.mxu0
  %v305 = vadd.f32 %v216, %v304
  %v306 = vpop.f32.mrf.mxu0
  %v307 = vadd.f32 %v216, %v306
  %308 = vmatmul.bf16.gmra.mxu0 %v263
  %v309 = vpop.f32.mrf.mxu0
  %v310 = vadd.f32 %v216, %v309
  %v311 = vpop.f32.mrf.mxu0
  %v312 = vadd.f32 %v216, %v311
  %313 = vdwg.mxu0
  %314 = vmatpush.bf16.msra.mxu0 0
  %315 = vmatpush.bf16.msra.mxu0 0
  %316 = vmatpush.bf16.msra.mxu0 0
  %317 = vmatpush.bf16.msra.mxu0 0
  %318 = vmatpush.bf16.msra.mxu0 0
  %319 = vmatpush.bf16.msra.mxu0 0
  %320 = vmatpush.bf16.msra.mxu0 %v235
  %321 = vmatpush.bf16.msra.mxu0 %v233
  %322 = vmatmul.bf16.gmra.mxu0 %v242
  %v323 = vpop.f32.mrf.mxu0
  %v324 = vadd.f32 %v217, %v323
  %v325 = vpop.f32.mrf.mxu0
  %v326 = vadd.f32 %v217, %v325
  %327 = vmatmul.bf16.gmra.mxu0 %v245
  %v328 = vpop.f32.mrf.mxu0
  %v329 = vadd.f32 %v217, %v328
  %v330 = vpop.f32.mrf.mxu0
  %v331 = vadd.f32 %v217, %v330
  %332 = vmatmul.bf16.gmra.mxu0 %v248
  %v333 = vpop.f32.mrf.mxu0
  %v334 = vadd.f32 %v217, %v333
  %v335 = vpop.f32.mrf.mxu0
  %v336 = vadd.f32 %v217, %v335
  %337 = vmatmul.bf16.gmra.mxu0 %v251
  %v338 = vpop.f32.mrf.mxu0
  %v339 = vadd.f32 %v217, %v338
  %v340 = vpop.f32.mrf.mxu0
  %v341 = vadd.f32 %v217, %v340
  %342 = vmatmul.bf16.gmra.mxu0 %v254
  %v343 = vpop.f32.mrf.mxu0
  %v344 = vadd.f32 %v217, %v343
  %v345 = vpop.f32.mrf.mxu0
  %v346 = vadd.f32 %v217, %v345
  %347 = vmatmul.bf16.gmra.mxu0 %v257
  %v348 = vpop.f32.mrf.mxu0
  %v349 = vadd.f32 %v217, %v348
  %v350 = vpop.f32.mrf.mxu0
  %v351 = vadd.f32 %v217, %v350
  %352 = vmatmul.bf16.gmra.mxu0 %v260
  %v353 = vpop.f32.mrf.mxu0
  %v354 = vadd.f32 %v217, %v353
  %v355 = vpop.f32.mrf.mxu0
  %v356 = vadd.f32 %v217, %v355
  %357 = vmatmul.bf16.gmra.mxu0 %v263
  %v358 = vpop.f32.mrf.mxu0
  %v359 = vadd.f32 %v217, %v358
  %v360 = vpop.f32.mrf.mxu0
  %v361 = vadd.f32 %v217, %v360
  %362 = vdwg.mxu0
  %v363 = vpack.c.bf16 %v324, %v275
  %v364 = vpack.c.bf16 %v326, %v277
  %v365 = vpack.c.bf16 %v329, %v280
  %v366 = vpack.c.bf16 %v331, %v282
  %v367 = vpack.c.bf16 %v334, %v285
  %v368 = vpack.c.bf16 %v336, %v287
  %v369 = vpack.c.bf16 %v339, %v290
  %v370 = vpack.c.bf16 %v341, %v292
  %v371 = vpack.c.bf16 %v344, %v295
  %v372 = vpack.c.bf16 %v346, %v297
  %v373 = vpack.c.bf16 %v349, %v300
  %v374 = vpack.c.bf16 %v351, %v302
  %v375 = vpack.c.bf16 %v354, %v305
  %v376 = vpack.c.bf16 %v356, %v307
  %v377 = vpack.c.bf16 %v359, %v310
  %v378 = vpack.c.bf16 %v361, %v312
  %s379 = smul.u32 0, 4
  %s380 = smul.addr %s379, 4
  %s381 = scalar_lea.vmem [#allocation2], %s380
  %vm382 = vcmask 1043456
  %vm383 = vcmask 523268
  %vm384 = vmor %vm383, %vm382
  %385 = vst.msk [vmem:[%s381] sm:$0xff] %vm384, %v363
  %386 = vst.msk [vmem:[%s381 + $0x8] sm:$0xff] %vm384, %v364
  %387 = vst.msk [vmem:[%s381 + $0x10] sm:$0xff] %vm384, %v365
  %388 = vst.msk [vmem:[%s381 + $0x18] sm:$0xff] %vm384, %v366
  %389 = vst.msk [vmem:[%s381 + $0x20] sm:$0xff] %vm384, %v367
  %390 = vst.msk [vmem:[%s381 + $0x28] sm:$0xff] %vm384, %v368
  %391 = vst.msk [vmem:[%s381 + $0x30] sm:$0xff] %vm384, %v369
  %392 = vst.msk [vmem:[%s381 + $0x38] sm:$0xff] %vm384, %v370
  %393 = vst.msk [vmem:[%s381 + $0x40] sm:$0xff] %vm384, %v371
  %394 = vst.msk [vmem:[%s381 + $0x48] sm:$0xff] %vm384, %v372
  %395 = vst.msk [vmem:[%s381 + $0x50] sm:$0xff] %vm384, %v373
  %396 = vst.msk [vmem:[%s381 + $0x58] sm:$0xff] %vm384, %v374
  %397 = vst.msk [vmem:[%s381 + $0x60] sm:$0xff] %vm384, %v375
  %398 = vst.msk [vmem:[%s381 + $0x68] sm:$0xff] %vm384, %v376
  %399 = vst.msk [vmem:[%s381 + $0x70] sm:$0xff] %vm384, %v377
  %400 = vst.msk [vmem:[%s381 + $0x78] sm:$0xff] %vm384, %v378
  %v401 = vld [vmem:[%s0] sm:$0xff]
  %v402 = vld [vmem:[%s0 + $0x8] sm:$0xff]
  %v403 = vld [vmem:[%s10] sm:$0x1]
  %v404 = vperm.slane %v403, 0
  %v405 = vld [vmem:[%s10 + $0x1] sm:$0x1]
  %v406 = vperm.slane %v405, 0
  %v407 = vld [vmem:[%s6] sm:$0xf]
  %v408 = vld [vmem:[%s6 + $0x4] sm:$0xf]
  %v409 = vld [vmem:[%s6 + $0x8] sm:$0xf]
  %v410 = vld [vmem:[%s6 + $0xc] sm:$0xf]
  %v411 = vld [vmem:[%s8] sm:$0xf]
  %v412 = vld [vmem:[%s8 + $0x4] sm:$0xf]
  %v413 = vld [vmem:[%s8 + $0x8] sm:$0xf]
  %v414 = vld [vmem:[%s8 + $0xc] sm:$0xf]
  %v415 = vld [vmem:[%s7] sm:$0x1]
  %v416 = vld [vmem:[%s9] sm:$0x1]
  %v417 = vld [vmem:[#allocation2] sm:$0xff]
  %v418 = vld [vmem:[#allocation2 + $0x8] sm:$0xff]
  %v419 = vunpack.c.l.bf16 %v417
  %v420 = vunpack.c.h.bf16 %v417
  %v421 = vunpack.c.l.bf16 %v418
  %v422 = vunpack.c.h.bf16 %v418
  %v423 = vpack.c.bf16 %v404, %v404
  %v428 = vunpack.c.l.b16 %v407
  %v429 = vunpack.c.l.b16 %v408
  %v430 = vunpack.c.l.b16 %v409
  %v431 = vunpack.c.l.b16 %v410
  %v432 = vpack.c.b16 %v429, %v428
  %v433 = vpack.c.b16 %v431, %v430
  %v437 = vsel %vm240, %v423, 0
  %439 = vmatpush.bf16.msra.mxu0 0
  %440 = vmatpush.bf16.msra.mxu0 0
  %441 = vmatpush.bf16.msra.mxu0 0
  %442 = vmatpush.bf16.msra.mxu0 0
  %443 = vmatpush.bf16.msra.mxu0 0
  %444 = vmatpush.bf16.msra.mxu0 0
  %445 = vmatpush.bf16.msra.mxu0 %v433
  %446 = vmatpush.bf16.msra.mxu0 %v432
  %447 = vmatmul.bf16.gmra.mxu0 %v437
  %v448 = vpop.f32.mrf.mxu0
  %v449 = vadd.f32 0.0, %v448
  %v450 = vpop.f32.mrf.mxu0
  %v451 = vadd.f32 0.0, %v450
  %452 = vdwg.mxu0
  %v453 = vadd.f32 %v419, %v449
  %v454 = vadd.f32 %v421, %v451
  %v455 = vmul.f32 %v453, 0.5
  %v456 = vmul.f32 %v454, 0.5
  %v457 = vtanh.pop %v455
  %v458 = vtanh.pop %v456
  %v459 = vadd.f32 %v457, 1.0
  %v460 = vadd.f32 %v458, 1.0
  %v461 = vmul.f32 %v459, 0.5
  %v462 = vmul.f32 %v460, 0.5
  %v464 = vperm.slane %v415, 0
  %465 = vrot.lane.b32.xlu0 %v464, 64
  %v466 = vpop.permute.xlu0 %465
  %v468 = vadd.f32 %v449, %v466
  %v469 = vadd.f32 %v451, %v466
  %472 = vrot.lane.b32.xlu0 %v468, 64
  %v473 = vpop.permute.xlu0 %472
  %474 = vrot.lane.b32.xlu0 %v469, 64
  %v475 = vpop.permute.xlu0 %474
  %v478 = vmul.f32 %v461, %v473
  %v479 = vmul.f32 %v462, %v475
  %482 = vrot.lane.b32.xlu0 %v478, 64
  %v483 = vpop.permute.xlu0 %482
  %484 = vrot.lane.b32.xlu0 %v479, 64
  %v485 = vpop.permute.xlu0 %484
  %v488 = vadd.f32 %v419, %v483
  %v489 = vadd.f32 %v421, %v485
  %v490 = vtanh.pop %v488
  %v491 = vtanh.pop %v489
  %v492 = vsub.f32 1.0, %v461
  %v493 = vsub.f32 1.0, %v462
  %496 = vrot.lane.b32.xlu0 %v490, 96
  %v497 = vpop.permute.xlu0 %496
  %498 = vrot.lane.b32.xlu0 %v491, 96
  %v499 = vpop.permute.xlu0 %498
  %v502 = vmul.f32 %v492, %v497
  %v503 = vmul.f32 %v493, %v499
  %505 = vrot.lane.b32.xlu0 %v404, 32
  %v506 = vpop.permute.xlu0 %505
  %v508 = vmul.f32 %v461, %v506
  %v509 = vmul.f32 %v462, %v506
  %v510 = vadd.f32 %v502, %v508
  %v511 = vadd.f32 %v503, %v509
  %vm512 = vcmp.gt.s32.totalorder %v401, 0
  %vm513 = vcmp.gt.s32.totalorder %v402, 0
  %v514 = vsel %vm512, 1, 0
  %v515 = vsel %vm513, 1, 0
  %516 = vset.pattern.permute.xlu0 0
  %517 = vperm.xlu0 %516, %v514
  %v518 = vpop.permute.xlu0 %517
  %519 = vset.pattern.permute.xlu0 0
  %520 = vperm.xlu0 %519, %v515
  %v521 = vpop.permute.xlu0 %520
  %vm522 = vcmp.eq.s32.totalorder %v518, 1
  %vm523 = vcmp.eq.s32.totalorder %v521, 1
  %v524 = vsel %vm522, %v510, %v506
  %v525 = vsel %vm523, %v511, %v506
  %s526 = scalar_lea.vmem [#allocation2], 112
  %v527 = vld [vmem:[%s526] sm:$0xff]
  %v528 = vld [vmem:[%s526 + $0x8] sm:$0xff]
  %v529 = vunpack.c.l.bf16 %v527
  %v530 = vunpack.c.h.bf16 %v527
  %v531 = vunpack.c.l.bf16 %v528
  %v532 = vunpack.c.h.bf16 %v528
  %v533 = vpack.c.bf16 %v406, %v406
  %v538 = vunpack.c.l.b16 %v411
  %v539 = vunpack.c.l.b16 %v412
  %v540 = vunpack.c.l.b16 %v413
  %v541 = vunpack.c.l.b16 %v414
  %v542 = vpack.c.b16 %v539, %v538
  %v543 = vpack.c.b16 %v541, %v540
  %v547 = vsel %vm240, %v533, 0
  %549 = vmatpush.bf16.msra.mxu0 0
  %550 = vmatpush.bf16.msra.mxu0 0
  %551 = vmatpush.bf16.msra.mxu0 0
  %552 = vmatpush.bf16.msra.mxu0 0
  %553 = vmatpush.bf16.msra.mxu0 0
  %554 = vmatpush.bf16.msra.mxu0 0
  %555 = vmatpush.bf16.msra.mxu0 %v543
  %556 = vmatpush.bf16.msra.mxu0 %v542
  %557 = vmatmul.bf16.gmra.mxu0 %v547
  %v558 = vpop.f32.mrf.mxu0
  %v559 = vadd.f32 0.0, %v558
  %v560 = vpop.f32.mrf.mxu0
  %v561 = vadd.f32 0.0, %v560
  %562 = vdwg.mxu0
  %565 = vrot.lane.b32.xlu0 %v559, 96
  %v566 = vpop.permute.xlu0 %565
  %567 = vrot.lane.b32.xlu0 %v561, 96
  %v568 = vpop.permute.xlu0 %567
  %v571 = vadd.f32 %v529, %v566
  %v572 = vadd.f32 %v531, %v568
  %v573 = vmul.f32 %v571, 0.5
  %v574 = vmul.f32 %v572, 0.5
  %v575 = vtanh.pop %v573
  %v576 = vtanh.pop %v574
  %v577 = vadd.f32 %v575, 1.0
  %v578 = vadd.f32 %v576, 1.0
  %v579 = vmul.f32 %v577, 0.5
  %v580 = vmul.f32 %v578, 0.5
  %v581 = vadd.f32 %v530, %v566
  %v582 = vadd.f32 %v532, %v568
  %v583 = vmul.f32 %v581, 0.5
  %v584 = vmul.f32 %v582, 0.5
  %v585 = vtanh.pop %v583
  %v586 = vtanh.pop %v584
  %v587 = vadd.f32 %v585, 1.0
  %v588 = vadd.f32 %v586, 1.0
  %v589 = vmul.f32 %v587, 0.5
  %v590 = vmul.f32 %v588, 0.5
  %v592 = vperm.slane %v416, 0
  %593 = vrot.lane.b32.xlu0 %v592, 64
  %v594 = vpop.permute.xlu0 %593
  %v596 = vadd.f32 %v559, %v594
  %v597 = vadd.f32 %v561, %v594
  %600 = vrot.lane.b32.xlu0 %v596, 32
  %v601 = vpop.permute.xlu0 %600
  %602 = vrot.lane.b32.xlu0 %v597, 32
  %v603 = vpop.permute.xlu0 %602
  %v606 = vmul.f32 %v579, %v601
  %v607 = vmul.f32 %v580, %v603
  %610 = vrot.lane.b32.xlu0 %v606, 64
  %v611 = vpop.permute.xlu0 %610
  %612 = vrot.lane.b32.xlu0 %v607, 64
  %v613 = vpop.permute.xlu0 %612
  %v616 = vadd.f32 %v530, %v611
  %v617 = vadd.f32 %v532, %v613
  %v618 = vtanh.pop %v616
  %v619 = vtanh.pop %v617
  %v620 = vsub.f32 1.0, %v589
  %v621 = vsub.f32 1.0, %v590
  %624 = vrot.lane.b32.xlu0 %v618, 96
  %v625 = vpop.permute.xlu0 %624
  %626 = vrot.lane.b32.xlu0 %v619, 96
  %v627 = vpop.permute.xlu0 %626
  %v630 = vmul.f32 %v620, %v625
  %v631 = vmul.f32 %v621, %v627
  %v632 = vmul.f32 %v589, %v406
  %v633 = vmul.f32 %v590, %v406
  %v634 = vadd.f32 %v630, %v632
  %v635 = vadd.f32 %v631, %v633
  %vm636 = vcmp.gt.s32.totalorder %v401, 7
  %vm637 = vcmp.gt.s32.totalorder %v402, 7
  %v638 = vsel %vm636, 1, 0
  %v639 = vsel %vm637, 1, 0
  %640 = vset.pattern.permute.xlu0 0
  %641 = vperm.xlu0 %640, %v638
  %v642 = vpop.permute.xlu0 %641
  %643 = vset.pattern.permute.xlu0 0
  %644 = vperm.xlu0 %643, %v639
  %v645 = vpop.permute.xlu0 %644
  %vm646 = vcmp.eq.s32.totalorder %v642, 1
  %vm647 = vcmp.eq.s32.totalorder %v645, 1
  %v648 = vsel %vm646, %v634, %v406
  %v649 = vsel %vm647, %v635, %v406
  %s650 = scalar_lea.vmem [#allocation2], 16
  %v651 = vld [vmem:[%s650] sm:$0xff]
  %v652 = vld [vmem:[%s650 + $0x8] sm:$0xff]
  %v653 = vunpack.c.l.bf16 %v651
  %v654 = vunpack.c.h.bf16 %v651
  %v655 = vunpack.c.l.bf16 %v652
  %v656 = vunpack.c.h.bf16 %v652
  %v657 = vpack.c.bf16 %v525, %v524
  %659 = vrot.lane.b32.xlu0 %v657, 96
  %v660 = vpop.permute.xlu0 %659
  %v662 = vsel %vm240, %v660, 0
  %664 = vmatpush.bf16.msra.mxu0 0
  %665 = vmatpush.bf16.msra.mxu0 0
  %666 = vmatpush.bf16.msra.mxu0 0
  %667 = vmatpush.bf16.msra.mxu0 0
  %668 = vmatpush.bf16.msra.mxu0 0
  %669 = vmatpush.bf16.msra.mxu0 0
  %670 = vmatpush.bf16.msra.mxu0 %v433
  %671 = vmatpush.bf16.msra.mxu0 %v432
  %672 = vmatmul.bf16.gmra.mxu0 %v662
  %v673 = vpop.f32.mrf.mxu0
  %v674 = vadd.f32 0.0, %v673
  %v675 = vpop.f32.mrf.mxu0
  %v676 = vadd.f32 0.0, %v675
  %677 = vdwg.mxu0
  %v678 = vadd.f32 %v653, %v674
  %v679 = vadd.f32 %v655, %v676
  %v680 = vmul.f32 %v678, 0.5
  %v681 = vmul.f32 %v679, 0.5
  %v682 = vtanh.pop %v680
  %v683 = vtanh.pop %v681
  %v684 = vadd.f32 %v682, 1.0
  %v685 = vadd.f32 %v683, 1.0
  %v686 = vmul.f32 %v684, 0.5
  %v687 = vmul.f32 %v685, 0.5
  %v688 = vadd.f32 %v674, %v466
  %v689 = vadd.f32 %v676, %v466
  %692 = vrot.lane.b32.xlu0 %v688, 64
  %v693 = vpop.permute.xlu0 %692
  %694 = vrot.lane.b32.xlu0 %v689, 64
  %v695 = vpop.permute.xlu0 %694
  %v698 = vmul.f32 %v686, %v693
  %v699 = vmul.f32 %v687, %v695
  %702 = vrot.lane.b32.xlu0 %v698, 64
  %v703 = vpop.permute.xlu0 %702
  %704 = vrot.lane.b32.xlu0 %v699, 64
  %v705 = vpop.permute.xlu0 %704
  %v708 = vadd.f32 %v653, %v703
  %v709 = vadd.f32 %v655, %v705
  %v710 = vtanh.pop %v708
  %v711 = vtanh.pop %v709
  %v712 = vsub.f32 1.0, %v686
  %v713 = vsub.f32 1.0, %v687
  %716 = vrot.lane.b32.xlu0 %v710, 96
  %v717 = vpop.permute.xlu0 %716
  %718 = vrot.lane.b32.xlu0 %v711, 96
  %v719 = vpop.permute.xlu0 %718
  %v722 = vmul.f32 %v712, %v717
  %v723 = vmul.f32 %v713, %v719
  %v724 = vmul.f32 %v686, %v524
  %v725 = vmul.f32 %v687, %v525
  %v726 = vadd.f32 %v722, %v724
  %v727 = vadd.f32 %v723, %v725
  %vm728 = vcmp.gt.s32.totalorder %v401, 1
  %vm729 = vcmp.gt.s32.totalorder %v402, 1
  %v730 = vsel %vm728, 1, 0
  %v731 = vsel %vm729, 1, 0
  %732 = vset.pattern.permute.xlu0 0
  %733 = vperm.xlu0 %732, %v730
  %v734 = vpop.permute.xlu0 %733
  %735 = vset.pattern.permute.xlu0 0
  %736 = vperm.xlu0 %735, %v731
  %v737 = vpop.permute.xlu0 %736
  %vm738 = vcmp.eq.s32.totalorder %v734, 1
  %vm739 = vcmp.eq.s32.totalorder %v737, 1
  %v740 = vsel %vm738, %v726, %v524
  %v741 = vsel %vm739, %v727, %v525
  %s742 = scalar_lea.vmem [#allocation2], 96
  %v743 = vld [vmem:[%s742] sm:$0xff]
  %v744 = vld [vmem:[%s742 + $0x8] sm:$0xff]
  %v745 = vunpack.c.l.bf16 %v743
  %v746 = vunpack.c.h.bf16 %v743
  %v747 = vunpack.c.l.bf16 %v744
  %v748 = vunpack.c.h.bf16 %v744
  %v749 = vpack.c.bf16 %v649, %v648
  %v751 = vsel %vm240, %v749, 0
  %753 = vmatpush.bf16.msra.mxu0 0
  %754 = vmatpush.bf16.msra.mxu0 0
  %755 = vmatpush.bf16.msra.mxu0 0
  %756 = vmatpush.bf16.msra.mxu0 0
  %757 = vmatpush.bf16.msra.mxu0 0
  %758 = vmatpush.bf16.msra.mxu0 0
  %759 = vmatpush.bf16.msra.mxu0 %v543
  %760 = vmatpush.bf16.msra.mxu0 %v542
  %761 = vmatmul.bf16.gmra.mxu0 %v751
  %v762 = vpop.f32.mrf.mxu0
  %v763 = vadd.f32 0.0, %v762
  %v764 = vpop.f32.mrf.mxu0
  %v765 = vadd.f32 0.0, %v764
  %766 = vdwg.mxu0
  %769 = vrot.lane.b32.xlu0 %v763, 96
  %v770 = vpop.permute.xlu0 %769
  %771 = vrot.lane.b32.xlu0 %v765, 96
  %v772 = vpop.permute.xlu0 %771
  %v775 = vadd.f32 %v745, %v770
  %v776 = vadd.f32 %v747, %v772
  %v777 = vmul.f32 %v775, 0.5
  %v778 = vmul.f32 %v776, 0.5
  %v779 = vtanh.pop %v777
  %v780 = vtanh.pop %v778
  %v781 = vadd.f32 %v779, 1.0
  %v782 = vadd.f32 %v780, 1.0
  %v783 = vmul.f32 %v781, 0.5
  %v784 = vmul.f32 %v782, 0.5
  %v785 = vadd.f32 %v746, %v770
  %v786 = vadd.f32 %v748, %v772
  %v787 = vmul.f32 %v785, 0.5
  %v788 = vmul.f32 %v786, 0.5
  %v789 = vtanh.pop %v787
  %v790 = vtanh.pop %v788
  %v791 = vadd.f32 %v789, 1.0
  %v792 = vadd.f32 %v790, 1.0
  %v793 = vmul.f32 %v791, 0.5
  %v794 = vmul.f32 %v792, 0.5
  %v795 = vadd.f32 %v763, %v594
  %v796 = vadd.f32 %v765, %v594
  %799 = vrot.lane.b32.xlu0 %v795, 32
  %v800 = vpop.permute.xlu0 %799
  %801 = vrot.lane.b32.xlu0 %v796, 32
  %v802 = vpop.permute.xlu0 %801
  %v805 = vmul.f32 %v783, %v800
  %v806 = vmul.f32 %v784, %v802
  %809 = vrot.lane.b32.xlu0 %v805, 64
  %v810 = vpop.permute.xlu0 %809
  %811 = vrot.lane.b32.xlu0 %v806, 64
  %v812 = vpop.permute.xlu0 %811
  %v815 = vadd.f32 %v746, %v810
  %v816 = vadd.f32 %v748, %v812
  %v817 = vtanh.pop %v815
  %v818 = vtanh.pop %v816
  %v819 = vsub.f32 1.0, %v793
  %v820 = vsub.f32 1.0, %v794
  %823 = vrot.lane.b32.xlu0 %v817, 96
  %v824 = vpop.permute.xlu0 %823
  %825 = vrot.lane.b32.xlu0 %v818, 96
  %v826 = vpop.permute.xlu0 %825
  %v829 = vmul.f32 %v819, %v824
  %v830 = vmul.f32 %v820, %v826
  %v831 = vmul.f32 %v793, %v648
  %v832 = vmul.f32 %v794, %v649
  %v833 = vadd.f32 %v829, %v831
  %v834 = vadd.f32 %v830, %v832
  %vm835 = vcmp.gt.s32.totalorder %v401, 6
  %vm836 = vcmp.gt.s32.totalorder %v402, 6
  %v837 = vsel %vm835, 1, 0
  %v838 = vsel %vm836, 1, 0
  %839 = vset.pattern.permute.xlu0 0
  %840 = vperm.xlu0 %839, %v837
  %v841 = vpop.permute.xlu0 %840
  %842 = vset.pattern.permute.xlu0 0
  %843 = vperm.xlu0 %842, %v838
  %v844 = vpop.permute.xlu0 %843
  %vm845 = vcmp.eq.s32.totalorder %v841, 1
  %vm846 = vcmp.eq.s32.totalorder %v844, 1
  %v847 = vsel %vm845, %v833, %v648
  %v848 = vsel %vm846, %v834, %v649
  %s849 = scalar_lea.vmem [#allocation2], 32
  %v850 = vld [vmem:[%s849] sm:$0xff]
  %v851 = vld [vmem:[%s849 + $0x8] sm:$0xff]
  %v852 = vunpack.c.l.bf16 %v850
  %v853 = vunpack.c.h.bf16 %v850
  %v854 = vunpack.c.l.bf16 %v851
  %v855 = vunpack.c.h.bf16 %v851
  %v856 = vpack.c.bf16 %v741, %v740
  %858 = vrot.lane.b32.xlu0 %v856, 96
  %v859 = vpop.permute.xlu0 %858
  %v861 = vsel %vm240, %v859, 0
  %863 = vmatpush.bf16.msra.mxu0 0
  %864 = vmatpush.bf16.msra.mxu0 0
  %865 = vmatpush.bf16.msra.mxu0 0
  %866 = vmatpush.bf16.msra.mxu0 0
  %867 = vmatpush.bf16.msra.mxu0 0
  %868 = vmatpush.bf16.msra.mxu0 0
  %869 = vmatpush.bf16.msra.mxu0 %v433
  %870 = vmatpush.bf16.msra.mxu0 %v432
  %871 = vmatmul.bf16.gmra.mxu0 %v861
  %v872 = vpop.f32.mrf.mxu0
  %v873 = vadd.f32 0.0, %v872
  %v874 = vpop.f32.mrf.mxu0
  %v875 = vadd.f32 0.0, %v874
  %876 = vdwg.mxu0
  %v877 = vadd.f32 %v852, %v873
  %v878 = vadd.f32 %v854, %v875
  %v879 = vmul.f32 %v877, 0.5
  %v880 = vmul.f32 %v878, 0.5
  %v881 = vtanh.pop %v879
  %v882 = vtanh.pop %v880
  %v883 = vadd.f32 %v881, 1.0
  %v884 = vadd.f32 %v882, 1.0
  %v885 = vmul.f32 %v883, 0.5
  %v886 = vmul.f32 %v884, 0.5
  %v887 = vadd.f32 %v873, %v466
  %v888 = vadd.f32 %v875, %v466
  %891 = vrot.lane.b32.xlu0 %v887, 64
  %v892 = vpop.permute.xlu0 %891
  %893 = vrot.lane.b32.xlu0 %v888, 64
  %v894 = vpop.permute.xlu0 %893
  %v897 = vmul.f32 %v885, %v892
  %v898 = vmul.f32 %v886, %v894
  %901 = vrot.lane.b32.xlu0 %v897, 64
  %v902 = vpop.permute.xlu0 %901
  %903 = vrot.lane.b32.xlu0 %v898, 64
  %v904 = vpop.permute.xlu0 %903
  %v907 = vadd.f32 %v852, %v902
  %v908 = vadd.f32 %v854, %v904
  %v909 = vtanh.pop %v907
  %v910 = vtanh.pop %v908
  %v911 = vsub.f32 1.0, %v885
  %v912 = vsub.f32 1.0, %v886
  %915 = vrot.lane.b32.xlu0 %v909, 96
  %v916 = vpop.permute.xlu0 %915
  %917 = vrot.lane.b32.xlu0 %v910, 96
  %v918 = vpop.permute.xlu0 %917
  %v921 = vmul.f32 %v911, %v916
  %v922 = vmul.f32 %v912, %v918
  %v923 = vmul.f32 %v885, %v740
  %v924 = vmul.f32 %v886, %v741
  %v925 = vadd.f32 %v921, %v923
  %v926 = vadd.f32 %v922, %v924
  %vm927 = vcmp.gt.s32.totalorder %v401, 2
  %vm928 = vcmp.gt.s32.totalorder %v402, 2
  %v929 = vsel %vm927, 1, 0
  %v930 = vsel %vm928, 1, 0
  %931 = vset.pattern.permute.xlu0 0
  %932 = vperm.xlu0 %931, %v929
  %v933 = vpop.permute.xlu0 %932
  %934 = vset.pattern.permute.xlu0 0
  %935 = vperm.xlu0 %934, %v930
  %v936 = vpop.permute.xlu0 %935
  %vm937 = vcmp.eq.s32.totalorder %v933, 1
  %vm938 = vcmp.eq.s32.totalorder %v936, 1
  %v939 = vsel %vm937, %v925, %v740
  %v940 = vsel %vm938, %v926, %v741
  %s941 = scalar_lea.vmem [#allocation2], 80
  %v942 = vld [vmem:[%s941] sm:$0xff]
  %v943 = vld [vmem:[%s941 + $0x8] sm:$0xff]
  %v944 = vunpack.c.l.bf16 %v942
  %v945 = vunpack.c.h.bf16 %v942
  %v946 = vunpack.c.l.bf16 %v943
  %v947 = vunpack.c.h.bf16 %v943
  %v948 = vpack.c.bf16 %v848, %v847
  %v950 = vsel %vm240, %v948, 0
  %952 = vmatpush.bf16.msra.mxu0 0
  %953 = vmatpush.bf16.msra.mxu0 0
  %954 = vmatpush.bf16.msra.mxu0 0
  %955 = vmatpush.bf16.msra.mxu0 0
  %956 = vmatpush.bf16.msra.mxu0 0
  %957 = vmatpush.bf16.msra.mxu0 0
  %958 = vmatpush.bf16.msra.mxu0 %v543
  %959 = vmatpush.bf16.msra.mxu0 %v542
  %960 = vmatmul.bf16.gmra.mxu0 %v950
  %v961 = vpop.f32.mrf.mxu0
  %v962 = vadd.f32 0.0, %v961
  %v963 = vpop.f32.mrf.mxu0
  %v964 = vadd.f32 0.0, %v963
  %965 = vdwg.mxu0
  %968 = vrot.lane.b32.xlu0 %v962, 96
  %v969 = vpop.permute.xlu0 %968
  %970 = vrot.lane.b32.xlu0 %v964, 96
  %v971 = vpop.permute.xlu0 %970
  %v974 = vadd.f32 %v944, %v969
  %v975 = vadd.f32 %v946, %v971
  %v976 = vmul.f32 %v974, 0.5
  %v977 = vmul.f32 %v975, 0.5
  %v978 = vtanh.pop %v976
  %v979 = vtanh.pop %v977
  %v980 = vadd.f32 %v978, 1.0
  %v981 = vadd.f32 %v979, 1.0
  %v982 = vmul.f32 %v980, 0.5
  %v983 = vmul.f32 %v981, 0.5
  %v984 = vadd.f32 %v945, %v969
  %v985 = vadd.f32 %v947, %v971
  %v986 = vmul.f32 %v984, 0.5
  %v987 = vmul.f32 %v985, 0.5
  %v988 = vtanh.pop %v986
  %v989 = vtanh.pop %v987
  %v990 = vadd.f32 %v988, 1.0
  %v991 = vadd.f32 %v989, 1.0
  %v992 = vmul.f32 %v990, 0.5
  %v993 = vmul.f32 %v991, 0.5
  %v994 = vadd.f32 %v962, %v594
  %v995 = vadd.f32 %v964, %v594
  %998 = vrot.lane.b32.xlu0 %v994, 32
  %v999 = vpop.permute.xlu0 %998
  %1000 = vrot.lane.b32.xlu0 %v995, 32
  %v1001 = vpop.permute.xlu0 %1000
  %v1004 = vmul.f32 %v982, %v999
  %v1005 = vmul.f32 %v983, %v1001
  %1008 = vrot.lane.b32.xlu0 %v1004, 64
  %v1009 = vpop.permute.xlu0 %1008
  %1010 = vrot.lane.b32.xlu0 %v1005, 64
  %v1011 = vpop.permute.xlu0 %1010
  %v1014 = vadd.f32 %v945, %v1009
  %v1015 = vadd.f32 %v947, %v1011
  %v1016 = vtanh.pop %v1014
  %v1017 = vtanh.pop %v1015
  %v1018 = vsub.f32 1.0, %v992
  %v1019 = vsub.f32 1.0, %v993
  %1022 = vrot.lane.b32.xlu0 %v1016, 96
  %v1023 = vpop.permute.xlu0 %1022
  %1024 = vrot.lane.b32.xlu0 %v1017, 96
  %v1025 = vpop.permute.xlu0 %1024
  %v1028 = vmul.f32 %v1018, %v1023
  %v1029 = vmul.f32 %v1019, %v1025
  %v1030 = vmul.f32 %v992, %v847
  %v1031 = vmul.f32 %v993, %v848
  %v1032 = vadd.f32 %v1028, %v1030
  %v1033 = vadd.f32 %v1029, %v1031
  %vm1034 = vcmp.gt.s32.totalorder %v401, 5
  %vm1035 = vcmp.gt.s32.totalorder %v402, 5
  %v1036 = vsel %vm1034, 1, 0
  %v1037 = vsel %vm1035, 1, 0
  %1038 = vset.pattern.permute.xlu0 0
  %1039 = vperm.xlu0 %1038, %v1036
  %v1040 = vpop.permute.xlu0 %1039
  %1041 = vset.pattern.permute.xlu0 0
  %1042 = vperm.xlu0 %1041, %v1037
  %v1043 = vpop.permute.xlu0 %1042
  %vm1044 = vcmp.eq.s32.totalorder %v1040, 1
  %vm1045 = vcmp.eq.s32.totalorder %v1043, 1
  %v1046 = vsel %vm1044, %v1032, %v847
  %v1047 = vsel %vm1045, %v1033, %v848
  %s1048 = scalar_lea.vmem [#allocation2], 48
  %v1049 = vld [vmem:[%s1048] sm:$0xff]
  %v1050 = vld [vmem:[%s1048 + $0x8] sm:$0xff]
  %v1051 = vunpack.c.l.bf16 %v1049
  %v1052 = vunpack.c.h.bf16 %v1049
  %v1053 = vunpack.c.l.bf16 %v1050
  %v1054 = vunpack.c.h.bf16 %v1050
  %v1055 = vpack.c.bf16 %v940, %v939
  %1057 = vrot.lane.b32.xlu0 %v1055, 96
  %v1058 = vpop.permute.xlu0 %1057
  %v1060 = vsel %vm240, %v1058, 0
  %1062 = vmatpush.bf16.msra.mxu0 0
  %1063 = vmatpush.bf16.msra.mxu0 0
  %1064 = vmatpush.bf16.msra.mxu0 0
  %1065 = vmatpush.bf16.msra.mxu0 0
  %1066 = vmatpush.bf16.msra.mxu0 0
  %1067 = vmatpush.bf16.msra.mxu0 0
  %1068 = vmatpush.bf16.msra.mxu0 %v433
  %1069 = vmatpush.bf16.msra.mxu0 %v432
  %1070 = vmatmul.bf16.gmra.mxu0 %v1060
  %v1071 = vpop.f32.mrf.mxu0
  %v1072 = vadd.f32 0.0, %v1071
  %v1073 = vpop.f32.mrf.mxu0
  %v1074 = vadd.f32 0.0, %v1073
  %1075 = vdwg.mxu0
  %v1076 = vadd.f32 %v1051, %v1072
  %v1077 = vadd.f32 %v1053, %v1074
  %v1078 = vmul.f32 %v1076, 0.5
  %v1079 = vmul.f32 %v1077, 0.5
  %v1080 = vtanh.pop %v1078
  %v1081 = vtanh.pop %v1079
  %v1082 = vadd.f32 %v1080, 1.0
  %v1083 = vadd.f32 %v1081, 1.0
  %v1084 = vmul.f32 %v1082, 0.5
  %v1085 = vmul.f32 %v1083, 0.5
  %v1086 = vadd.f32 %v1072, %v466
  %v1087 = vadd.f32 %v1074, %v466
  %1090 = vrot.lane.b32.xlu0 %v1086, 64
  %v1091 = vpop.permute.xlu0 %1090
  %1092 = vrot.lane.b32.xlu0 %v1087, 64
  %v1093 = vpop.permute.xlu0 %1092
  %v1096 = vmul.f32 %v1084, %v1091
  %v1097 = vmul.f32 %v1085, %v1093
  %1100 = vrot.lane.b32.xlu0 %v1096, 64
  %v1101 = vpop.permute.xlu0 %1100
  %1102 = vrot.lane.b32.xlu0 %v1097, 64
  %v1103 = vpop.permute.xlu0 %1102
  %v1106 = vadd.f32 %v1051, %v1101
  %v1107 = vadd.f32 %v1053, %v1103
  %v1108 = vtanh.pop %v1106
  %v1109 = vtanh.pop %v1107
  %v1110 = vsub.f32 1.0, %v1084
  %v1111 = vsub.f32 1.0, %v1085
  %1114 = vrot.lane.b32.xlu0 %v1108, 96
  %v1115 = vpop.permute.xlu0 %1114
  %1116 = vrot.lane.b32.xlu0 %v1109, 96
  %v1117 = vpop.permute.xlu0 %1116
  %v1120 = vmul.f32 %v1110, %v1115
  %v1121 = vmul.f32 %v1111, %v1117
  %v1122 = vmul.f32 %v1084, %v939
  %v1123 = vmul.f32 %v1085, %v940
  %v1124 = vadd.f32 %v1120, %v1122
  %v1125 = vadd.f32 %v1121, %v1123
  %vm1126 = vcmp.gt.s32.totalorder %v401, 3
  %vm1127 = vcmp.gt.s32.totalorder %v402, 3
  %v1128 = vsel %vm1126, 1, 0
  %v1129 = vsel %vm1127, 1, 0
  %1130 = vset.pattern.permute.xlu0 0
  %1131 = vperm.xlu0 %1130, %v1128
  %v1132 = vpop.permute.xlu0 %1131
  %1133 = vset.pattern.permute.xlu0 0
  %1134 = vperm.xlu0 %1133, %v1129
  %v1135 = vpop.permute.xlu0 %1134
  %vm1136 = vcmp.eq.s32.totalorder %v1132, 1
  %vm1137 = vcmp.eq.s32.totalorder %v1135, 1
  %v1138 = vsel %vm1136, %v1124, %v939
  %v1139 = vsel %vm1137, %v1125, %v940
  %s1140 = scalar_lea.vmem [#allocation2], 64
  %v1141 = vld [vmem:[%s1140] sm:$0xff]
  %v1142 = vld [vmem:[%s1140 + $0x8] sm:$0xff]
  %v1143 = vunpack.c.l.bf16 %v1141
  %v1144 = vunpack.c.h.bf16 %v1141
  %v1145 = vunpack.c.l.bf16 %v1142
  %v1146 = vunpack.c.h.bf16 %v1142
  %v1147 = vpack.c.bf16 %v1047, %v1046
  %v1149 = vsel %vm240, %v1147, 0
  %1151 = vmatpush.bf16.msra.mxu0 0
  %1152 = vmatpush.bf16.msra.mxu0 0
  %1153 = vmatpush.bf16.msra.mxu0 0
  %1154 = vmatpush.bf16.msra.mxu0 0
  %1155 = vmatpush.bf16.msra.mxu0 0
  %1156 = vmatpush.bf16.msra.mxu0 0
  %1157 = vmatpush.bf16.msra.mxu0 %v543
  %1158 = vmatpush.bf16.msra.mxu0 %v542
  %1159 = vmatmul.bf16.gmra.mxu0 %v1149
  %v1160 = vpop.f32.mrf.mxu0
  %v1161 = vadd.f32 0.0, %v1160
  %v1162 = vpop.f32.mrf.mxu0
  %v1163 = vadd.f32 0.0, %v1162
  %1164 = vdwg.mxu0
  %1167 = vrot.lane.b32.xlu0 %v1161, 96
  %v1168 = vpop.permute.xlu0 %1167
  %1169 = vrot.lane.b32.xlu0 %v1163, 96
  %v1170 = vpop.permute.xlu0 %1169
  %v1173 = vadd.f32 %v1143, %v1168
  %v1174 = vadd.f32 %v1145, %v1170
  %v1175 = vmul.f32 %v1173, 0.5
  %v1176 = vmul.f32 %v1174, 0.5
  %v1177 = vtanh.pop %v1175
  %v1178 = vtanh.pop %v1176
  %v1179 = vadd.f32 %v1177, 1.0
  %v1180 = vadd.f32 %v1178, 1.0
  %v1181 = vmul.f32 %v1179, 0.5
  %v1182 = vmul.f32 %v1180, 0.5
  %v1183 = vadd.f32 %v1144, %v1168
  %v1184 = vadd.f32 %v1146, %v1170
  %v1185 = vmul.f32 %v1183, 0.5
  %v1186 = vmul.f32 %v1184, 0.5
  %v1187 = vtanh.pop %v1185
  %v1188 = vtanh.pop %v1186
  %v1189 = vadd.f32 %v1187, 1.0
  %v1190 = vadd.f32 %v1188, 1.0
  %v1191 = vmul.f32 %v1189, 0.5
  %v1192 = vmul.f32 %v1190, 0.5
  %v1193 = vadd.f32 %v1161, %v594
  %v1194 = vadd.f32 %v1163, %v594
  %1197 = vrot.lane.b32.xlu0 %v1193, 32
  %v1198 = vpop.permute.xlu0 %1197
  %1199 = vrot.lane.b32.xlu0 %v1194, 32
  %v1200 = vpop.permute.xlu0 %1199
  %v1203 = vmul.f32 %v1181, %v1198
  %v1204 = vmul.f32 %v1182, %v1200
  %1207 = vrot.lane.b32.xlu0 %v1203, 64
  %v1208 = vpop.permute.xlu0 %1207
  %1209 = vrot.lane.b32.xlu0 %v1204, 64
  %v1210 = vpop.permute.xlu0 %1209
  %v1213 = vadd.f32 %v1144, %v1208
  %v1214 = vadd.f32 %v1146, %v1210
  %v1215 = vtanh.pop %v1213
  %v1216 = vtanh.pop %v1214
  %v1217 = vsub.f32 1.0, %v1191
  %v1218 = vsub.f32 1.0, %v1192
  %1221 = vrot.lane.b32.xlu0 %v1215, 96
  %v1222 = vpop.permute.xlu0 %1221
  %1223 = vrot.lane.b32.xlu0 %v1216, 96
  %v1224 = vpop.permute.xlu0 %1223
  %v1227 = vmul.f32 %v1217, %v1222
  %v1228 = vmul.f32 %v1218, %v1224
  %v1229 = vmul.f32 %v1191, %v1046
  %v1230 = vmul.f32 %v1192, %v1047
  %v1231 = vadd.f32 %v1227, %v1229
  %v1232 = vadd.f32 %v1228, %v1230
  %vm1233 = vcmp.gt.s32.totalorder %v401, 4
  %vm1234 = vcmp.gt.s32.totalorder %v402, 4
  %v1235 = vsel %vm1233, 1, 0
  %v1236 = vsel %vm1234, 1, 0
  %1237 = vset.pattern.permute.xlu0 0
  %1238 = vperm.xlu0 %1237, %v1235
  %v1239 = vpop.permute.xlu0 %1238
  %1240 = vset.pattern.permute.xlu0 0
  %1241 = vperm.xlu0 %1240, %v1236
  %v1242 = vpop.permute.xlu0 %1241
  %vm1243 = vcmp.eq.s32.totalorder %v1239, 1
  %vm1244 = vcmp.eq.s32.totalorder %v1242, 1
  %v1245 = vsel %vm1243, %v1231, %v1046
  %v1246 = vsel %vm1244, %v1232, %v1047
  %v1247 = vpack.c.bf16 %v1139, %v1138
  %1249 = vrot.lane.b32.xlu0 %v1247, 96
  %v1250 = vpop.permute.xlu0 %1249
  %v1252 = vsel %vm240, %v1250, 0
  %1254 = vmatpush.bf16.msra.mxu0 0
  %1255 = vmatpush.bf16.msra.mxu0 0
  %1256 = vmatpush.bf16.msra.mxu0 0
  %1257 = vmatpush.bf16.msra.mxu0 0
  %1258 = vmatpush.bf16.msra.mxu0 0
  %1259 = vmatpush.bf16.msra.mxu0 0
  %1260 = vmatpush.bf16.msra.mxu0 %v433
  %1261 = vmatpush.bf16.msra.mxu0 %v432
  %1262 = vmatmul.bf16.gmra.mxu0 %v1252
  %v1263 = vpop.f32.mrf.mxu0
  %v1264 = vadd.f32 0.0, %v1263
  %v1265 = vpop.f32.mrf.mxu0
  %v1266 = vadd.f32 0.0, %v1265
  %1267 = vdwg.mxu0
  %v1268 = vadd.f32 %v1143, %v1264
  %v1269 = vadd.f32 %v1145, %v1266
  %v1270 = vmul.f32 %v1268, 0.5
  %v1271 = vmul.f32 %v1269, 0.5
  %v1272 = vtanh.pop %v1270
  %v1273 = vtanh.pop %v1271
  %v1274 = vadd.f32 %v1272, 1.0
  %v1275 = vadd.f32 %v1273, 1.0
  %v1276 = vmul.f32 %v1274, 0.5
  %v1277 = vmul.f32 %v1275, 0.5
  %v1278 = vadd.f32 %v1264, %v466
  %v1279 = vadd.f32 %v1266, %v466
  %1282 = vrot.lane.b32.xlu0 %v1278, 64
  %v1283 = vpop.permute.xlu0 %1282
  %1284 = vrot.lane.b32.xlu0 %v1279, 64
  %v1285 = vpop.permute.xlu0 %1284
  %v1288 = vmul.f32 %v1276, %v1283
  %v1289 = vmul.f32 %v1277, %v1285
  %1292 = vrot.lane.b32.xlu0 %v1288, 64
  %v1293 = vpop.permute.xlu0 %1292
  %1294 = vrot.lane.b32.xlu0 %v1289, 64
  %v1295 = vpop.permute.xlu0 %1294
  %v1298 = vadd.f32 %v1143, %v1293
  %v1299 = vadd.f32 %v1145, %v1295
  %v1300 = vtanh.pop %v1298
  %v1301 = vtanh.pop %v1299
  %v1302 = vsub.f32 1.0, %v1276
  %v1303 = vsub.f32 1.0, %v1277
  %1306 = vrot.lane.b32.xlu0 %v1300, 96
  %v1307 = vpop.permute.xlu0 %1306
  %1308 = vrot.lane.b32.xlu0 %v1301, 96
  %v1309 = vpop.permute.xlu0 %1308
  %v1312 = vmul.f32 %v1302, %v1307
  %v1313 = vmul.f32 %v1303, %v1309
  %v1314 = vmul.f32 %v1276, %v1138
  %v1315 = vmul.f32 %v1277, %v1139
  %v1316 = vadd.f32 %v1312, %v1314
  %v1317 = vadd.f32 %v1313, %v1315
  %v1318 = vsel %vm1243, %v1316, %v1138
  %v1319 = vsel %vm1244, %v1317, %v1139
  %v1320 = vpack.c.bf16 %v1246, %v1245
  %v1322 = vsel %vm240, %v1320, 0
  %1324 = vmatpush.bf16.msra.mxu0 0
  %1325 = vmatpush.bf16.msra.mxu0 0
  %1326 = vmatpush.bf16.msra.mxu0 0
  %1327 = vmatpush.bf16.msra.mxu0 0
  %1328 = vmatpush.bf16.msra.mxu0 0
  %1329 = vmatpush.bf16.msra.mxu0 0
  %1330 = vmatpush.bf16.msra.mxu0 %v543
  %1331 = vmatpush.bf16.msra.mxu0 %v542
  %1332 = vmatmul.bf16.gmra.mxu0 %v1322
  %v1333 = vpop.f32.mrf.mxu0
  %v1334 = vadd.f32 0.0, %v1333
  %v1335 = vpop.f32.mrf.mxu0
  %v1336 = vadd.f32 0.0, %v1335
  %1337 = vdwg.mxu0
  %1340 = vrot.lane.b32.xlu0 %v1334, 96
  %v1341 = vpop.permute.xlu0 %1340
  %1342 = vrot.lane.b32.xlu0 %v1336, 96
  %v1343 = vpop.permute.xlu0 %1342
  %v1346 = vadd.f32 %v1051, %v1341
  %v1347 = vadd.f32 %v1053, %v1343
  %v1348 = vmul.f32 %v1346, 0.5
  %v1349 = vmul.f32 %v1347, 0.5
  %v1350 = vtanh.pop %v1348
  %v1351 = vtanh.pop %v1349
  %v1352 = vadd.f32 %v1350, 1.0
  %v1353 = vadd.f32 %v1351, 1.0
  %v1354 = vmul.f32 %v1352, 0.5
  %v1355 = vmul.f32 %v1353, 0.5
  %v1356 = vadd.f32 %v1052, %v1341
  %v1357 = vadd.f32 %v1054, %v1343
  %v1358 = vmul.f32 %v1356, 0.5
  %v1359 = vmul.f32 %v1357, 0.5
  %v1360 = vtanh.pop %v1358
  %v1361 = vtanh.pop %v1359
  %v1362 = vadd.f32 %v1360, 1.0
  %v1363 = vadd.f32 %v1361, 1.0
  %v1364 = vmul.f32 %v1362, 0.5
  %v1365 = vmul.f32 %v1363, 0.5
  %v1366 = vadd.f32 %v1334, %v594
  %v1367 = vadd.f32 %v1336, %v594
  %1370 = vrot.lane.b32.xlu0 %v1366, 32
  %v1371 = vpop.permute.xlu0 %1370
  %1372 = vrot.lane.b32.xlu0 %v1367, 32
  %v1373 = vpop.permute.xlu0 %1372
  %v1376 = vmul.f32 %v1354, %v1371
  %v1377 = vmul.f32 %v1355, %v1373
  %1380 = vrot.lane.b32.xlu0 %v1376, 64
  %v1381 = vpop.permute.xlu0 %1380
  %1382 = vrot.lane.b32.xlu0 %v1377, 64
  %v1383 = vpop.permute.xlu0 %1382
  %v1386 = vadd.f32 %v1052, %v1381
  %v1387 = vadd.f32 %v1054, %v1383
  %v1388 = vtanh.pop %v1386
  %v1389 = vtanh.pop %v1387
  %v1390 = vsub.f32 1.0, %v1364
  %v1391 = vsub.f32 1.0, %v1365
  %1394 = vrot.lane.b32.xlu0 %v1388, 96
  %v1395 = vpop.permute.xlu0 %1394
  %1396 = vrot.lane.b32.xlu0 %v1389, 96
  %v1397 = vpop.permute.xlu0 %1396
  %v1400 = vmul.f32 %v1390, %v1395
  %v1401 = vmul.f32 %v1391, %v1397
  %v1402 = vmul.f32 %v1364, %v1245
  %v1403 = vmul.f32 %v1365, %v1246
  %v1404 = vadd.f32 %v1400, %v1402
  %v1405 = vadd.f32 %v1401, %v1403
  %v1406 = vsel %vm1136, %v1404, %v1245
  %v1407 = vsel %vm1137, %v1405, %v1246
  %v1408 = vpack.c.bf16 %v1319, %v1318
  %1410 = vrot.lane.b32.xlu0 %v1408, 96
  %v1411 = vpop.permute.xlu0 %1410
  %v1413 = vsel %vm240, %v1411, 0
  %1415 = vmatpush.bf16.msra.mxu0 0
  %1416 = vmatpush.bf16.msra.mxu0 0
  %1417 = vmatpush.bf16.msra.mxu0 0
  %1418 = vmatpush.bf16.msra.mxu0 0
  %1419 = vmatpush.bf16.msra.mxu0 0
  %1420 = vmatpush.bf16.msra.mxu0 0
  %1421 = vmatpush.bf16.msra.mxu0 %v433
  %1422 = vmatpush.bf16.msra.mxu0 %v432
  %1423 = vmatmul.bf16.gmra.mxu0 %v1413
  %v1424 = vpop.f32.mrf.mxu0
  %v1425 = vadd.f32 0.0, %v1424
  %v1426 = vpop.f32.mrf.mxu0
  %v1427 = vadd.f32 0.0, %v1426
  %1428 = vdwg.mxu0
  %v1429 = vadd.f32 %v944, %v1425
  %v1430 = vadd.f32 %v946, %v1427
  %v1431 = vmul.f32 %v1429, 0.5
  %v1432 = vmul.f32 %v1430, 0.5
  %v1433 = vtanh.pop %v1431
  %v1434 = vtanh.pop %v1432
  %v1435 = vadd.f32 %v1433, 1.0
  %v1436 = vadd.f32 %v1434, 1.0
  %v1437 = vmul.f32 %v1435, 0.5
  %v1438 = vmul.f32 %v1436, 0.5
  %v1439 = vadd.f32 %v1425, %v466
  %v1440 = vadd.f32 %v1427, %v466
  %1443 = vrot.lane.b32.xlu0 %v1439, 64
  %v1444 = vpop.permute.xlu0 %1443
  %1445 = vrot.lane.b32.xlu0 %v1440, 64
  %v1446 = vpop.permute.xlu0 %1445
  %v1449 = vmul.f32 %v1437, %v1444
  %v1450 = vmul.f32 %v1438, %v1446
  %1453 = vrot.lane.b32.xlu0 %v1449, 64
  %v1454 = vpop.permute.xlu0 %1453
  %1455 = vrot.lane.b32.xlu0 %v1450, 64
  %v1456 = vpop.permute.xlu0 %1455
  %v1459 = vadd.f32 %v944, %v1454
  %v1460 = vadd.f32 %v946, %v1456
  %v1461 = vtanh.pop %v1459
  %v1462 = vtanh.pop %v1460
  %v1463 = vsub.f32 1.0, %v1437
  %v1464 = vsub.f32 1.0, %v1438
  %1467 = vrot.lane.b32.xlu0 %v1461, 96
  %v1468 = vpop.permute.xlu0 %1467
  %1469 = vrot.lane.b32.xlu0 %v1462, 96
  %v1470 = vpop.permute.xlu0 %1469
  %v1473 = vmul.f32 %v1463, %v1468
  %v1474 = vmul.f32 %v1464, %v1470
  %v1475 = vmul.f32 %v1437, %v1318
  %v1476 = vmul.f32 %v1438, %v1319
  %v1477 = vadd.f32 %v1473, %v1475
  %v1478 = vadd.f32 %v1474, %v1476
  %v1479 = vsel %vm1044, %v1477, %v1318
  %v1480 = vsel %vm1045, %v1478, %v1319
  %v1481 = vpack.c.bf16 %v1407, %v1406
  %v1483 = vsel %vm240, %v1481, 0
  %1485 = vmatpush.bf16.msra.mxu0 0
  %1486 = vmatpush.bf16.msra.mxu0 0
  %1487 = vmatpush.bf16.msra.mxu0 0
  %1488 = vmatpush.bf16.msra.mxu0 0
  %1489 = vmatpush.bf16.msra.mxu0 0
  %1490 = vmatpush.bf16.msra.mxu0 0
  %1491 = vmatpush.bf16.msra.mxu0 %v543
  %1492 = vmatpush.bf16.msra.mxu0 %v542
  %1493 = vmatmul.bf16.gmra.mxu0 %v1483
  %v1494 = vpop.f32.mrf.mxu0
  %v1495 = vadd.f32 0.0, %v1494
  %v1496 = vpop.f32.mrf.mxu0
  %v1497 = vadd.f32 0.0, %v1496
  %1498 = vdwg.mxu0
  %1501 = vrot.lane.b32.xlu0 %v1495, 96
  %v1502 = vpop.permute.xlu0 %1501
  %1503 = vrot.lane.b32.xlu0 %v1497, 96
  %v1504 = vpop.permute.xlu0 %1503
  %v1507 = vadd.f32 %v852, %v1502
  %v1508 = vadd.f32 %v854, %v1504
  %v1509 = vmul.f32 %v1507, 0.5
  %v1510 = vmul.f32 %v1508, 0.5
  %v1511 = vtanh.pop %v1509
  %v1512 = vtanh.pop %v1510
  %v1513 = vadd.f32 %v1511, 1.0
  %v1514 = vadd.f32 %v1512, 1.0
  %v1515 = vmul.f32 %v1513, 0.5
  %v1516 = vmul.f32 %v1514, 0.5
  %v1517 = vadd.f32 %v853, %v1502
  %v1518 = vadd.f32 %v855, %v1504
  %v1519 = vmul.f32 %v1517, 0.5
  %v1520 = vmul.f32 %v1518, 0.5
  %v1521 = vtanh.pop %v1519
  %v1522 = vtanh.pop %v1520
  %v1523 = vadd.f32 %v1521, 1.0
  %v1524 = vadd.f32 %v1522, 1.0
  %v1525 = vmul.f32 %v1523, 0.5
  %v1526 = vmul.f32 %v1524, 0.5
  %v1527 = vadd.f32 %v1495, %v594
  %v1528 = vadd.f32 %v1497, %v594
  %1531 = vrot.lane.b32.xlu0 %v1527, 32
  %v1532 = vpop.permute.xlu0 %1531
  %1533 = vrot.lane.b32.xlu0 %v1528, 32
  %v1534 = vpop.permute.xlu0 %1533
  %v1537 = vmul.f32 %v1515, %v1532
  %v1538 = vmul.f32 %v1516, %v1534
  %1541 = vrot.lane.b32.xlu0 %v1537, 64
  %v1542 = vpop.permute.xlu0 %1541
  %1543 = vrot.lane.b32.xlu0 %v1538, 64
  %v1544 = vpop.permute.xlu0 %1543
  %v1547 = vadd.f32 %v853, %v1542
  %v1548 = vadd.f32 %v855, %v1544
  %v1549 = vtanh.pop %v1547
  %v1550 = vtanh.pop %v1548
  %v1551 = vsub.f32 1.0, %v1525
  %v1552 = vsub.f32 1.0, %v1526
  %1555 = vrot.lane.b32.xlu0 %v1549, 96
  %v1556 = vpop.permute.xlu0 %1555
  %1557 = vrot.lane.b32.xlu0 %v1550, 96
  %v1558 = vpop.permute.xlu0 %1557
  %v1561 = vmul.f32 %v1551, %v1556
  %v1562 = vmul.f32 %v1552, %v1558
  %v1563 = vmul.f32 %v1525, %v1406
  %v1564 = vmul.f32 %v1526, %v1407
  %v1565 = vadd.f32 %v1561, %v1563
  %v1566 = vadd.f32 %v1562, %v1564
  %v1567 = vsel %vm937, %v1565, %v1406
  %v1568 = vsel %vm938, %v1566, %v1407
  %v1569 = vpack.c.bf16 %v1480, %v1479
  %1571 = vrot.lane.b32.xlu0 %v1569, 96
  %v1572 = vpop.permute.xlu0 %1571
  %v1574 = vsel %vm240, %v1572, 0
  %1576 = vmatpush.bf16.msra.mxu0 0
  %1577 = vmatpush.bf16.msra.mxu0 0
  %1578 = vmatpush.bf16.msra.mxu0 0
  %1579 = vmatpush.bf16.msra.mxu0 0
  %1580 = vmatpush.bf16.msra.mxu0 0
  %1581 = vmatpush.bf16.msra.mxu0 0
  %1582 = vmatpush.bf16.msra.mxu0 %v433
  %1583 = vmatpush.bf16.msra.mxu0 %v432
  %1584 = vmatmul.bf16.gmra.mxu0 %v1574
  %v1585 = vpop.f32.mrf.mxu0
  %v1586 = vadd.f32 0.0, %v1585
  %v1587 = vpop.f32.mrf.mxu0
  %v1588 = vadd.f32 0.0, %v1587
  %1589 = vdwg.mxu0
  %v1590 = vadd.f32 %v745, %v1586
  %v1591 = vadd.f32 %v747, %v1588
  %v1592 = vmul.f32 %v1590, 0.5
  %v1593 = vmul.f32 %v1591, 0.5
  %v1594 = vtanh.pop %v1592
  %v1595 = vtanh.pop %v1593
  %v1596 = vadd.f32 %v1594, 1.0
  %v1597 = vadd.f32 %v1595, 1.0
  %v1598 = vmul.f32 %v1596, 0.5
  %v1599 = vmul.f32 %v1597, 0.5
  %v1600 = vadd.f32 %v1586, %v466
  %v1601 = vadd.f32 %v1588, %v466
  %1604 = vrot.lane.b32.xlu0 %v1600, 64
  %v1605 = vpop.permute.xlu0 %1604
  %1606 = vrot.lane.b32.xlu0 %v1601, 64
  %v1607 = vpop.permute.xlu0 %1606
  %v1610 = vmul.f32 %v1598, %v1605
  %v1611 = vmul.f32 %v1599, %v1607
  %1614 = vrot.lane.b32.xlu0 %v1610, 64
  %v1615 = vpop.permute.xlu0 %1614
  %1616 = vrot.lane.b32.xlu0 %v1611, 64
  %v1617 = vpop.permute.xlu0 %1616
  %v1620 = vadd.f32 %v745, %v1615
  %v1621 = vadd.f32 %v747, %v1617
  %v1622 = vtanh.pop %v1620
  %v1623 = vtanh.pop %v1621
  %v1624 = vsub.f32 1.0, %v1598
  %v1625 = vsub.f32 1.0, %v1599
  %1628 = vrot.lane.b32.xlu0 %v1622, 96
  %v1629 = vpop.permute.xlu0 %1628
  %1630 = vrot.lane.b32.xlu0 %v1623, 96
  %v1631 = vpop.permute.xlu0 %1630
  %v1634 = vmul.f32 %v1624, %v1629
  %v1635 = vmul.f32 %v1625, %v1631
  %v1636 = vmul.f32 %v1598, %v1479
  %v1637 = vmul.f32 %v1599, %v1480
  %v1638 = vadd.f32 %v1634, %v1636
  %v1639 = vadd.f32 %v1635, %v1637
  %v1640 = vsel %vm845, %v1638, %v1479
  %v1641 = vsel %vm846, %v1639, %v1480
  %v1642 = vpack.c.bf16 %v1568, %v1567
  %v1644 = vsel %vm240, %v1642, 0
  %1646 = vmatpush.bf16.msra.mxu0 0
  %1647 = vmatpush.bf16.msra.mxu0 0
  %1648 = vmatpush.bf16.msra.mxu0 0
  %1649 = vmatpush.bf16.msra.mxu0 0
  %1650 = vmatpush.bf16.msra.mxu0 0
  %1651 = vmatpush.bf16.msra.mxu0 0
  %1652 = vmatpush.bf16.msra.mxu0 %v543
  %1653 = vmatpush.bf16.msra.mxu0 %v542
  %1654 = vmatmul.bf16.gmra.mxu0 %v1644
  %v1655 = vpop.f32.mrf.mxu0
  %v1656 = vadd.f32 0.0, %v1655
  %v1657 = vpop.f32.mrf.mxu0
  %v1658 = vadd.f32 0.0, %v1657
  %1659 = vdwg.mxu0
  %1662 = vrot.lane.b32.xlu0 %v1656, 96
  %v1663 = vpop.permute.xlu0 %1662
  %1664 = vrot.lane.b32.xlu0 %v1658, 96
  %v1665 = vpop.permute.xlu0 %1664
  %v1668 = vadd.f32 %v653, %v1663
  %v1669 = vadd.f32 %v655, %v1665
  %v1670 = vmul.f32 %v1668, 0.5
  %v1671 = vmul.f32 %v1669, 0.5
  %v1672 = vtanh.pop %v1670
  %v1673 = vtanh.pop %v1671
  %v1674 = vadd.f32 %v1672, 1.0
  %v1675 = vadd.f32 %v1673, 1.0
  %v1676 = vmul.f32 %v1674, 0.5
  %v1677 = vmul.f32 %v1675, 0.5
  %v1678 = vadd.f32 %v654, %v1663
  %v1679 = vadd.f32 %v656, %v1665
  %v1680 = vmul.f32 %v1678, 0.5
  %v1681 = vmul.f32 %v1679, 0.5
  %v1682 = vtanh.pop %v1680
  %v1683 = vtanh.pop %v1681
  %v1684 = vadd.f32 %v1682, 1.0
  %v1685 = vadd.f32 %v1683, 1.0
  %v1686 = vmul.f32 %v1684, 0.5
  %v1687 = vmul.f32 %v1685, 0.5
  %v1688 = vadd.f32 %v1656, %v594
  %v1689 = vadd.f32 %v1658, %v594
  %1692 = vrot.lane.b32.xlu0 %v1688, 32
  %v1693 = vpop.permute.xlu0 %1692
  %1694 = vrot.lane.b32.xlu0 %v1689, 32
  %v1695 = vpop.permute.xlu0 %1694
  %v1698 = vmul.f32 %v1676, %v1693
  %v1699 = vmul.f32 %v1677, %v1695
  %1702 = vrot.lane.b32.xlu0 %v1698, 64
  %v1703 = vpop.permute.xlu0 %1702
  %1704 = vrot.lane.b32.xlu0 %v1699, 64
  %v1705 = vpop.permute.xlu0 %1704
  %v1708 = vadd.f32 %v654, %v1703
  %v1709 = vadd.f32 %v656, %v1705
  %v1710 = vtanh.pop %v1708
  %v1711 = vtanh.pop %v1709
  %v1712 = vsub.f32 1.0, %v1686
  %v1713 = vsub.f32 1.0, %v1687
  %1716 = vrot.lane.b32.xlu0 %v1710, 96
  %v1717 = vpop.permute.xlu0 %1716
  %1718 = vrot.lane.b32.xlu0 %v1711, 96
  %v1719 = vpop.permute.xlu0 %1718
  %v1722 = vmul.f32 %v1712, %v1717
  %v1723 = vmul.f32 %v1713, %v1719
  %v1724 = vmul.f32 %v1686, %v1567
  %v1725 = vmul.f32 %v1687, %v1568
  %v1726 = vadd.f32 %v1722, %v1724
  %v1727 = vadd.f32 %v1723, %v1725
  %v1728 = vsel %vm738, %v1726, %v1567
  %v1729 = vsel %vm739, %v1727, %v1568
  %v1730 = vpack.c.bf16 %v1641, %v1640
  %1732 = vrot.lane.b32.xlu0 %v1730, 96
  %v1733 = vpop.permute.xlu0 %1732
  %v1735 = vsel %vm240, %v1733, 0
  %1737 = vmatpush.bf16.msra.mxu0 0
  %1738 = vmatpush.bf16.msra.mxu0 0
  %1739 = vmatpush.bf16.msra.mxu0 0
  %1740 = vmatpush.bf16.msra.mxu0 0
  %1741 = vmatpush.bf16.msra.mxu0 0
  %1742 = vmatpush.bf16.msra.mxu0 0
  %1743 = vmatpush.bf16.msra.mxu0 %v433
  %1744 = vmatpush.bf16.msra.mxu0 %v432
  %1745 = vmatmul.bf16.gmra.mxu0 %v1735
  %v1746 = vpop.f32.mrf.mxu0
  %v1747 = vadd.f32 0.0, %v1746
  %v1748 = vpop.f32.mrf.mxu0
  %v1749 = vadd.f32 0.0, %v1748
  %1750 = vdwg.mxu0
  %v1751 = vadd.f32 %v529, %v1747
  %v1752 = vadd.f32 %v531, %v1749
  %v1753 = vmul.f32 %v1751, 0.5
  %v1754 = vmul.f32 %v1752, 0.5
  %v1755 = vtanh.pop %v1753
  %v1756 = vtanh.pop %v1754
  %v1757 = vadd.f32 %v1755, 1.0
  %v1758 = vadd.f32 %v1756, 1.0
  %v1759 = vmul.f32 %v1757, 0.5
  %v1760 = vmul.f32 %v1758, 0.5
  %v1761 = vadd.f32 %v1747, %v466
  %v1762 = vadd.f32 %v1749, %v466
  %1765 = vrot.lane.b32.xlu0 %v1761, 64
  %v1766 = vpop.permute.xlu0 %1765
  %1767 = vrot.lane.b32.xlu0 %v1762, 64
  %v1768 = vpop.permute.xlu0 %1767
  %v1771 = vmul.f32 %v1759, %v1766
  %v1772 = vmul.f32 %v1760, %v1768
  %1775 = vrot.lane.b32.xlu0 %v1771, 64
  %v1776 = vpop.permute.xlu0 %1775
  %1777 = vrot.lane.b32.xlu0 %v1772, 64
  %v1778 = vpop.permute.xlu0 %1777
  %v1781 = vadd.f32 %v529, %v1776
  %v1782 = vadd.f32 %v531, %v1778
  %v1783 = vtanh.pop %v1781
  %v1784 = vtanh.pop %v1782
  %v1785 = vsub.f32 1.0, %v1759
  %v1786 = vsub.f32 1.0, %v1760
  %1789 = vrot.lane.b32.xlu0 %v1783, 96
  %v1790 = vpop.permute.xlu0 %1789
  %1791 = vrot.lane.b32.xlu0 %v1784, 96
  %v1792 = vpop.permute.xlu0 %1791
  %v1795 = vmul.f32 %v1785, %v1790
  %v1796 = vmul.f32 %v1786, %v1792
  %v1797 = vmul.f32 %v1759, %v1640
  %v1798 = vmul.f32 %v1760, %v1641
  %v1799 = vadd.f32 %v1795, %v1797
  %v1800 = vadd.f32 %v1796, %v1798
  %v1801 = vsel %vm646, %v1799, %v1640
  %v1802 = vsel %vm647, %v1800, %v1641
  %v1803 = vpack.c.bf16 %v1729, %v1728
  %v1805 = vsel %vm240, %v1803, 0
  %1807 = vmatpush.bf16.msra.mxu0 0
  %1808 = vmatpush.bf16.msra.mxu0 0
  %1809 = vmatpush.bf16.msra.mxu0 0
  %1810 = vmatpush.bf16.msra.mxu0 0
  %1811 = vmatpush.bf16.msra.mxu0 0
  %1812 = vmatpush.bf16.msra.mxu0 0
  %1813 = vmatpush.bf16.msra.mxu0 %v543
  %1814 = vmatpush.bf16.msra.mxu0 %v542
  %1815 = vmatmul.bf16.gmra.mxu0 %v1805
  %v1816 = vpop.f32.mrf.mxu0
  %v1817 = vadd.f32 0.0, %v1816
  %v1818 = vpop.f32.mrf.mxu0
  %v1819 = vadd.f32 0.0, %v1818
  %1820 = vdwg.mxu0
  %1823 = vrot.lane.b32.xlu0 %v1817, 96
  %v1824 = vpop.permute.xlu0 %1823
  %1825 = vrot.lane.b32.xlu0 %v1819, 96
  %v1826 = vpop.permute.xlu0 %1825
  %v1829 = vadd.f32 %v419, %v1824
  %v1830 = vadd.f32 %v421, %v1826
  %v1831 = vmul.f32 %v1829, 0.5
  %v1832 = vmul.f32 %v1830, 0.5
  %v1833 = vtanh.pop %v1831
  %v1834 = vtanh.pop %v1832
  %v1835 = vadd.f32 %v1833, 1.0
  %v1836 = vadd.f32 %v1834, 1.0
  %v1837 = vmul.f32 %v1835, 0.5
  %v1838 = vmul.f32 %v1836, 0.5
  %v1839 = vadd.f32 %v420, %v1824
  %v1840 = vadd.f32 %v422, %v1826
  %v1841 = vmul.f32 %v1839, 0.5
  %v1842 = vmul.f32 %v1840, 0.5
  %v1843 = vtanh.pop %v1841
  %v1844 = vtanh.pop %v1842
  %v1845 = vadd.f32 %v1843, 1.0
  %v1846 = vadd.f32 %v1844, 1.0
  %v1847 = vmul.f32 %v1845, 0.5
  %v1848 = vmul.f32 %v1846, 0.5
  %v1849 = vadd.f32 %v1817, %v594
  %v1850 = vadd.f32 %v1819, %v594
  %1853 = vrot.lane.b32.xlu0 %v1849, 32
  %v1854 = vpop.permute.xlu0 %1853
  %1855 = vrot.lane.b32.xlu0 %v1850, 32
  %v1856 = vpop.permute.xlu0 %1855
  %v1859 = vmul.f32 %v1837, %v1854
  %v1860 = vmul.f32 %v1838, %v1856
  %1863 = vrot.lane.b32.xlu0 %v1859, 64
  %v1864 = vpop.permute.xlu0 %1863
  %1865 = vrot.lane.b32.xlu0 %v1860, 64
  %v1866 = vpop.permute.xlu0 %1865
  %v1869 = vadd.f32 %v420, %v1864
  %v1870 = vadd.f32 %v422, %v1866
  %v1871 = vtanh.pop %v1869
  %v1872 = vtanh.pop %v1870
  %v1873 = vsub.f32 1.0, %v1847
  %v1874 = vsub.f32 1.0, %v1848
  %1877 = vrot.lane.b32.xlu0 %v1871, 96
  %v1878 = vpop.permute.xlu0 %1877
  %1879 = vrot.lane.b32.xlu0 %v1872, 96
  %v1880 = vpop.permute.xlu0 %1879
  %v1883 = vmul.f32 %v1873, %v1878
  %v1884 = vmul.f32 %v1874, %v1880
  %v1885 = vmul.f32 %v1847, %v1728
  %v1886 = vmul.f32 %v1848, %v1729
  %v1887 = vadd.f32 %v1883, %v1885
  %v1888 = vadd.f32 %v1884, %v1886
  %v1889 = vsel %vm522, %v1887, %v1728
  %v1890 = vsel %vm523, %v1888, %v1729
  %1893 = vrot.lane.b32.xlu0 %v1801, 96
  %v1894 = vpop.permute.xlu0 %1893
  %1895 = vrot.lane.b32.xlu0 %v1802, 96
  %v1896 = vpop.permute.xlu0 %1895
  %1901 = vrot.lane.b32.xlu0 %v1889, 32
  %v1902 = vpop.permute.xlu0 %1901
  %1903 = vrot.lane.b32.xlu0 %v1890, 32
  %v1904 = vpop.permute.xlu0 %1903
  %v1907 = vsel %vm240, %v1894, %v1902
  %v1908 = vsel %vm240, %v1896, %v1904
  %v1909 = vpack.c.bf16 %v1908, %v1907
  %v1910 = vld [vmem:[%s11] sm:$0xf]
  %v1911 = vld [vmem:[%s11 + $0x4] sm:$0xf]
  %v1912 = vld [vmem:[%s11 + $0x8] sm:$0xf]
  %v1913 = vld [vmem:[%s11 + $0xc] sm:$0xf]
  %v1914 = vld [vmem:[%s11 + $0x10] sm:$0xf]
  %v1915 = vld [vmem:[%s11 + $0x14] sm:$0xf]
  %v1916 = vld [vmem:[%s11 + $0x18] sm:$0xf]
  %v1917 = vld [vmem:[%s11 + $0x1c] sm:$0xf]
  %v1918 = vld [vmem:[%s12] sm:$0x1]
  %v1920 = vperm.slane %v1918, 0
  %v1930 = vunpack.c.l.b16 %v1910
  %v1931 = vunpack.c.l.b16 %v1911
  %v1932 = vunpack.c.l.b16 %v1912
  %v1933 = vunpack.c.l.b16 %v1913
  %v1934 = vunpack.c.l.b16 %v1914
  %v1935 = vunpack.c.l.b16 %v1915
  %v1936 = vunpack.c.l.b16 %v1916
  %v1937 = vunpack.c.l.b16 %v1917
  %v1938 = vpack.c.b16 %v1931, %v1930
  %v1939 = vpack.c.b16 %v1933, %v1932
  %v1940 = vpack.c.b16 %v1935, %v1934
  %v1941 = vpack.c.b16 %v1937, %v1936
  %vm1946 = vcmask 523264
  %v1948 = vsel %vm1946, %v1909, 0
  %1950 = vmatpush.bf16.msra.mxu0 0
  %1951 = vmatpush.bf16.msra.mxu0 0
  %1952 = vmatpush.bf16.msra.mxu0 0
  %1953 = vmatpush.bf16.msra.mxu0 0
  %1954 = vmatpush.bf16.msra.mxu0 %v1941
  %1955 = vmatpush.bf16.msra.mxu0 %v1940
  %1956 = vmatpush.bf16.msra.mxu0 %v1939
  %1957 = vmatpush.bf16.msra.mxu0 %v1938
  %1958 = vmatmul.bf16.gmra.mxu0 %v1948
  %v1959 = vpop.f32.mrf.mxu0
  %v1960 = vadd.f32 %v1920, %v1959
  %v1961 = vpop.f32.mrf.mxu0
  %v1962 = vadd.f32 %v1920, %v1961
  %1963 = vdwg.mxu0
  %v1964 = vsel %vm240, %v1960, 0.0
  %1965 = vadd.xlane.f32.xlu0 %v1964
  %v1966 = vpop.xlane.xlu0 %1965
  %v1967 = vsel %vm240, %v1962, 0.0
  %1968 = vadd.xlane.f32.xlu0 %v1967
  %v1969 = vpop.xlane.xlu0 %1968
  %v1970 = vrcp.pop 32.0
  %v1971 = vmul.f32 32.0, %v1970
  %v1972 = vsub.f32 1.0, %v1971
  %v1973 = vmul.f32 %v1970, %v1972
  %v1974 = vadd.f32 %v1970, %v1973
  %vm1975 = vweird.f32 %v1970
  %v1976 = vsel %vm1975, %v1970, %v1974
  %v1977 = vmul.f32 %v1966, %v1976
  %v1978 = vmul.f32 %v1969, %v1976
  %v1979 = vsub.f32 %v1960, %v1977
  %v1980 = vsub.f32 %v1962, %v1978
  %v1981 = vmul.f32 %v1979, %v1979
  %v1982 = vmul.f32 %v1980, %v1980
  %v1983 = vsel %vm240, %v1981, 0.0
  %1984 = vadd.xlane.f32.xlu0 %v1983
  %v1985 = vpop.xlane.xlu0 %1984
  %v1986 = vsel %vm240, %v1982, 0.0
  %1987 = vadd.xlane.f32.xlu0 %v1986
  %v1988 = vpop.xlane.xlu0 %1987
  %v1989 = vmul.f32 %v1985, %v1976
  %v1990 = vmul.f32 %v1988, %v1976
  %v1991 = vadd.f32 %v1989, 1e-05
  %v1992 = vadd.f32 %v1990, 1e-05
  %v1993 = vrsqrt.pop %v1991
  %v1994 = vmul.f32 %v1993, %v1991
  %v1995 = vmul.f32 %v1994, %v1993
  %v1996 = vmul.f32 0.5, %v1995
  %v1997 = vsub.f32 1.5, %v1996
  %v1998 = vmul.f32 %v1993, %v1997
  %vm1999 = vweird.f32 %v1991
  %vm2000 = vweird.f32 %v1993
  %vm2001 = vmor %vm1999, %vm2000
  %v2002 = vsel %vm2001, %v1993, %v1998
  %v2003 = vrsqrt.pop %v1992
  %v2004 = vmul.f32 %v2003, %v1992
  %v2005 = vmul.f32 %v2004, %v2003
  %v2006 = vmul.f32 0.5, %v2005
  %v2007 = vsub.f32 1.5, %v2006
  %v2008 = vmul.f32 %v2003, %v2007
  %vm2009 = vweird.f32 %v1992
  %vm2010 = vweird.f32 %v2003
  %vm2011 = vmor %vm2009, %vm2010
  %v2012 = vsel %vm2011, %v2003, %v2008
  %v2013 = vmul.f32 %v1979, %v2002
  %v2014 = vmul.f32 %v1980, %v2012
  %v2015 = vld [vmem:[%s13] sm:$0x1]
  %v2017 = vperm.slane %v2015, 0
  %v2019 = vmul.f32 %v2013, %v2017
  %v2020 = vmul.f32 %v2014, %v2017
  %v2021 = vld [vmem:[%s14] sm:$0x1]
  %v2023 = vperm.slane %v2021, 0
  %v2025 = vadd.f32 %v2019, %v2023
  %v2026 = vadd.f32 %v2020, %v2023
  %vm2027 = vcmp.gt.f32.partialorder %v2025, 0.0
  %vm2028 = vcmp.gt.f32.partialorder %v2026, 0.0
  %v2029 = vmul.f32 %v2025, 0.2
  %v2030 = vmul.f32 %v2026, 0.2
  %v2031 = vsel %vm2027, %v2025, %v2029
  %v2032 = vsel %vm2028, %v2026, %v2030
  %v2033 = vpack.c.bf16 %v2032, %v2031
  %v2034 = vld [vmem:[%s15] sm:$0xf]
  %v2035 = vld [vmem:[%s15 + $0x4] sm:$0xf]
  %v2036 = vld [vmem:[%s15 + $0x8] sm:$0xf]
  %v2037 = vld [vmem:[%s15 + $0xc] sm:$0xf]
  %v2038 = vld [vmem:[%s16] sm:$0x1]
  %v2040 = vperm.slane %v2038, 0
  %v2046 = vunpack.c.l.b16 %v2034
  %v2047 = vunpack.c.l.b16 %v2035
  %v2048 = vunpack.c.l.b16 %v2036
  %v2049 = vunpack.c.l.b16 %v2037
  %v2050 = vpack.c.b16 %v2047, %v2046
  %v2051 = vpack.c.b16 %v2049, %v2048
  %v2055 = vsel %vm240, %v2033, 0
  %2057 = vmatpush.bf16.msra.mxu0 0
  %2058 = vmatpush.bf16.msra.mxu0 0
  %2059 = vmatpush.bf16.msra.mxu0 0
  %2060 = vmatpush.bf16.msra.mxu0 0
  %2061 = vmatpush.bf16.msra.mxu0 0
  %2062 = vmatpush.bf16.msra.mxu0 0
  %2063 = vmatpush.bf16.msra.mxu0 %v2051
  %2064 = vmatpush.bf16.msra.mxu0 %v2050
  %2065 = vmatmul.bf16.gmra.mxu0 %v2055
  %v2066 = vpop.f32.mrf.mxu0
  %v2067 = vadd.f32 %v2040, %v2066
  %v2068 = vpop.f32.mrf.mxu0
  %v2069 = vadd.f32 %v2040, %v2068
  %2070 = vdwg.mxu0
  %vm2071 = vcmask 64512
  %2072 = vst.msk [vmem:[%s17] sm:$0xff] %vm2071, %v2067
  %2073 = vst.msk [vmem:[%s17 + $0x8] sm:$0xff] %vm2071, %v2069
  // Predicated region
  $region70: #{text_encoder_forward.1} parent=0 // pred_check
    _
  $region71: #{text_encoder_forward.1} parent=0 // pred_check_branch
    %2075 = sbr.rel (0) target = $region73
  $region72: #{text_encoder_forward.1} parent=0 // pred_region
    _
  $region73: #{text_encoder_forward.1} parent=0 // pred_fallthru
    _
  // Predicated region
  $region74: #{text_encoder_forward.1} parent=0 // pred_check
    _
  $region75: #{text_encoder_forward.1} parent=0 // pred_check_branch
    %2077 = sbr.rel (0) target = $region77
  $region76: #{text_encoder_forward.1} parent=0 // pred_region
    _
  $region77: #{text_encoder_forward.1} parent=0 // pred_fallthru
    _

</llo_original>
